<compile_context>
chip_gen: v7x
topology: tpu7x:2x2x1
jax: 0.10.0
libtpu: 0.0.40
codegen_flags: <defaults>
</compile_context>

<pallas_src>
import functools

import jax
import jax.numpy as jnp
from jax import lax
from jax.experimental import pallas as pl
from jax.experimental.pallas import tpu as pltpu

FP = 128             # all feature dims zero-padded to 128 (lane-dense, MXU aligned)
NEG_MASK = -1e30     # additive mask for non-edges
M_INIT = -1e20       # finite running-max init: exp(NEG_MASK - M_INIT) underflows to 0
VMEM_LIMIT = 48 * 1024 * 1024   # leave headroom on v7x (64 MiB physical VMEM)

# tile targets (actual tiles are clamped so they divide N and keep the
# parallel grid axis >= 2 blocks where it matters for megacore sharding)
PROJ_TILE_TARGET = 512
ATT_TM_TARGET = 512      # dst rows per attention step
ATT_TK_TARGET = 256      # src cols per attention step (fills 256-wide MXU)
DEC_TI_TARGET = 256      # decoder dst rows
DEC_TJ_TARGET = 256      # decoder src cols (MXU N dim)
FIN_TILE_TARGET = 512


def _cparams(sem):
    return pltpu.CompilerParams(dimension_semantics=sem,
                                vmem_limit_bytes=VMEM_LIMIT)


def _pick_tile(n, target):
    """Largest multiple of 128 that divides n and is <= target."""
    t = min(target, n)
    t = max((t // 128) * 128, 128)
    while n % t:
        t -= 128
    return t


def _pick_parallel_tile(n, target):
    """Like _pick_tile but keeps the grid axis >= 2 blocks when possible."""
    t = _pick_tile(n, target)
    if n // t < 2 and n >= 256:
        t = _pick_tile(n, n // 2)
    return t


# --------------------------------------------------------------------------- #
# Kernel 1: projection + per-node attention scores (hoisted out of attn loop)
# --------------------------------------------------------------------------- #
def _project_kernel(h_ref, w_ref, asrc_ref, adst_ref, wh_ref, esrc_ref, edst_ref):
    # h is already bf16; MXU matmul with f32 accumulation.
    wh = jnp.dot(h_ref[...], w_ref[...], preferred_element_type=jnp.float32)
    wh_ref[...] = wh.astype(jnp.bfloat16)
    # e_src[j] = <wh[j], a_src>   -> lane-dense row vector (1, T)
    esrc_ref[...] = lax.dot_general(asrc_ref[...], wh,
                                    (((1,), (1,)), ((), ())),
                                    preferred_element_type=jnp.float32)
    # e_dst[i] = <wh[i], a_dst>   -> column (T, 1) for broadcast over src
    edst_ref[...] = jnp.sum(wh * adst_ref[...], axis=-1, keepdims=True)


def _project(h_bf16, w_bf16, a_src, a_dst, *, tile):
    n = h_bf16.shape[0]
    g = n // tile
    return pl.pallas_call(
        _project_kernel,
        grid=(g,),
        in_specs=[
            pl.BlockSpec((tile, FP), lambda i: (i, 0)),   # h rows (bf16)
            pl.BlockSpec((FP, FP), lambda i: (0, 0)),     # W (stays resident)
            pl.BlockSpec((1, FP), lambda i: (0, 0)),      # a_src
            pl.BlockSpec((1, FP), lambda i: (0, 0)),      # a_dst
        ],
        out_specs=(
            pl.BlockSpec((tile, FP), lambda i: (i, 0)),   # wh (bf16)
            pl.BlockSpec((1, tile), lambda i: (0, i)),    # e_src row
            pl.BlockSpec((tile, 1), lambda i: (i, 0)),    # e_dst col
        ),
        out_shape=(
            jax.ShapeDtypeStruct((n, FP), jnp.bfloat16),
            jax.ShapeDtypeStruct((1, n), jnp.float32),
            jax.ShapeDtypeStruct((n, 1), jnp.float32),
        ),
        compiler_params=_cparams(("parallel",)),
    )(h_bf16, w_bf16, a_src, a_dst)


# --------------------------------------------------------------------------- #
# Kernel 2: GAT attention + aggregation with online softmax over src blocks,
#           block-sparse skipping of all-zero adjacency tiles.
# --------------------------------------------------------------------------- #
def _gat_attention_kernel(nnz_ref, adj_ref, edst_ref, esrc_ref, whs_ref, b_ref,
                          out_ref, m_sc, l_sc, acc_sc):
    i = pl.program_id(0)
    k = pl.program_id(1)
    nk = pl.num_programs(1)

    @pl.when(k == 0)
    def _():
        m_sc[...] = jnp.full_like(m_sc, M_INIT)
        l_sc[...] = jnp.zeros_like(l_sc)
        acc_sc[...] = jnp.zeros_like(acc_sc)

    # Skip all-zero adjacency tiles entirely (block-sparse fast path).
    @pl.when(nnz_ref[i * nk + k] > 0)
    def _():
        # fused LeakyReLU(0.2) + additive mask (single pass; no *adj multiply)
        logits = edst_ref[...] + esrc_ref[...]                     # (TM, TK)
        leaky = jnp.where(logits > 0, logits, 0.2 * logits)
        masked = jnp.where(adj_ref[...] != 0, leaky, NEG_MASK)

        # online (flash-style) softmax over the source axis
        m_prev = m_sc[...]
        m_new = jnp.maximum(m_prev, jnp.max(masked, axis=-1, keepdims=True))
        corr = jnp.exp(m_prev - m_new)
        p = jnp.exp(masked - m_new)        # non-edges underflow to exactly 0
        l_sc[...] = corr * l_sc[...] + jnp.sum(p, axis=-1, keepdims=True)
        acc_sc[...] = corr * acc_sc[...] + jnp.dot(
            p.astype(jnp.bfloat16), whs_ref[...],
            preferred_element_type=jnp.float32)
        m_sc[...] = m_new

    @pl.when(k == nk - 1)
    def _():
        # max() guard keeps isolated rows (no edges at all) finite: out = bias.
        inv_l = pl.reciprocal(jnp.maximum(l_sc[...], 1e-30), approx=True)
        out_ref[...] = (acc_sc[...] * inv_l + b_ref[...]).astype(out_ref.dtype)


def _gat_aggregate(blk_nnz, adj, e_dst, e_src, wh, b, *, tm, tk):
    n = adj.shape[0]
    gi, gk = n // tm, n // tk
    return pl.pallas_call(
        _gat_attention_kernel,
        grid_spec=pltpu.PrefetchScalarGridSpec(
            num_scalar_prefetch=1,
            grid=(gi, gk),
            in_specs=[
                pl.BlockSpec((tm, tk), lambda i, k, nnz: (i, k)),  # adjacency (int8)
                pl.BlockSpec((tm, 1), lambda i, k, nnz: (i, 0)),   # e_dst column
                pl.BlockSpec((1, tk), lambda i, k, nnz: (0, k)),   # e_src row
                pl.BlockSpec((tk, FP), lambda i, k, nnz: (k, 0)),  # wh src rows (bf16)
                pl.BlockSpec((1, FP), lambda i, k, nnz: (0, 0)),   # bias
            ],
            out_specs=pl.BlockSpec((tm, FP), lambda i, k, nnz: (i, 0)),
            scratch_shapes=[
                pltpu.VMEM((tm, 1), jnp.float32),    # running max
                pltpu.VMEM((tm, 1), jnp.float32),    # running denominator
                pltpu.VMEM((tm, FP), jnp.float32),   # output accumulator
            ],
        ),
        out_shape=jax.ShapeDtypeStruct((n, FP), jnp.bfloat16),
        compiler_params=_cparams(("parallel", "arbitrary")),
    )(blk_nnz, adj, e_dst, e_src, wh, b)


# --------------------------------------------------------------------------- #
# Kernel 3: finalize (L2-normalize + Linear/ELU head), single 1-D pass
# --------------------------------------------------------------------------- #
def _finalize_kernel(h2_ref, wl_ref, bl_ref, zf_ref, zb_ref, xr_ref):
    h = h2_ref[...].astype(jnp.float32)
    ss = jnp.sum(h * h, axis=-1, keepdims=True)
    z = h * lax.rsqrt(jnp.maximum(ss, 1e-24))
    zf_ref[...] = z                                   # f32 output
    zb = z.astype(jnp.bfloat16)
    zb_ref[...] = zb                                  # bf16 copy for the decoder
    xl = jnp.dot(zb, wl_ref[...], preferred_element_type=jnp.float32) + bl_ref[...]
    xr_ref[...] = jnp.where(xl > 0, xl, jnp.exp(xl) - 1.0)   # ELU


def _finalize(h2_bf16, wl_bf16, bl, *, tile):
    n = h2_bf16.shape[0]
    g = n // tile
    return pl.pallas_call(
        _finalize_kernel,
        grid=(g,),
        in_specs=[
            pl.BlockSpec((tile, FP), lambda i: (i, 0)),   # h2 rows (bf16)
            pl.BlockSpec((FP, FP), lambda i: (0, 0)),     # linear weight (bf16)
            pl.BlockSpec((1, FP), lambda i: (0, 0)),      # linear bias
        ],
        out_specs=(
            pl.BlockSpec((tile, FP), lambda i: (i, 0)),   # z  (f32, padded)
            pl.BlockSpec((tile, FP), lambda i: (i, 0)),   # z  (bf16, for decoder)
            pl.BlockSpec((tile, FP), lambda i: (i, 0)),   # x_ (f32, padded)
        ),
        out_shape=(
            jax.ShapeDtypeStruct((n, FP), jnp.float32),
            jax.ShapeDtypeStruct((n, FP), jnp.bfloat16),
            jax.ShapeDtypeStruct((n, FP), jnp.float32),
        ),
        compiler_params=_cparams(("parallel",)),
    )(h2_bf16, wl_bf16, bl)


# --------------------------------------------------------------------------- #
# Kernel 4: dot-product decoder  A_pred = sigmoid(z z^T)
# --------------------------------------------------------------------------- #
def _decoder_kernel(zi_ref, zj_ref, apred_ref):
    zz = lax.dot_general(zi_ref[...], zj_ref[...],
                         (((1,), (1,)), ((), ())),
                         preferred_element_type=jnp.float32)
    # sigmoid via tanh: one EUP op per element, no approx-reciprocal error.
    apred_ref[...] = 0.5 * jnp.tanh(0.5 * zz) + 0.5


def _decode(z_bf16, *, ti, tj):
    n = z_bf16.shape[0]
    gi, gj = n // ti, n // tj
    return pl.pallas_call(
        _decoder_kernel,
        grid=(gi, gj),
        in_specs=[
            pl.BlockSpec((ti, FP), lambda i, j: (i, 0)),   # z rows (i block, bf16)
            pl.BlockSpec((tj, FP), lambda i, j: (j, 0)),   # z rows (j block, bf16)
        ],
        out_specs=pl.BlockSpec((ti, tj), lambda i, j: (i, j)),
        # A_pred kept f32 to preserve module semantics (bf16 would halve the
        # only N^2 writeback if downstream accepts it).
        out_shape=jax.ShapeDtypeStruct((n, n), jnp.float32),
        compiler_params=_cparams(("parallel", "parallel")),
    )(z_bf16, z_bf16)


# --------------------------------------------------------------------------- #
# Wrapper
# --------------------------------------------------------------------------- #
def _pad2(a, rows, cols, dtype=None):
    dt = a.dtype if dtype is None else dtype
    out = jnp.zeros((rows, cols), dt)
    return out.at[: a.shape[0], : a.shape[1]].set(a.astype(dt))


@functools.partial(jax.jit, static_argnames=("out_channels", "lin_channels"))
def gatae_forward(x, adj_i8, params, *, out_channels, lin_channels):
    n, fin = x.shape
    hid = params["w1"].shape[1]
    assert n % 128 == 0, "this wrapper assumes N is a multiple of 128"
    assert max(fin, hid, out_channels, lin_channels) <= FP

    # Zero-pad every feature dim to FP=128: lane-dense, MXU-aligned; padded
    # columns stay exactly zero through all layers so results are unchanged.
    x_p = _pad2(x, n, FP, jnp.bfloat16)
    w1 = _pad2(params["w1"], FP, FP, jnp.bfloat16)
    as1 = _pad2(params["as1"], 1, FP)
    ad1 = _pad2(params["ad1"], 1, FP)
    b1 = _pad2(params["b1"], 1, FP)
    w2 = _pad2(params["w2"], FP, FP, jnp.bfloat16)
    as2 = _pad2(params["as2"], 1, FP)
    ad2 = _pad2(params["ad2"], 1, FP)
    b2 = _pad2(params["b2"], 1, FP)
    wl = _pad2(params["wl"], FP, FP, jnp.bfloat16)
    bl = _pad2(params["bl"], 1, FP)

    # Tile selection (static; n is a trace-time constant).
    proj_t = _pick_parallel_tile(n, PROJ_TILE_TARGET)
    tm = _pick_parallel_tile(n, ATT_TM_TARGET)
    tk = _pick_tile(n, ATT_TK_TARGET)
    fin_t = _pick_parallel_tile(n, FIN_TILE_TARGET)
    ti = _pick_parallel_tile(n, DEC_TI_TARGET)
    tj = _pick_tile(n, DEC_TJ_TARGET)

    # Per-(dst-block, src-block) nonzero counts for block-sparse skipping
    # (flattened 1-D so the SMEM footprint stays tiny).
    gi, gk = n // tm, n // tk
    blk_nnz = (adj_i8.astype(jnp.int32)
               .reshape(gi, tm, gk, tk).sum(axis=(1, 3)).reshape(-1))

    # conv1 (heads=1, concat=True)
    wh1, es1, ed1 = _project(x_p, w1, as1, ad1, tile=proj_t)
    h1 = _gat_aggregate(blk_nnz, adj_i8, ed1, es1, wh1, b1, tm=tm, tk=tk)
    # conv2 (heads=1, concat=False)
    wh2, es2, ed2 = _project(h1, w2, as2, ad2, tile=proj_t)
    h2 = _gat_aggregate(blk_nnz, adj_i8, ed2, es2, wh2, b2, tm=tm, tk=tk)
    # z = normalize(h2) ; x_ = ELU(Linear(z))   (single 1-D pass)
    z_f32, z_bf16, xr_p = _finalize(h2, wl, bl, tile=fin_t)
    # A_pred = sigmoid(z z^T)
    a_pred = _decode(z_bf16, ti=ti, tj=tj)
    return a_pred, z_f32[:, :out_channels], xr_p[:, :lin_channels]


# --------------------------------------------------------------------------- #
# Pure-JAX f32 reference (PyTorch-equivalent math) for the correctness check
# --------------------------------------------------------------------------- #
def gatae_reference(x, adj, params):
    mask = adj != 0

    def layer(h, w, a_src, a_dst, b):
        wh = h @ w
        e_dst = jnp.sum(wh * a_dst, axis=-1, keepdims=True)
        e_src = jnp.sum(wh * a_src, axis=-1, keepdims=True).T
        logits = e_dst + e_src
        logits = jnp.where(logits > 0, logits, 0.2 * logits)
        masked = jnp.where(mask, logits, -1e30)
        p = jnp.exp(masked - jnp.max(masked, axis=-1, keepdims=True))
        p = jnp.where(mask, p, 0.0)
        alpha = p / jnp.sum(p, axis=-1, keepdims=True)
        return alpha @ wh + b

    h1 = layer(x, params["w1"], params["as1"], params["ad1"], params["b1"])
    h2 = layer(h1, params["w2"], params["as2"], params["ad2"], params["b2"])
    z = h2 / jnp.maximum(jnp.sqrt(jnp.sum(h2 * h2, axis=-1, keepdims=True)), 1e-12)
    xl = z @ params["wl"] + params["bl"]
    xr = jnp.where(xl > 0, xl, jnp.exp(xl) - 1.0)
    apred = jax.nn.sigmoid(z @ z.T)
    return apred, z, xr


if __name__ == "__main__":
    # N=256 nodes (exercises the tiled/online-softmax + block-skip path),
    # in=16, hidden=32, out=16, heads=1, stack=1.
    N, in_ch, hid_ch, out_ch, stack = 256, 16, 32, 16, 1
    lin_ch = in_ch * stack

    key = jax.random.PRNGKey(0)
    ks = jax.random.split(key, 12)

    x = jax.random.normal(ks[0], (N, in_ch), jnp.float32)

    # Deterministic edge_index (src -> dst): node i sends to i+1, i+5, i+11 (mod N).
    idx = jnp.arange(N)
    src = jnp.concatenate([idx, idx, idx])
    dst = jnp.concatenate([(idx + 1) % N, (idx + 5) % N, (idx + 11) % N])
    adj = jnp.zeros((N, N), jnp.int8).at[dst, src].set(1)   # adj[target, source]
    adj = adj.at[idx, idx].set(1)                           # add_self_loops=True

    params = {
        # conv1: GATConv(in_ch, hid_ch, heads=1, concat=True)
        "w1":  0.2 * jax.random.normal(ks[1], (in_ch, hid_ch), jnp.float32),
        "as1": 0.1 * jax.random.normal(ks[2], (1, hid_ch), jnp.float32),
        "ad1": 0.1 * jax.random.normal(ks[3], (1, hid_ch), jnp.float32),
        "b1":  0.05 * jax.random.normal(ks[4], (1, hid_ch), jnp.float32),
        # conv2: GATConv(hid_ch, out_ch, heads=1, concat=False)
        "w2":  0.2 * jax.random.normal(ks[5], (hid_ch, out_ch), jnp.float32),
        "as2": 0.1 * jax.random.normal(ks[6], (1, out_ch), jnp.float32),
        "ad2": 0.1 * jax.random.normal(ks[7], (1, out_ch), jnp.float32),
        "b2":  0.05 * jax.random.normal(ks[8], (1, out_ch), jnp.float32),
        # Linear(out_ch, in_ch * stack)
        "wl":  0.2 * jax.random.normal(ks[9], (out_ch, lin_ch), jnp.float32),
        "bl":  0.05 * jax.random.normal(ks[10], (1, lin_ch), jnp.float32),
    }

    A_pred, z, x_ = jax.block_until_ready(
        gatae_forward(x, adj, params, out_channels=out_ch, lin_channels=lin_ch))

    A_ref, z_ref_, x_ref_ = gatae_reference(x, adj, params)
    # Tolerance accounts for bf16 MXU operands / bf16 layer outputs (f32 accum)
    # vs. the f32 reference.
    assert jnp.allclose(A_pred, A_ref, atol=5e-2, rtol=5e-2), "A_pred mismatch"
    assert jnp.allclose(z, z_ref_, atol=5e-2, rtol=5e-2), "z mismatch"
    assert jnp.allclose(x_, x_ref_, atol=5e-2, rtol=5e-2), "x_ mismatch"

    print("KERNEL_OK")
</pallas_src>

<mosaic_0001>
module attributes {stable_mosaic.version = 11 : i64} {
  func.func @_project_kernel(%arg0: i32, %arg1: memref<128x128xbf16, #tpu.memory_space<vmem>>, %arg2: memref<128x128xbf16, #tpu.memory_space<vmem>>, %arg3: memref<1x128xf32, #tpu.memory_space<vmem>>, %arg4: memref<1x128xf32, #tpu.memory_space<vmem>>, %arg5: memref<128x128xbf16, #tpu.memory_space<vmem>>, %arg6: memref<1x128xf32, #tpu.memory_space<vmem>>, %arg7: memref<128x1xf32, #tpu.memory_space<vmem>>) attributes {dimension_semantics = [#tpu.dimension_semantics<parallel>], iteration_bounds = array<i64: 2>, scalar_prefetch = 0 : i64, scratch_operands = 0 : i64, tpu.core_type = #tpu.core_type<tc>, window_params = [{transform_indices = @transform_0, window_bounds = array<i64: 128, 128>}, {pipeline_mode = #tpu.pipeline_mode<synchronous>, transform_indices = @transform_1, window_bounds = array<i64: 128, 128>}, {pipeline_mode = #tpu.pipeline_mode<synchronous>, transform_indices = @transform_2, window_bounds = array<i64: 1, 128>}, {pipeline_mode = #tpu.pipeline_mode<synchronous>, transform_indices = @transform_3, window_bounds = array<i64: 1, 128>}, {transform_indices = @transform_4, window_bounds = array<i64: 128, 128>}, {transform_indices = @transform_5, window_bounds = array<i64: 1, 128>}, {transform_indices = @transform_6, window_bounds = array<i64: 128, 1>}]} {
    %c0 = arith.constant 0 : index
    %c0_0 = arith.constant 0 : index
    %0 = vector.load %arg1[%c0, %c0_0] : memref<128x128xbf16, #tpu.memory_space<vmem>>, vector<128x128xbf16>
    %c0_1 = arith.constant 0 : index
    %c0_2 = arith.constant 0 : index
    %1 = vector.load %arg2[%c0_1, %c0_2] : memref<128x128xbf16, #tpu.memory_space<vmem>>, vector<128x128xbf16>
    %cst = arith.constant dense<0.000000e+00> : vector<128x128xf32>
    %2 = tpu.matmul %0, %1, %cst {dimension_numbers = #tpu.dot_dimension_numbers<[1], [0], [0], [1], [0, 0, 1, 1], [], []>} : vector<128x128xbf16>, vector<128x128xbf16>, vector<128x128xf32> -> vector<128x128xf32>
    %3 = arith.truncf %2 : vector<128x128xf32> to vector<128x128xbf16>
    %c0_3 = arith.constant 0 : index
    %c0_4 = arith.constant 0 : index
    %4 = vector.load %arg5[%c0_3, %c0_4] : memref<128x128xbf16, #tpu.memory_space<vmem>>, vector<128x128xbf16>
    tpu.vector_store %arg5[%c0_3, %c0_4], %3 {strides = array<i32>} : memref<128x128xbf16, #tpu.memory_space<vmem>>, vector<128x128xbf16>,
    %c0_5 = arith.constant 0 : index
    %c0_6 = arith.constant 0 : index
    %5 = vector.load %arg3[%c0_5, %c0_6] : memref<1x128xf32, #tpu.memory_space<vmem>>, vector<1x128xf32>
    %cst_7 = arith.constant dense<0.000000e+00> : vector<1x128xf32>
    %6 = tpu.matmul %5, %2, %cst_7 {dimension_numbers = #tpu.dot_dimension_numbers<[1], [1], [0], [0], [0, 0, 1, 0], [], []>} : vector<1x128xf32>, vector<128x128xf32>, vector<1x128xf32> -> vector<1x128xf32>
    %c0_8 = arith.constant 0 : index
    %c0_9 = arith.constant 0 : index
    %7 = vector.load %arg6[%c0_8, %c0_9] : memref<1x128xf32, #tpu.memory_space<vmem>>, vector<1x128xf32>
    tpu.vector_store %arg6[%c0_8, %c0_9], %6 {strides = array<i32>} : memref<1x128xf32, #tpu.memory_space<vmem>>, vector<1x128xf32>,
    %c0_10 = arith.constant 0 : index
    %c0_11 = arith.constant 0 : index
    %8 = vector.load %arg4[%c0_10, %c0_11] : memref<1x128xf32, #tpu.memory_space<vmem>>, vector<1x128xf32>
    %9 = vector.broadcast %8 : vector<1x128xf32> to vector<128x128xf32>
    %10 = arith.mulf %2, %9 : vector<128x128xf32>
    %cst_12 = arith.constant dense<0.000000e+00> : vector<128xf32>
    %11 = vector.multi_reduction <add>, %10, %cst_12 [1] : vector<128x128xf32> to vector<128xf32>
    %12 = vector.shape_cast %11 : vector<128xf32> to vector<128x1xf32>
    %c0_13 = arith.constant 0 : index
    %c0_14 = arith.constant 0 : index
    %13 = vector.load %arg7[%c0_13, %c0_14] : memref<128x1xf32, #tpu.memory_space<vmem>>, vector<128x1xf32>
    tpu.vector_store %arg7[%c0_13, %c0_14], %12 {strides = array<i32>} : memref<128x1xf32, #tpu.memory_space<vmem>>, vector<128x1xf32>,
    return
  }
  func.func @transform_0(%arg0: i32) -> (i32, i32) {
    %c0_i32 = arith.constant 0 : i32
    %c0_i32_0 = arith.constant 0 : i32
    return %arg0, %c0_i32 : i32, i32
  }
  func.func @transform_1(%arg0: i32) -> (i32, i32) {
    %c0_i32 = arith.constant 0 : i32
    %c0_i32_0 = arith.constant 0 : i32
    %c0_i32_1 = arith.constant 0 : i32
    return %c0_i32, %c0_i32_0 : i32, i32
  }
  func.func @transform_2(%arg0: i32) -> (i32, i32) {
    %c0_i32 = arith.constant 0 : i32
    %c0_i32_0 = arith.constant 0 : i32
    %c0_i32_1 = arith.constant 0 : i32
    return %c0_i32, %c0_i32_0 : i32, i32
  }
  func.func @transform_3(%arg0: i32) -> (i32, i32) {
    %c0_i32 = arith.constant 0 : i32
    %c0_i32_0 = arith.constant 0 : i32
    %c0_i32_1 = arith.constant 0 : i32
    return %c0_i32, %c0_i32_0 : i32, i32
  }
  func.func @transform_4(%arg0: i32) -> (i32, i32) {
    %c0_i32 = arith.constant 0 : i32
    %c0_i32_0 = arith.constant 0 : i32
    return %arg0, %c0_i32 : i32, i32
  }
  func.func @transform_5(%arg0: i32) -> (i32, i32) {
    %c0_i32 = arith.constant 0 : i32
    %c0_i32_0 = arith.constant 0 : i32
    return %c0_i32, %arg0 : i32, i32
  }
  func.func @transform_6(%arg0: i32) -> (i32, i32) {
    %c0_i32 = arith.constant 0 : i32
    %c0_i32_0 = arith.constant 0 : i32
    return %arg0, %c0_i32 : i32, i32
  }
}

module attributes {stable_mosaic.version = 11 : i64} {
  func.func @_finalize_kernel(%arg0: i32, %arg1: memref<128x128xbf16, #tpu.memory_space<vmem>>, %arg2: memref<128x128xbf16, #tpu.memory_space<vmem>>, %arg3: memref<1x128xf32, #tpu.memory_space<vmem>>, %arg4: memref<128x128xf32, #tpu.memory_space<vmem>>, %arg5: memref<128x128xbf16, #tpu.memory_space<vmem>>, %arg6: memref<128x128xf32, #tpu.memory_space<vmem>>) attributes {dimension_semantics = [#tpu.dimension_semantics<parallel>], iteration_bounds = array<i64: 2>, scalar_prefetch = 0 : i64, scratch_operands = 0 : i64, tpu.core_type = #tpu.core_type<tc>, window_params = [{transform_indices = @transform_0, window_bounds = array<i64: 128, 128>}, {pipeline_mode = #tpu.pipeline_mode<synchronous>, transform_indices = @transform_1, window_bounds = array<i64: 128, 128>}, {pipeline_mode = #tpu.pipeline_mode<synchronous>, transform_indices = @transform_2, window_bounds = array<i64: 1, 128>}, {transform_indices = @transform_3, window_bounds = array<i64: 128, 128>}, {transform_indices = @transform_4, window_bounds = array<i64: 128, 128>}, {transform_indices = @transform_5, window_bounds = array<i64: 128, 128>}]} {
    %c0 = arith.constant 0 : index
    %c0_0 = arith.constant 0 : index
    %0 = vector.load %arg1[%c0, %c0_0] : memref<128x128xbf16, #tpu.memory_space<vmem>>, vector<128x128xbf16>
    %1 = arith.extf %0 : vector<128x128xbf16> to vector<128x128xf32>
    %2 = arith.mulf %1, %1 : vector<128x128xf32>
    %cst = arith.constant dense<0.000000e+00> : vector<128xf32>
    %3 = vector.multi_reduction <add>, %2, %cst [1] : vector<128x128xf32> to vector<128xf32>
    %4 = vector.shape_cast %3 : vector<128xf32> to vector<128x1xf32>
    %cst_1 = arith.constant 1.000000e-24 : f32
    %5 = vector.broadcast %cst_1 : f32 to vector<128x1xf32>
    %6 = arith.maximumf %4, %5 : vector<128x1xf32>
    %7 = math.rsqrt %6 : vector<128x1xf32>
    %8 = vector.broadcast %7 : vector<128x1xf32> to vector<128x128xf32>
    %9 = arith.mulf %1, %8 : vector<128x128xf32>
    %c0_2 = arith.constant 0 : index
    %c0_3 = arith.constant 0 : index
    %10 = vector.load %arg4[%c0_2, %c0_3] : memref<128x128xf32, #tpu.memory_space<vmem>>, vector<128x128xf32>
    tpu.vector_store %arg4[%c0_2, %c0_3], %9 {strides = array<i32>} : memref<128x128xf32, #tpu.memory_space<vmem>>, vector<128x128xf32>,
    %11 = arith.truncf %9 : vector<128x128xf32> to vector<128x128xbf16>
    %c0_4 = arith.constant 0 : index
    %c0_5 = arith.constant 0 : index
    %12 = vector.load %arg5[%c0_4, %c0_5] : memref<128x128xbf16, #tpu.memory_space<vmem>>, vector<128x128xbf16>
    tpu.vector_store %arg5[%c0_4, %c0_5], %11 {strides = array<i32>} : memref<128x128xbf16, #tpu.memory_space<vmem>>, vector<128x128xbf16>,
    %c0_6 = arith.constant 0 : index
    %c0_7 = arith.constant 0 : index
    %13 = vector.load %arg2[%c0_6, %c0_7] : memref<128x128xbf16, #tpu.memory_space<vmem>>, vector<128x128xbf16>
    %cst_8 = arith.constant dense<0.000000e+00> : vector<128x128xf32>
    %14 = tpu.matmul %11, %13, %cst_8 {dimension_numbers = #tpu.dot_dimension_numbers<[1], [0], [0], [1], [0, 0, 1, 1], [], []>} : vector<128x128xbf16>, vector<128x128xbf16>, vector<128x128xf32> -> vector<128x128xf32>
    %c0_9 = arith.constant 0 : index
    %c0_10 = arith.constant 0 : index
    %15 = vector.load %arg3[%c0_9, %c0_10] : memref<1x128xf32, #tpu.memory_space<vmem>>, vector<1x128xf32>
    %16 = vector.broadcast %15 : vector<1x128xf32> to vector<128x128xf32>
    %17 = arith.addf %14, %16 : vector<128x128xf32>
    %cst_11 = arith.constant 0.000000e+00 : f32
    %18 = vector.broadcast %cst_11 : f32 to vector<128x128xf32>
    %19 = arith.cmpf ogt, %17, %18 : vector<128x128xf32>
    %20 = math.exp %17 : vector<128x128xf32>
    %cst_12 = arith.constant 1.000000e+00 : f32
    %21 = vector.broadcast %cst_12 : f32 to vector<128x128xf32>
    %22 = arith.subf %20, %21 : vector<128x128xf32>
    %23 = arith.select %19, %17, %22 : vector<128x128xi1>, vector<128x128xf32>
    %c0_13 = arith.constant 0 : index
    %c0_14 = arith.constant 0 : index
    %24 = vector.load %arg6[%c0_13, %c0_14] : memref<128x128xf32, #tpu.memory_space<vmem>>, vector<128x128xf32>
    tpu.vector_store %arg6[%c0_13, %c0_14], %23 {strides = array<i32>} : memref<128x128xf32, #tpu.memory_space<vmem>>, vector<128x128xf32>,
    return
  }
  func.func @transform_0(%arg0: i32) -> (i32, i32) {
    %c0_i32 = arith.constant 0 : i32
    %c0_i32_0 = arith.constant 0 : i32
    return %arg0, %c0_i32 : i32, i32
  }
  func.func @transform_1(%arg0: i32) -> (i32, i32) {
    %c0_i32 = arith.constant 0 : i32
    %c0_i32_0 = arith.constant 0 : i32
    %c0_i32_1 = arith.constant 0 : i32
    return %c0_i32, %c0_i32_0 : i32, i32
  }
  func.func @transform_2(%arg0: i32) -> (i32, i32) {
    %c0_i32 = arith.constant 0 : i32
    %c0_i32_0 = arith.constant 0 : i32
    %c0_i32_1 = arith.constant 0 : i32
    return %c0_i32, %c0_i32_0 : i32, i32
  }
  func.func @transform_3(%arg0: i32) -> (i32, i32) {
    %c0_i32 = arith.constant 0 : i32
    %c0_i32_0 = arith.constant 0 : i32
    return %arg0, %c0_i32 : i32, i32
  }
  func.func @transform_4(%arg0: i32) -> (i32, i32) {
    %c0_i32 = arith.constant 0 : i32
    %c0_i32_0 = arith.constant 0 : i32
    return %arg0, %c0_i32 : i32, i32
  }
  func.func @transform_5(%arg0: i32) -> (i32, i32) {
    %c0_i32 = arith.constant 0 : i32
    %c0_i32_0 = arith.constant 0 : i32
    return %arg0, %c0_i32 : i32, i32
  }
}

module attributes {stable_mosaic.version = 11 : i64} {
  func.func @_gat_attention_kernel(%arg0: i32, %arg1: i32, %arg2: memref<2xi32, #tpu.memory_space<smem>>, %arg3: memref<128x256xi8, #tpu.memory_space<vmem>>, %arg4: memref<128x1xf32, #tpu.memory_space<vmem>>, %arg5: memref<1x256xf32, #tpu.memory_space<vmem>>, %arg6: memref<256x128xbf16, #tpu.memory_space<vmem>>, %arg7: memref<1x128xf32, #tpu.memory_space<vmem>>, %arg8: memref<128x128xbf16, #tpu.memory_space<vmem>>, %arg9: memref<128x1xf32, #tpu.memory_space<vmem>>, %arg10: memref<128x1xf32, #tpu.memory_space<vmem>>, %arg11: memref<128x128xf32, #tpu.memory_space<vmem>>) attributes {dimension_semantics = [#tpu.dimension_semantics<parallel>, #tpu.dimension_semantics<arbitrary>], iteration_bounds = array<i64: 2, 1>, scalar_prefetch = 1 : i64, scratch_operands = 3 : i64, tpu.core_type = #tpu.core_type<tc>, window_params = [{transform_indices = @transform_0, window_bounds = array<i64: 128, 256>}, {transform_indices = @transform_1, window_bounds = array<i64: 128, 1>}, {transform_indices = @transform_2, window_bounds = array<i64: 1, 256>}, {transform_indices = @transform_3, window_bounds = array<i64: 256, 128>}, {pipeline_mode = #tpu.pipeline_mode<synchronous>, transform_indices = @transform_4, window_bounds = array<i64: 1, 128>}, {transform_indices = @transform_5, window_bounds = array<i64: 128, 128>}]} {
    %c0_i32 = arith.constant 0 : i32
    %0 = arith.cmpi eq, %arg1, %c0_i32 : i32
    %1 = arith.extui %0 : i1 to i32
    %c0_i32_0 = arith.constant 0 : i32
    %2 = arith.cmpi ne, %1, %c0_i32_0 : i32
    scf.if %2 {
      %cst = arith.constant -1.000000e+20 : f32
      %13 = vector.broadcast %cst : f32 to vector<128x1xf32>
      %c0 = arith.constant 0 : index
      %c0_5 = arith.constant 0 : index
      %14 = vector.load %arg9[%c0, %c0_5] : memref<128x1xf32, #tpu.memory_space<vmem>>, vector<128x1xf32>
      tpu.vector_store %arg9[%c0, %c0_5], %13 {strides = array<i32>} : memref<128x1xf32, #tpu.memory_space<vmem>>, vector<128x1xf32>,
      %cst_6 = arith.constant 0.000000e+00 : f32
      %15 = vector.broadcast %cst_6 : f32 to vector<128x1xf32>
      %c0_7 = arith.constant 0 : index
      %c0_8 = arith.constant 0 : index
      %16 = vector.load %arg10[%c0_7, %c0_8] : memref<128x1xf32, #tpu.memory_space<vmem>>, vector<128x1xf32>
      tpu.vector_store %arg10[%c0_7, %c0_8], %15 {strides = array<i32>} : memref<128x1xf32, #tpu.memory_space<vmem>>, vector<128x1xf32>,
      %cst_9 = arith.constant 0.000000e+00 : f32
      %17 = vector.broadcast %cst_9 : f32 to vector<128x128xf32>
      %c0_10 = arith.constant 0 : index
      %c0_11 = arith.constant 0 : index
      %18 = vector.load %arg11[%c0_10, %c0_11] : memref<128x128xf32, #tpu.memory_space<vmem>>, vector<128x128xf32>
      tpu.vector_store %arg11[%c0_10, %c0_11], %17 {strides = array<i32>} : memref<128x128xf32, #tpu.memory_space<vmem>>, vector<128x128xf32>,
    } else {
    }
    %c1_i32 = arith.constant 1 : i32
    %3 = arith.muli %arg0, %c1_i32 : i32
    %4 = arith.addi %3, %arg1 : i32
    %5 = arith.index_cast %4 : i32 to index
    %6 = memref.load %arg2[%5] : memref<2xi32, #tpu.memory_space<smem>>
    %c0_i32_1 = arith.constant 0 : i32
    %7 = arith.cmpi sgt, %6, %c0_i32_1 : i32
    %8 = arith.extui %7 : i1 to i32
    %c0_i32_2 = arith.constant 0 : i32
    %9 = arith.cmpi ne, %8, %c0_i32_2 : i32
    scf.if %9 {
      %c0 = arith.constant 0 : index
      %c0_5 = arith.constant 0 : index
      %13 = vector.load %arg4[%c0, %c0_5] : memref<128x1xf32, #tpu.memory_space<vmem>>, vector<128x1xf32>
      %c0_6 = arith.constant 0 : index
      %c0_7 = arith.constant 0 : index
      %14 = vector.load %arg5[%c0_6, %c0_7] : memref<1x256xf32, #tpu.memory_space<vmem>>, vector<1x256xf32>
      %15 = vector.broadcast %13 : vector<128x1xf32> to vector<128x256xf32>
      %16 = vector.broadcast %14 : vector<1x256xf32> to vector<128x256xf32>
      %17 = arith.addf %15, %16 : vector<128x256xf32>
      %cst = arith.constant 0.000000e+00 : f32
      %18 = vector.broadcast %cst : f32 to vector<128x256xf32>
      %19 = arith.cmpf ogt, %17, %18 : vector<128x256xf32>
      %cst_8 = arith.constant 2.000000e-01 : f32
      %20 = vector.broadcast %cst_8 : f32 to vector<128x256xf32>
      %21 = arith.mulf %20, %17 : vector<128x256xf32>
      %22 = arith.select %19, %17, %21 : vector<128x256xi1>, vector<128x256xf32>
      %c0_9 = arith.constant 0 : index
      %c0_10 = arith.constant 0 : index
      %23 = vector.load %arg3[%c0_9, %c0_10] : memref<128x256xi8, #tpu.memory_space<vmem>>, vector<128x256xi8>
      %c0_i8 = arith.constant 0 : i8
      %24 = vector.broadcast %c0_i8 : i8 to vector<128x256xi8>
      %25 = arith.cmpi ne, %23, %24 : vector<128x256xi8>
      %cst_11 = arith.constant -1.000000e+30 : f32
      %26 = vector.broadcast %cst_11 : f32 to vector<128x256xf32>
      %27 = arith.select %25, %22, %26 : vector<128x256xi1>, vector<128x256xf32>
      %c0_12 = arith.constant 0 : index
      %c0_13 = arith.constant 0 : index
      %28 = vector.load %arg9[%c0_12, %c0_13] : memref<128x1xf32, #tpu.memory_space<vmem>>, vector<128x1xf32>
      %cst_14 = arith.constant dense<0xFF800000> : vector<128xf32>
      %29 = vector.multi_reduction <maximumf>, %27, %cst_14 [1] : vector<128x256xf32> to vector<128xf32>
      %30 = vector.shape_cast %29 : vector<128xf32> to vector<128x1xf32>
      %31 = arith.maximumf %28, %30 : vector<128x1xf32>
      %32 = arith.subf %28, %31 : vector<128x1xf32>
      %33 = math.exp %32 : vector<128x1xf32>
      %34 = vector.broadcast %31 : vector<128x1xf32> to vector<128x256xf32>
      %35 = arith.subf %27, %34 : vector<128x256xf32>
      %36 = math.exp %35 : vector<128x256xf32>
      %c0_15 = arith.constant 0 : index
      %c0_16 = arith.constant 0 : index
      %37 = vector.load %arg10[%c0_15, %c0_16] : memref<128x1xf32, #tpu.memory_space<vmem>>, vector<128x1xf32>
      %38 = arith.mulf %33, %37 : vector<128x1xf32>
      %cst_17 = arith.constant dense<0.000000e+00> : vector<128xf32>
      %39 = vector.multi_reduction <add>, %36, %cst_17 [1] : vector<128x256xf32> to vector<128xf32>
      %40 = vector.shape_cast %39 : vector<128xf32> to vector<128x1xf32>
      %41 = arith.addf %38, %40 : vector<128x1xf32>
      %c0_18 = arith.constant 0 : index
      %c0_19 = arith.constant 0 : index
      %42 = vector.load %arg10[%c0_18, %c0_19] : memref<128x1xf32, #tpu.memory_space<vmem>>, vector<128x1xf32>
      tpu.vector_store %arg10[%c0_18, %c0_19], %41 {strides = array<i32>} : memref<128x1xf32, #tpu.memory_space<vmem>>, vector<128x1xf32>,
      %c0_20 = arith.constant 0 : index
      %c0_21 = arith.constant 0 : index
      %43 = vector.load %arg11[%c0_20, %c0_21] : memref<128x128xf32, #tpu.memory_space<vmem>>, vector<128x128xf32>
      %44 = vector.broadcast %33 : vector<128x1xf32> to vector<128x128xf32>
      %45 = arith.mulf %44, %43 : vector<128x128xf32>
      %46 = arith.truncf %36 : vector<128x256xf32> to vector<128x256xbf16>
      %c0_22 = arith.constant 0 : index
      %c0_23 = arith.constant 0 : index
      %47 = vector.load %arg6[%c0_22, %c0_23] : memref<256x128xbf16, #tpu.memory_space<vmem>>, vector<256x128xbf16>
      %cst_24 = arith.constant dense<0.000000e+00> : vector<128x128xf32>
      %48 = tpu.matmul %46, %47, %cst_24 {dimension_numbers = #tpu.dot_dimension_numbers<[1], [0], [0], [1], [0, 0, 1, 1], [], []>} : vector<128x256xbf16>, vector<256x128xbf16>, vector<128x128xf32> -> vector<128x128xf32>
      %49 = arith.addf %45, %48 : vector<128x128xf32>
      %c0_25 = arith.constant 0 : index
      %c0_26 = arith.constant 0 : index
      %50 = vector.load %arg11[%c0_25, %c0_26] : memref<128x128xf32, #tpu.memory_space<vmem>>, vector<128x128xf32>
      tpu.vector_store %arg11[%c0_25, %c0_26], %49 {strides = array<i32>} : memref<128x128xf32, #tpu.memory_space<vmem>>, vector<128x128xf32>,
      %c0_27 = arith.constant 0 : index
      %c0_28 = arith.constant 0 : index
      %51 = vector.load %arg9[%c0_27, %c0_28] : memref<128x1xf32, #tpu.memory_space<vmem>>, vector<128x1xf32>
      tpu.vector_store %arg9[%c0_27, %c0_28], %31 {strides = array<i32>} : memref<128x1xf32, #tpu.memory_space<vmem>>, vector<128x1xf32>,
    } else {
    }
    %c0_i32_3 = arith.constant 0 : i32
    %10 = arith.cmpi eq, %arg1, %c0_i32_3 : i32
    %11 = arith.extui %10 : i1 to i32
    %c0_i32_4 = arith.constant 0 : i32
    %12 = arith.cmpi ne, %11, %c0_i32_4 : i32
    scf.if %12 {
      %c0 = arith.constant 0 : index
      %c0_5 = arith.constant 0 : index
      %13 = vector.load %arg10[%c0, %c0_5] : memref<128x1xf32, #tpu.memory_space<vmem>>, vector<128x1xf32>
      %cst = arith.constant 1.000000e-30 : f32
      %14 = vector.broadcast %cst : f32 to vector<128x1xf32>
      %15 = arith.maximumf %13, %14 : vector<128x1xf32>
      %16 = tpu.reciprocal %15 {approx = true} : vector<128x1xf32> -> vector<128x1xf32>
      %c0_6 = arith.constant 0 : index
      %c0_7 = arith.constant 0 : index
      %17 = vector.load %arg11[%c0_6, %c0_7] : memref<128x128xf32, #tpu.memory_space<vmem>>, vector<128x128xf32>
      %18 = vector.broadcast %16 : vector<128x1xf32> to vector<128x128xf32>
      %19 = arith.mulf %17, %18 : vector<128x128xf32>
      %c0_8 = arith.constant 0 : index
      %c0_9 = arith.constant 0 : index
      %20 = vector.load %arg7[%c0_8, %c0_9] : memref<1x128xf32, #tpu.memory_space<vmem>>, vector<1x128xf32>
      %21 = vector.broadcast %20 : vector<1x128xf32> to vector<128x128xf32>
      %22 = arith.addf %19, %21 : vector<128x128xf32>
      %23 = arith.truncf %22 : vector<128x128xf32> to vector<128x128xbf16>
      %c0_10 = arith.constant 0 : index
      %c0_11 = arith.constant 0 : index
      %24 = vector.load %arg8[%c0_10, %c0_11] : memref<128x128xbf16, #tpu.memory_space<vmem>>, vector<128x128xbf16>
      tpu.vector_store %arg8[%c0_10, %c0_11], %23 {strides = array<i32>} : memref<128x128xbf16, #tpu.memory_space<vmem>>, vector<128x128xbf16>,
    } else {
    }
    return
  }
  func.func @transform_0(%arg0: i32, %arg1: i32, %arg2: memref<2xi32, #tpu.memory_space<smem>>) -> (i32, i32) {
    %c0_i32 = arith.constant 0 : i32
    return %arg0, %arg1 : i32, i32
  }
  func.func @transform_1(%arg0: i32, %arg1: i32, %arg2: memref<2xi32, #tpu.memory_space<smem>>) -> (i32, i32) {
    %c0_i32 = arith.constant 0 : i32
    %c0_i32_0 = arith.constant 0 : i32
    return %arg0, %c0_i32 : i32, i32
  }
  func.func @transform_2(%arg0: i32, %arg1: i32, %arg2: memref<2xi32, #tpu.memory_space<smem>>) -> (i32, i32) {
    %c0_i32 = arith.constant 0 : i32
    %c0_i32_0 = arith.constant 0 : i32
    return %c0_i32, %arg1 : i32, i32
  }
  func.func @transform_3(%arg0: i32, %arg1: i32, %arg2: memref<2xi32, #tpu.memory_space<smem>>) -> (i32, i32) {
    %c0_i32 = arith.constant 0 : i32
    %c0_i32_0 = arith.constant 0 : i32
    return %arg1, %c0_i32 : i32, i32
  }
  func.func @transform_4(%arg0: i32, %arg1: i32, %arg2: memref<2xi32, #tpu.memory_space<smem>>) -> (i32, i32) {
    %c0_i32 = arith.constant 0 : i32
    %c0_i32_0 = arith.constant 0 : i32
    %c0_i32_1 = arith.constant 0 : i32
    return %c0_i32, %c0_i32_0 : i32, i32
  }
  func.func @transform_5(%arg0: i32, %arg1: i32, %arg2: memref<2xi32, #tpu.memory_space<smem>>) -> (i32, i32) {
    %c0_i32 = arith.constant 0 : i32
    %c0_i32_0 = arith.constant 0 : i32
    return %arg0, %c0_i32 : i32, i32
  }
}

module attributes {stable_mosaic.version = 11 : i64} {
  func.func @_decoder_kernel(%arg0: i32, %arg1: i32, %arg2: memref<128x128xbf16, #tpu.memory_space<vmem>>, %arg3: memref<256x128xbf16, #tpu.memory_space<vmem>>, %arg4: memref<128x256xf32, #tpu.memory_space<vmem>>) attributes {dimension_semantics = [#tpu.dimension_semantics<parallel>, #tpu.dimension_semantics<parallel>], iteration_bounds = array<i64: 2, 1>, scalar_prefetch = 0 : i64, scratch_operands = 0 : i64, tpu.core_type = #tpu.core_type<tc>, window_params = [{transform_indices = @transform_0, window_bounds = array<i64: 128, 128>}, {transform_indices = @transform_1, window_bounds = array<i64: 256, 128>}, {transform_indices = @transform_2, window_bounds = array<i64: 128, 256>}]} {
    %c0 = arith.constant 0 : index
    %c0_0 = arith.constant 0 : index
    %0 = vector.load %arg2[%c0, %c0_0] : memref<128x128xbf16, #tpu.memory_space<vmem>>, vector<128x128xbf16>
    %c0_1 = arith.constant 0 : index
    %c0_2 = arith.constant 0 : index
    %1 = vector.load %arg3[%c0_1, %c0_2] : memref<256x128xbf16, #tpu.memory_space<vmem>>, vector<256x128xbf16>
    %cst = arith.constant dense<0.000000e+00> : vector<128x256xf32>
    %2 = tpu.matmul %0, %1, %cst {dimension_numbers = #tpu.dot_dimension_numbers<[1], [1], [0], [0], [0, 0, 1, 0], [], []>} : vector<128x128xbf16>, vector<256x128xbf16>, vector<128x256xf32> -> vector<128x256xf32>
    %cst_3 = arith.constant 5.000000e-01 : f32
    %3 = vector.broadcast %cst_3 : f32 to vector<128x256xf32>
    %4 = arith.mulf %3, %2 : vector<128x256xf32>
    %5 = math.tanh %4 : vector<128x256xf32>
    %cst_4 = arith.constant 5.000000e-01 : f32
    %6 = vector.broadcast %cst_4 : f32 to vector<128x256xf32>
    %7 = arith.mulf %6, %5 : vector<128x256xf32>
    %cst_5 = arith.constant 5.000000e-01 : f32
    %8 = vector.broadcast %cst_5 : f32 to vector<128x256xf32>
    %9 = arith.addf %7, %8 : vector<128x256xf32>
    %c0_6 = arith.constant 0 : index
    %c0_7 = arith.constant 0 : index
    %10 = vector.load %arg4[%c0_6, %c0_7] : memref<128x256xf32, #tpu.memory_space<vmem>>, vector<128x256xf32>
    tpu.vector_store %arg4[%c0_6, %c0_7], %9 {strides = array<i32>} : memref<128x256xf32, #tpu.memory_space<vmem>>, vector<128x256xf32>,
    return
  }
  func.func @transform_0(%arg0: i32, %arg1: i32) -> (i32, i32) {
    %c0_i32 = arith.constant 0 : i32
    %c0_i32_0 = arith.constant 0 : i32
    return %arg0, %c0_i32 : i32, i32
  }
  func.func @transform_1(%arg0: i32, %arg1: i32) -> (i32, i32) {
    %c0_i32 = arith.constant 0 : i32
    %c0_i32_0 = arith.constant 0 : i32
    return %arg1, %c0_i32 : i32, i32
  }
  func.func @transform_2(%arg0: i32, %arg1: i32) -> (i32, i32) {
    %c0_i32 = arith.constant 0 : i32
    return %arg0, %arg1 : i32, i32
  }
}

</mosaic_0001>

<llo_original>
// kernel: gatae_forward.6
$region0: #{gatae_forward.6}
  #allocation0 [shape = 'u32[]', space=smem, size = 0x4, offset = 0x4, fixed_abs, tag = 'smem constant byte address 0x4 - core index']
  #allocation1 [shape = 'u32[144,128]{1,0:T(1,128)}', space=vmem, size = 0x12000, scoped, tag = 'internal scratch']
  %s0 = inlined_call_operand.vmem [shape: bf16[256,128], index: 0, kind: input, shape index: {}]
  %s1 = inlined_call_operand.vmem [shape: bf16[128,128], index: 1, kind: input, shape index: {}]
  %s2 = inlined_call_operand.vmem [shape: f32[1,128], index: 2, kind: input, shape index: {}]
  %s3 = inlined_call_operand.vmem [shape: f32[1,128], index: 3, kind: input, shape index: {}]
  %s4 = inlined_call_operand.vmem [shape: bf16[256,128], index: 4, kind: output, shape index: {0}]
  %s5 = inlined_call_operand.vmem [shape: f32[1,256], index: 5, kind: output, shape index: {1}]
  %s6 = inlined_call_operand.vmem [shape: f32[256,1], index: 6, kind: output, shape index: {2}]
  %7 = xla_tuple %s4, %s5, %s6
  %s8 = sld [smem:[#allocation0]]
  $region65: #{gatae_forward.6} parent=0
    _
  %s10 = ssub.s32 1, %s8
  %s11 = scalar_select 0, %s10, %s8
  loop: start=0, step=1, limit=4
  $region2: #{gatae_forward.6} parent=0 // loop_pre_header
    _
  $region3: #{gatae_forward.6} parent=0 // loop_header
    %s13 = sphi 0, %s17
    %p14 = scmp.ge.s32.totalorder %s13, 4
    %s23 = sphi 0, %s25
    %s26 = sphi 0, %s23
    %s27 = sphi 0, %s26
    %s43 = sphi 0, %s27
    %s47 = sphi 0, %s47
    %s49 = sphi 0, %s47
    %s50 = sphi 0, %s49
    %s64 = sphi 0, %s50
    %s68 = sphi 0, %s68
    %s70 = sphi 0, %s68
    %s71 = sphi 0, %s70
    %s85 = sphi 0, %s71
    %s89 = sphi 0, %s89
    %s91 = sphi 0, %s89
    %s92 = sphi 0, %s91
    %s106 = sphi 0, %s92
    %s112 = sphi 0, %s114
    %s115 = sphi 0, %s112
    %s116 = sphi 0, %s115
    %s132 = sphi 0, %s116
    %s138 = sphi 0, %s140
    %s141 = sphi 0, %s138
    %s142 = sphi 0, %s141
    %s158 = sphi 0, %s142
    %s164 = sphi 0, %s166
    %s167 = sphi 0, %s164
    %s168 = sphi 0, %s167
    %s184 = sphi 0, %s168
  $region4: #{gatae_forward.6} parent=0 // loop_header_branch
    %16 = sbr.rel (%p14) target = $region8
  $region5: #{gatae_forward.6} parent=0 // loop_body
    %s18 = ssub.s32 %s13, 1
    %s19 = ssub.s32 %s13, 2
    %s20 = sadd.s32 %s13, 1
    %s21 = ssub.s32 %s13, %s20
    %p22 = scmp.eq.s32.totalorder %s21, 0
    %s24 = sadd.s32 %s23, 1
    %s25 = scalar_select %p22, %s23, %s24
    %p28 = pneg %p22
    %p29 = scmp.eq.s32.totalorder %s13, 1
    %p30 = por %p28, %p29
    %p31 = scmp.ne.s32.totalorder %s23, %s26
    %p32 = scmp.eq.s32.totalorder %s13, 0
    %p33 = por %p31, %p32
    %p34 = scmp.ne.s32.totalorder %s23, %s26
    %p35 = scmp.eq.s32.totalorder %s18, 1
    %p36 = por %p34, %p35
    %p37 = scmp.ne.s32.totalorder %s26, %s27
    %p38 = scmp.eq.s32.totalorder %s18, 0
    %p39 = por %p37, %p38
    %p40 = scmp.ne.s32.totalorder %s26, %s27
    %p41 = scmp.eq.s32.totalorder %s19, 1
    %p42 = por %p40, %p41
    %p44 = scmp.ne.s32.totalorder %s27, %s43
    %p45 = scmp.eq.s32.totalorder %s19, 0
    %p46 = por %p44, %p45
    %s48 = sadd.s32 %s47, 1
    %p51 = scmp.eq.s32.totalorder %s13, 1
    %p52 = scmp.ne.s32.totalorder %s47, %s49
    %p53 = scmp.eq.s32.totalorder %s13, 0
    %p54 = por %p52, %p53
    %p55 = scmp.ne.s32.totalorder %s47, %s49
    %p56 = scmp.eq.s32.totalorder %s18, 1
    %p57 = por %p55, %p56
    %p58 = scmp.ne.s32.totalorder %s49, %s50
    %p59 = scmp.eq.s32.totalorder %s18, 0
    %p60 = por %p58, %p59
    %p61 = scmp.ne.s32.totalorder %s49, %s50
    %p62 = scmp.eq.s32.totalorder %s19, 1
    %p63 = por %p61, %p62
    %p65 = scmp.ne.s32.totalorder %s50, %s64
    %p66 = scmp.eq.s32.totalorder %s19, 0
    %p67 = por %p65, %p66
    %s69 = sadd.s32 %s68, 1
    %p72 = scmp.eq.s32.totalorder %s13, 1
    %p73 = scmp.ne.s32.totalorder %s68, %s70
    %p74 = scmp.eq.s32.totalorder %s13, 0
    %p75 = por %p73, %p74
    %p76 = scmp.ne.s32.totalorder %s68, %s70
    %p77 = scmp.eq.s32.totalorder %s18, 1
    %p78 = por %p76, %p77
    %p79 = scmp.ne.s32.totalorder %s70, %s71
    %p80 = scmp.eq.s32.totalorder %s18, 0
    %p81 = por %p79, %p80
    %p82 = scmp.ne.s32.totalorder %s70, %s71
    %p83 = scmp.eq.s32.totalorder %s19, 1
    %p84 = por %p82, %p83
    %p86 = scmp.ne.s32.totalorder %s71, %s85
    %p87 = scmp.eq.s32.totalorder %s19, 0
    %p88 = por %p86, %p87
    %s90 = sadd.s32 %s89, 1
    %p93 = scmp.eq.s32.totalorder %s13, 1
    %p94 = scmp.ne.s32.totalorder %s89, %s91
    %p95 = scmp.eq.s32.totalorder %s13, 0
    %p96 = por %p94, %p95
    %p97 = scmp.ne.s32.totalorder %s89, %s91
    %p98 = scmp.eq.s32.totalorder %s18, 1
    %p99 = por %p97, %p98
    %p100 = scmp.ne.s32.totalorder %s91, %s92
    %p101 = scmp.eq.s32.totalorder %s18, 0
    %p102 = por %p100, %p101
    %p103 = scmp.ne.s32.totalorder %s91, %s92
    %p104 = scmp.eq.s32.totalorder %s19, 1
    %p105 = por %p103, %p104
    %p107 = scmp.ne.s32.totalorder %s92, %s106
    %p108 = scmp.eq.s32.totalorder %s19, 0
    %p109 = por %p107, %p108
    %s110 = ssub.s32 %s13, %s20
    %p111 = scmp.eq.s32.totalorder %s110, 0
    %s113 = sadd.s32 %s112, 1
    %s114 = scalar_select %p111, %s112, %s113
    %p117 = pneg %p111
    %p118 = scmp.eq.s32.totalorder %s13, 1
    %p119 = por %p117, %p118
    %p120 = scmp.ne.s32.totalorder %s112, %s115
    %p121 = scmp.eq.s32.totalorder %s13, 0
    %p122 = por %p120, %p121
    %p123 = scmp.ne.s32.totalorder %s112, %s115
    %p124 = scmp.eq.s32.totalorder %s18, 1
    %p125 = por %p123, %p124
    %p126 = scmp.ne.s32.totalorder %s115, %s116
    %p127 = scmp.eq.s32.totalorder %s18, 0
    %p128 = por %p126, %p127
    %p129 = scmp.ne.s32.totalorder %s115, %s116
    %p130 = scmp.eq.s32.totalorder %s19, 1
    %p131 = por %p129, %p130
    %p133 = scmp.ne.s32.totalorder %s116, %s132
    %p134 = scmp.eq.s32.totalorder %s19, 0
    %p135 = por %p133, %p134
    %s136 = ssub.s32 %s13, %s20
    %p137 = scmp.eq.s32.totalorder %s136, 0
    %s139 = sadd.s32 %s138, 1
    %s140 = scalar_select %p137, %s138, %s139
    %p143 = pneg %p137
    %p144 = scmp.eq.s32.totalorder %s13, 1
    %p145 = por %p143, %p144
    %p146 = scmp.ne.s32.totalorder %s138, %s141
    %p147 = scmp.eq.s32.totalorder %s13, 0
    %p148 = por %p146, %p147
    %p149 = scmp.ne.s32.totalorder %s138, %s141
    %p150 = scmp.eq.s32.totalorder %s18, 1
    %p151 = por %p149, %p150
    %p152 = scmp.ne.s32.totalorder %s141, %s142
    %p153 = scmp.eq.s32.totalorder %s18, 0
    %p154 = por %p152, %p153
    %p155 = scmp.ne.s32.totalorder %s141, %s142
    %p156 = scmp.eq.s32.totalorder %s19, 1
    %p157 = por %p155, %p156
    %p159 = scmp.ne.s32.totalorder %s142, %s158
    %p160 = scmp.eq.s32.totalorder %s19, 0
    %p161 = por %p159, %p160
    %s162 = ssub.s32 %s13, %s20
    %p163 = scmp.eq.s32.totalorder %s162, 0
    %s165 = sadd.s32 %s164, 1
    %s166 = scalar_select %p163, %s164, %s165
    %p169 = pneg %p163
    %p170 = scmp.eq.s32.totalorder %s13, 1
    %p171 = por %p169, %p170
    %p172 = scmp.ne.s32.totalorder %s164, %s167
    %p173 = scmp.eq.s32.totalorder %s13, 0
    %p174 = por %p172, %p173
    %p175 = scmp.ne.s32.totalorder %s164, %s167
    %p176 = scmp.eq.s32.totalorder %s18, 1
    %p177 = por %p175, %p176
    %p178 = scmp.ne.s32.totalorder %s167, %s168
    %p179 = scmp.eq.s32.totalorder %s18, 0
    %p180 = por %p178, %p179
    %p181 = scmp.ne.s32.totalorder %s167, %s168
    %p182 = scmp.eq.s32.totalorder %s19, 1
    %p183 = por %p181, %p182
    %p185 = scmp.ne.s32.totalorder %s168, %s184
    %p186 = scmp.eq.s32.totalorder %s19, 0
    %p187 = por %p185, %p186
    %p188 = scmp.le.s32.totalorder 1, %s13
    %p189 = scmp.lt.s32.totalorder %s13, 3
    %p190 = pnand %p188, %p189
    %p191 = pneg %p190
    // Predicated region
    $region9: #{gatae_forward.6} parent=5 // pred_check
      _
    $region10: #{gatae_forward.6} parent=5 // pred_check_branch
      %193 = sbr.rel (%p190) target = $region12
    $region11: #{gatae_forward.6} parent=5 // pred_region
      %s194 = ssub.s32 %s13, 1
      // Predicated region
      $region13: #{gatae_forward.6} parent=11 // pred_check
        %p195 = pneg %p60
      $region14: #{gatae_forward.6} parent=11 // pred_check_branch
        %197 = sbr.rel (%p195) target = $region16
      $region15: #{gatae_forward.6} parent=11 // pred_region
        _
      $region16: #{gatae_forward.6} parent=11 // pred_fallthru
        _
      // Predicated region
      $region17: #{gatae_forward.6} parent=11 // pred_check
        %p198 = pneg %p81
      $region18: #{gatae_forward.6} parent=11 // pred_check_branch
        %200 = sbr.rel (%p198) target = $region20
      $region19: #{gatae_forward.6} parent=11 // pred_region
        _
      $region20: #{gatae_forward.6} parent=11 // pred_fallthru
        _
      // Predicated region
      $region21: #{gatae_forward.6} parent=11 // pred_check
        %p201 = pneg %p102
      $region22: #{gatae_forward.6} parent=11 // pred_check_branch
        %203 = sbr.rel (%p201) target = $region24
      $region23: #{gatae_forward.6} parent=11 // pred_region
        _
      $region24: #{gatae_forward.6} parent=11 // pred_fallthru
        _
    $region12: #{gatae_forward.6} parent=5 // pred_fallthru
      _
    %p204 = scmp.lt.s32.totalorder %s13, 2
    // Predicated region
    $region25: #{gatae_forward.6} parent=5 // pred_check
      %p205 = pneg %p204
    $region26: #{gatae_forward.6} parent=5 // pred_check_branch
      %207 = sbr.rel (%p205) target = $region28
    $region27: #{gatae_forward.6} parent=5 // pred_region
      // Predicated region
      $region29: #{gatae_forward.6} parent=27 // pred_check
        %p208 = pneg %p33
      $region30: #{gatae_forward.6} parent=27 // pred_check_branch
        %210 = sbr.rel (%p208) target = $region32
      $region31: #{gatae_forward.6} parent=27 // pred_region
        %s211 = smul.u32 16, %s13
        %p212 = scmp.lt.s32.totalorder %s211, 31
        %s213 = scalar_select %p212, %s211, 31
        %s214 = smul.addr %s213, 4
        %s215 = scalar_lea.vmem %s0, %s214
        %s216 = smul.u32 16, %s13
      $region32: #{gatae_forward.6} parent=27 // pred_fallthru
        _
    $region28: #{gatae_forward.6} parent=5 // pred_fallthru
      _
    %p217 = scmp.le.s32.totalorder 1, %s13
    %p218 = scmp.lt.s32.totalorder %s13, 3
    %p219 = pnand %p217, %p218
    %p220 = pneg %p219
    // Predicated region
    $region33: #{gatae_forward.6} parent=5 // pred_check
      _
    $region34: #{gatae_forward.6} parent=5 // pred_check_branch
      %222 = sbr.rel (%p219) target = $region36
    $region35: #{gatae_forward.6} parent=5 // pred_region
      %s223 = ssub.s32 %s13, 1
      %s224 = smul.u32 16, %s18
      %p225 = scmp.lt.s32.totalorder %s224, 31
      %s226 = scalar_select %p225, %s224, 31
      %s227 = smul.addr %s226, 4
      %s228 = scalar_lea.vmem %s0, %s227
      %p229 = pneg %p39
      %p230 = pneg %p36
      %p231 = pneg %p60
      %p232 = pneg %p57
      %p233 = pneg %p81
      %p234 = pneg %p78
      %p235 = pneg %p102
      %p236 = pneg %p99
      %p237 = pneg %p128
      %p238 = pneg %p125
      %s239 = smul.u32 16, %s18
      %p240 = scmp.lt.s32.totalorder %s239, 31
      %s241 = scalar_select %p240, %s239, 31
      %s242 = smul.addr %s241, 4
      %s243 = scalar_lea.vmem %s4, %s242
      %p244 = pneg %p154
      %p245 = pneg %p151
      %p246 = scmp.lt.s32.totalorder %s18, 1
      %s247 = scalar_select %p246, %s18, 1
      %s248 = scalar_lea.vmem %s5, %s247
      %p249 = pneg %p180
      %p250 = pneg %p177
      %s251 = smul.u32 16, %s18
      %p252 = scmp.lt.s32.totalorder %s251, 31
      %s253 = scalar_select %p252, %s251, 31
      %s254 = smul.addr %s253, 8
      %s255 = scalar_lea.vmem %s6, %s254
      %s256 = smul.u32 16, %s18
      %p257 = scmp.lt.s32.totalorder %s256, 31
      %s258 = scalar_select %p257, %s256, 31
      %s259 = smul.addr %s258, 4
      %s260 = scalar_lea.vmem %s0, %s259
      %s261 = smul.u32 16, %s18
      %s262 = smul.u32 16, %s18
      %p263 = scmp.lt.s32.totalorder %s262, 31
      %s264 = scalar_select %p263, %s262, 31
      %s265 = smul.addr %s264, 4
      %s266 = scalar_lea.vmem %s4, %s265
      %s267 = smul.u32 16, %s18
      %p268 = scmp.lt.s32.totalorder %s18, 1
      %s269 = scalar_select %p268, %s18, 1
      %s270 = scalar_lea.vmem %s5, %s269
      %s271 = smul.u32 16, %s18
      %p272 = scmp.lt.s32.totalorder %s271, 31
      %s273 = scalar_select %p272, %s271, 31
      %s274 = smul.addr %s273, 8
      %s275 = scalar_lea.vmem %s6, %s274
      %s276 = smul.u32 16, %s18
      %v278 = vld [vmem:[%s260] sm:$0xf]
      %v279 = vld [vmem:[%s260 + $0x4] sm:$0xf]
      %v280 = vld [vmem:[%s260 + $0x8] sm:$0xf]
      %v281 = vld [vmem:[%s260 + $0xc] sm:$0xf]
      %v282 = vld [vmem:[%s260 + $0x10] sm:$0xf]
      %v283 = vld [vmem:[%s260 + $0x14] sm:$0xf]
      %v284 = vld [vmem:[%s260 + $0x18] sm:$0xf]
      %v285 = vld [vmem:[%s260 + $0x1c] sm:$0xf]
      %v286 = vld [vmem:[%s260 + $0x20] sm:$0xf]
      %v287 = vld [vmem:[%s260 + $0x24] sm:$0xf]
      %v288 = vld [vmem:[%s260 + $0x28] sm:$0xf]
      %v289 = vld [vmem:[%s260 + $0x2c] sm:$0xf]
      %v290 = vld [vmem:[%s260 + $0x30] sm:$0xf]
      %v291 = vld [vmem:[%s260 + $0x34] sm:$0xf]
      %v292 = vld [vmem:[%s260 + $0x38] sm:$0xf]
      %v293 = vld [vmem:[%s260 + $0x3c] sm:$0xf]
      %v294 = vld [vmem:[%s1] sm:$0xf]
      %v295 = vld [vmem:[%s1 + $0x4] sm:$0xf]
      %v296 = vld [vmem:[%s1 + $0x8] sm:$0xf]
      %v297 = vld [vmem:[%s1 + $0xc] sm:$0xf]
      %v298 = vld [vmem:[%s1 + $0x10] sm:$0xf]
      %v299 = vld [vmem:[%s1 + $0x14] sm:$0xf]
      %v300 = vld [vmem:[%s1 + $0x18] sm:$0xf]
      %v301 = vld [vmem:[%s1 + $0x1c] sm:$0xf]
      %v302 = vld [vmem:[%s1 + $0x20] sm:$0xf]
      %v303 = vld [vmem:[%s1 + $0x24] sm:$0xf]
      %v304 = vld [vmem:[%s1 + $0x28] sm:$0xf]
      %v305 = vld [vmem:[%s1 + $0x2c] sm:$0xf]
      %v306 = vld [vmem:[%s1 + $0x30] sm:$0xf]
      %v307 = vld [vmem:[%s1 + $0x34] sm:$0xf]
      %v308 = vld [vmem:[%s1 + $0x38] sm:$0xf]
      %v309 = vld [vmem:[%s1 + $0x3c] sm:$0xf]
      %v326 = vunpack.c.l.b16 %v278
      %v327 = vunpack.c.l.b16 %v279
      %v328 = vunpack.c.l.b16 %v280
      %v329 = vunpack.c.l.b16 %v281
      %v330 = vunpack.c.l.b16 %v282
      %v331 = vunpack.c.l.b16 %v283
      %v332 = vunpack.c.l.b16 %v284
      %v333 = vunpack.c.l.b16 %v285
      %v334 = vunpack.c.l.b16 %v286
      %v335 = vunpack.c.l.b16 %v287
      %v336 = vunpack.c.l.b16 %v288
      %v337 = vunpack.c.l.b16 %v289
      %v338 = vunpack.c.l.b16 %v290
      %v339 = vunpack.c.l.b16 %v291
      %v340 = vunpack.c.l.b16 %v292
      %v341 = vunpack.c.l.b16 %v293
      %v342 = vpack.c.b16 %v327, %v326
      %v343 = vpack.c.b16 %v329, %v328
      %v344 = vpack.c.b16 %v331, %v330
      %v345 = vpack.c.b16 %v333, %v332
      %v346 = vpack.c.b16 %v335, %v334
      %v347 = vpack.c.b16 %v337, %v336
      %v348 = vpack.c.b16 %v339, %v338
      %v349 = vpack.c.b16 %v341, %v340
      %v374 = vunpack.c.l.b16 %v294
      %v375 = vunpack.c.l.b16 %v295
      %v376 = vunpack.c.l.b16 %v296
      %v377 = vunpack.c.l.b16 %v297
      %v378 = vunpack.c.l.b16 %v298
      %v379 = vunpack.c.l.b16 %v299
      %v380 = vunpack.c.l.b16 %v300
      %v381 = vunpack.c.l.b16 %v301
      %v382 = vunpack.c.l.b16 %v302
      %v383 = vunpack.c.l.b16 %v303
      %v384 = vunpack.c.l.b16 %v304
      %v385 = vunpack.c.l.b16 %v305
      %v386 = vunpack.c.l.b16 %v306
      %v387 = vunpack.c.l.b16 %v307
      %v388 = vunpack.c.l.b16 %v308
      %v389 = vunpack.c.l.b16 %v309
      %v390 = vpack.c.b16 %v375, %v374
      %v391 = vpack.c.b16 %v377, %v376
      %v392 = vpack.c.b16 %v379, %v378
      %v393 = vpack.c.b16 %v381, %v380
      %v394 = vpack.c.b16 %v383, %v382
      %v395 = vpack.c.b16 %v385, %v384
      %v396 = vpack.c.b16 %v387, %v386
      %v397 = vpack.c.b16 %v389, %v388
      %406 = vmatprep.subr.bf16.mxu0 0
      %407 = vmatpush1.bf16.msra.mxu0 %v390
      %408 = vmatprep.subr.bf16.mxu0 0
      %409 = vmatpush1.bf16.msra.mxu0 %v391
      %410 = vmatprep.subr.bf16.mxu0 0
      %411 = vmatpush1.bf16.msra.mxu0 %v392
      %412 = vmatprep.subr.bf16.mxu0 0
      %413 = vmatpush1.bf16.msra.mxu0 %v393
      %414 = vmatprep.subr.bf16.mxu0 0
      %415 = vmatpush1.bf16.msra.mxu0 %v394
      %416 = vmatprep.subr.bf16.mxu0 0
      %417 = vmatpush1.bf16.msra.mxu0 %v395
      %418 = vmatprep.subr.bf16.mxu0 0
      %419 = vmatpush1.bf16.msra.mxu0 %v396
      %420 = vmatprep.subr.bf16.mxu0 0
      %421 = vmatpush1.bf16.msra.mxu0 %v397
      %422 = vmatprep.subr.bf16.mxu0 0
      %423 = vmatpush1.bf16.msra.mxu0 0
      %424 = vmatprep.subr.bf16.mxu0 0
      %425 = vmatpush1.bf16.msra.mxu0 0
      %426 = vmatprep.subr.bf16.mxu0 0
      %427 = vmatpush1.bf16.msra.mxu0 0
      %428 = vmatprep.subr.bf16.mxu0 0
      %429 = vmatpush1.bf16.msra.mxu0 0
      %430 = vmatprep.subr.bf16.mxu0 0
      %431 = vmatpush1.bf16.msra.mxu0 0
      %432 = vmatprep.subr.bf16.mxu0 0
      %433 = vmatpush1.bf16.msra.mxu0 0
      %434 = vmatprep.subr.bf16.mxu0 0
      %435 = vmatpush1.bf16.msra.mxu0 0
      %436 = vmatprep.subr.bf16.mxu0 0
      %437 = vmatpush1.bf16.msra.mxu0 0
      %438 = vmatprep.mubr.bf16.mxu0 0
      %439 = vmatmul.mubr.bf16.gmra.mrb[0].mxu0 %v342
      %v440 = vpop.f32.mrb[0].mxu0
      %v441 = vadd.f32 0.0, %v440
      %v442 = vpop.f32.mrb[0].mxu0
      %v443 = vpop.f32.mrb[0].mxu0
      %v444 = vadd.f32 0.0, %v443
      %v445 = vpop.f32.mrb[0].mxu0
      %446 = vmatprep.mubr.bf16.mxu0 0
      %447 = vmatmul.mubr.bf16.gmra.mrb[0].mxu0 %v343
      %v448 = vpop.f32.mrb[0].mxu0
      %v449 = vadd.f32 0.0, %v448
      %v450 = vpop.f32.mrb[0].mxu0
      %v451 = vpop.f32.mrb[0].mxu0
      %v452 = vadd.f32 0.0, %v451
      %v453 = vpop.f32.mrb[0].mxu0
      %454 = vmatprep.mubr.bf16.mxu0 0
      %455 = vmatmul.mubr.bf16.gmra.mrb[0].mxu0 %v344
      %v456 = vpop.f32.mrb[0].mxu0
      %v457 = vadd.f32 0.0, %v456
      %v458 = vpop.f32.mrb[0].mxu0
      %v459 = vpop.f32.mrb[0].mxu0
      %v460 = vadd.f32 0.0, %v459
      %v461 = vpop.f32.mrb[0].mxu0
      %462 = vmatprep.mubr.bf16.mxu0 0
      %463 = vmatmul.mubr.bf16.gmra.mrb[0].mxu0 %v345
      %v464 = vpop.f32.mrb[0].mxu0
      %v465 = vadd.f32 0.0, %v464
      %v466 = vpop.f32.mrb[0].mxu0
      %v467 = vpop.f32.mrb[0].mxu0
      %v468 = vadd.f32 0.0, %v467
      %v469 = vpop.f32.mrb[0].mxu0
      %470 = vmatprep.mubr.bf16.mxu0 0
      %471 = vmatmul.mubr.bf16.gmra.mrb[0].mxu0 %v346
      %v472 = vpop.f32.mrb[0].mxu0
      %v473 = vadd.f32 0.0, %v472
      %v474 = vpop.f32.mrb[0].mxu0
      %v475 = vpop.f32.mrb[0].mxu0
      %v476 = vadd.f32 0.0, %v475
      %v477 = vpop.f32.mrb[0].mxu0
      %478 = vmatprep.mubr.bf16.mxu0 0
      %479 = vmatmul.mubr.bf16.gmra.mrb[0].mxu0 %v347
      %v480 = vpop.f32.mrb[0].mxu0
      %v481 = vadd.f32 0.0, %v480
      %v482 = vpop.f32.mrb[0].mxu0
      %v483 = vpop.f32.mrb[0].mxu0
      %v484 = vadd.f32 0.0, %v483
      %v485 = vpop.f32.mrb[0].mxu0
      %486 = vmatprep.mubr.bf16.mxu0 0
      %487 = vmatmul.mubr.bf16.gmra.mrb[0].mxu0 %v348
      %v488 = vpop.f32.mrb[0].mxu0
      %v489 = vadd.f32 0.0, %v488
      %v490 = vpop.f32.mrb[0].mxu0
      %v491 = vpop.f32.mrb[0].mxu0
      %v492 = vadd.f32 0.0, %v491
      %v493 = vpop.f32.mrb[0].mxu0
      %494 = vmatprep.mubr.bf16.mxu0 0
      %495 = vmatmul.mubr.bf16.gmra.mrb[0].mxu0 %v349
      %v496 = vpop.f32.mrb[0].mxu0
      %v497 = vadd.f32 0.0, %v496
      %v498 = vpop.f32.mrb[0].mxu0
      %v499 = vpop.f32.mrb[0].mxu0
      %v500 = vadd.f32 0.0, %v499
      %v501 = vpop.f32.mrb[0].mxu0
      %502 = vdwg.mxu0
      %v503 = vpack.c.bf16 %v444, %v441
      %v504 = vpack.c.bf16 %v452, %v449
      %v505 = vpack.c.bf16 %v460, %v457
      %v506 = vpack.c.bf16 %v468, %v465
      %v507 = vpack.c.bf16 %v476, %v473
      %v508 = vpack.c.bf16 %v484, %v481
      %v509 = vpack.c.bf16 %v492, %v489
      %v510 = vpack.c.bf16 %v500, %v497
      %v519 = vunpack.c.l.b16 %v503
      %v520 = vunpack.c.h.b16 %v503
      %v521 = vunpack.c.l.b16 %v504
      %v522 = vunpack.c.h.b16 %v504
      %v523 = vunpack.c.l.b16 %v505
      %v524 = vunpack.c.h.b16 %v505
      %v525 = vunpack.c.l.b16 %v506
      %v526 = vunpack.c.h.b16 %v506
      %v527 = vunpack.c.l.b16 %v507
      %v528 = vunpack.c.h.b16 %v507
      %v529 = vunpack.c.l.b16 %v508
      %v530 = vunpack.c.h.b16 %v508
      %v531 = vunpack.c.l.b16 %v509
      %v532 = vunpack.c.h.b16 %v509
      %v533 = vunpack.c.l.b16 %v510
      %v534 = vunpack.c.h.b16 %v510
      %v535 = vpack.c.b16 %v519, %v519
      %v536 = vpack.c.b16 %v520, %v520
      %v537 = vpack.c.b16 %v521, %v521
      %v538 = vpack.c.b16 %v522, %v522
      %v539 = vpack.c.b16 %v523, %v523
      %v540 = vpack.c.b16 %v524, %v524
      %v541 = vpack.c.b16 %v525, %v525
      %v542 = vpack.c.b16 %v526, %v526
      %v543 = vpack.c.b16 %v527, %v527
      %v544 = vpack.c.b16 %v528, %v528
      %v545 = vpack.c.b16 %v529, %v529
      %v546 = vpack.c.b16 %v530, %v530
      %v547 = vpack.c.b16 %v531, %v531
      %v548 = vpack.c.b16 %v532, %v532
      %v549 = vpack.c.b16 %v533, %v533
      %v550 = vpack.c.b16 %v534, %v534
      %567 = vst [vmem:[%s266] sm:$0xf] %v535
      %568 = vst [vmem:[%s266 + $0x4] sm:$0xf] %v536
      %569 = vst [vmem:[%s266 + $0x8] sm:$0xf] %v537
      %570 = vst [vmem:[%s266 + $0xc] sm:$0xf] %v538
      %571 = vst [vmem:[%s266 + $0x10] sm:$0xf] %v539
      %572 = vst [vmem:[%s266 + $0x14] sm:$0xf] %v540
      %573 = vst [vmem:[%s266 + $0x18] sm:$0xf] %v541
      %574 = vst [vmem:[%s266 + $0x1c] sm:$0xf] %v542
      %575 = vst [vmem:[%s266 + $0x20] sm:$0xf] %v543
      %576 = vst [vmem:[%s266 + $0x24] sm:$0xf] %v544
      %577 = vst [vmem:[%s266 + $0x28] sm:$0xf] %v545
      %578 = vst [vmem:[%s266 + $0x2c] sm:$0xf] %v546
      %579 = vst [vmem:[%s266 + $0x30] sm:$0xf] %v547
      %580 = vst [vmem:[%s266 + $0x34] sm:$0xf] %v548
      %581 = vst [vmem:[%s266 + $0x38] sm:$0xf] %v549
      %582 = vst [vmem:[%s266 + $0x3c] sm:$0xf] %v550
      %v583 = vld [vmem:[%s2] sm:$0x1]
      %584 = vmatprep.subr.mxu0 0.0
      %585 = vmatpush1.xpose.msra.mxu0 %v441
      %586 = vmatprep.subr.mxu0 0.0
      %587 = vmatpush1.xpose.msra.mxu0 %v444
      %588 = vmatprep.subr.mxu0 0.0
      %589 = vmatpush1.xpose.msra.mxu0 %v449
      %590 = vmatprep.subr.mxu0 0.0
      %591 = vmatpush1.xpose.msra.mxu0 %v452
      %592 = vmatprep.subr.mxu0 0.0
      %593 = vmatpush1.xpose.msra.mxu0 %v457
      %594 = vmatprep.subr.mxu0 0.0
      %595 = vmatpush1.xpose.msra.mxu0 %v460
      %596 = vmatprep.subr.mxu0 0.0
      %597 = vmatpush1.xpose.msra.mxu0 %v465
      %598 = vmatprep.subr.mxu0 0.0
      %599 = vmatpush1.xpose.msra.mxu0 %v468
      %600 = vmatprep.subr.mxu0 0.0
      %601 = vmatpush1.xpose.msra.mxu0 %v473
      %602 = vmatprep.subr.mxu0 0.0
      %603 = vmatpush1.xpose.msra.mxu0 %v476
      %604 = vmatprep.subr.mxu0 0.0
      %605 = vmatpush1.xpose.msra.mxu0 %v481
      %606 = vmatprep.subr.mxu0 0.0
      %607 = vmatpush1.xpose.msra.mxu0 %v484
      %608 = vmatprep.subr.mxu0 0.0
      %609 = vmatpush1.xpose.msra.mxu0 %v489
      %610 = vmatprep.subr.mxu0 0.0
      %611 = vmatpush1.xpose.msra.mxu0 %v492
      %612 = vmatprep.subr.mxu0 0.0
      %613 = vmatpush1.xpose.msra.mxu0 %v497
      %614 = vmatprep.subr.mxu0 0.0
      %615 = vmatpush1.xpose.msra.mxu0 %v500
      %616 = vmatprep.subr.mxu0 0.0
      %617 = vmatpush1.xpose.msra.mxu0 0.0
      %618 = vmatprep.subr.mxu0 0.0
      %619 = vmatpush1.xpose.msra.mxu0 0.0
      %620 = vmatprep.subr.mxu0 0.0
      %621 = vmatpush1.xpose.msra.mxu0 0.0
      %622 = vmatprep.subr.mxu0 0.0
      %623 = vmatpush1.xpose.msra.mxu0 0.0
      %624 = vmatprep.subr.mxu0 0.0
      %625 = vmatpush1.xpose.msra.mxu0 0.0
      %626 = vmatprep.subr.mxu0 0.0
      %627 = vmatpush1.xpose.msra.mxu0 0.0
      %628 = vmatprep.subr.mxu0 0.0
      %629 = vmatpush1.xpose.msra.mxu0 0.0
      %630 = vmatprep.subr.mxu0 0.0
      %631 = vmatpush1.xpose.msra.mxu0 0.0
      %632 = vmatprep.subr.mxu0 0.0
      %633 = vmatpush1.xpose.msra.mxu0 0.0
      %634 = vmatprep.subr.mxu0 0.0
      %635 = vmatpush1.xpose.msra.mxu0 0.0
      %636 = vmatprep.subr.mxu0 0.0
      %637 = vmatpush1.xpose.msra.mxu0 0.0
      %638 = vmatprep.subr.mxu0 0.0
      %639 = vmatpush1.xpose.msra.mxu0 0.0
      %640 = vmatprep.subr.mxu0 0.0
      %641 = vmatpush1.xpose.msra.mxu0 0.0
      %642 = vmatprep.subr.mxu0 0.0
      %643 = vmatpush1.xpose.msra.mxu0 0.0
      %644 = vmatprep.subr.mxu0 0.0
      %645 = vmatpush1.xpose.msra.mxu0 0.0
      %646 = vmatprep.subr.mxu0 0.0
      %647 = vmatpush1.xpose.msra.mxu0 0.0
      %648 = vmatprep.mubr.f32.mxu0 0.0
      %649 = vmatmul.mubr.f32.gmra.mrb[0].mxu0 %v583
      %v650 = vpop.f32.mrb[0].mxu0
      %v651 = vadd.f32 0.0, %v650
      %v652 = vpop.f32.mrb[0].mxu0
      %653 = vdwg.mxu0
      %654 = vst [vmem:[%s270] sm:$0x1] %v651
      %v655 = vld [vmem:[%s3] sm:$0x1]
      %v657 = vlaneseq
      %v658 = vshrl.u32 %v657, 7
      %v659 = vsub.s32 0, %v658
      %v660 = vrot.slane %v655, %v659
      %v662 = vmul.f32 %v441, %v660
      %v663 = vmul.f32 %v444, %v660
      %v664 = vmul.f32 %v449, %v660
      %v665 = vmul.f32 %v452, %v660
      %v666 = vmul.f32 %v457, %v660
      %v667 = vmul.f32 %v460, %v660
      %v668 = vmul.f32 %v465, %v660
      %v669 = vmul.f32 %v468, %v660
      %v670 = vmul.f32 %v473, %v660
      %v671 = vmul.f32 %v476, %v660
      %v672 = vmul.f32 %v481, %v660
      %v673 = vmul.f32 %v484, %v660
      %v674 = vmul.f32 %v489, %v660
      %v675 = vmul.f32 %v492, %v660
      %v676 = vmul.f32 %v497, %v660
      %v677 = vmul.f32 %v500, %v660
      %678 = vadd.xlane.f32.xlu0 %v662
      %v679 = vpop.xlane.xlu0 %678
      %680 = vadd.xlane.f32.xlu0 %v663
      %v681 = vpop.xlane.xlu0 %680
      %682 = vadd.xlane.f32.xlu0 %v664
      %v683 = vpop.xlane.xlu0 %682
      %684 = vadd.xlane.f32.xlu0 %v665
      %v685 = vpop.xlane.xlu0 %684
      %686 = vadd.xlane.f32.xlu0 %v666
      %v687 = vpop.xlane.xlu0 %686
      %688 = vadd.xlane.f32.xlu0 %v667
      %v689 = vpop.xlane.xlu0 %688
      %690 = vadd.xlane.f32.xlu0 %v668
      %v691 = vpop.xlane.xlu0 %690
      %692 = vadd.xlane.f32.xlu0 %v669
      %v693 = vpop.xlane.xlu0 %692
      %694 = vadd.xlane.f32.xlu0 %v670
      %v695 = vpop.xlane.xlu0 %694
      %696 = vadd.xlane.f32.xlu0 %v671
      %v697 = vpop.xlane.xlu0 %696
      %698 = vadd.xlane.f32.xlu0 %v672
      %v699 = vpop.xlane.xlu0 %698
      %700 = vadd.xlane.f32.xlu0 %v673
      %v701 = vpop.xlane.xlu0 %700
      %702 = vadd.xlane.f32.xlu0 %v674
      %v703 = vpop.xlane.xlu0 %702
      %704 = vadd.xlane.f32.xlu0 %v675
      %v705 = vpop.xlane.xlu0 %704
      %706 = vadd.xlane.f32.xlu0 %v676
      %v707 = vpop.xlane.xlu0 %706
      %708 = vadd.xlane.f32.xlu0 %v677
      %v709 = vpop.xlane.xlu0 %708
      %vm710 = vcmask 7168
      %711 = vst.msk [vmem:[%s275] sm:$0xff] %vm710, %v679
      %712 = vst.msk [vmem:[%s275 + $0x8] sm:$0xff] %vm710, %v681
      %713 = vst.msk [vmem:[%s275 + $0x10] sm:$0xff] %vm710, %v683
      %714 = vst.msk [vmem:[%s275 + $0x18] sm:$0xff] %vm710, %v685
      %715 = vst.msk [vmem:[%s275 + $0x20] sm:$0xff] %vm710, %v687
      %716 = vst.msk [vmem:[%s275 + $0x28] sm:$0xff] %vm710, %v689
      %717 = vst.msk [vmem:[%s275 + $0x30] sm:$0xff] %vm710, %v691
      %718 = vst.msk [vmem:[%s275 + $0x38] sm:$0xff] %vm710, %v693
      %719 = vst.msk [vmem:[%s275 + $0x40] sm:$0xff] %vm710, %v695
      %720 = vst.msk [vmem:[%s275 + $0x48] sm:$0xff] %vm710, %v697
      %721 = vst.msk [vmem:[%s275 + $0x50] sm:$0xff] %vm710, %v699
      %722 = vst.msk [vmem:[%s275 + $0x58] sm:$0xff] %vm710, %v701
      %723 = vst.msk [vmem:[%s275 + $0x60] sm:$0xff] %vm710, %v703
      %724 = vst.msk [vmem:[%s275 + $0x68] sm:$0xff] %vm710, %v705
      %725 = vst.msk [vmem:[%s275 + $0x70] sm:$0xff] %vm710, %v707
      %726 = vst.msk [vmem:[%s275 + $0x78] sm:$0xff] %vm710, %v709
      %s727 = smul.u32 16, %s18
      %p728 = scmp.lt.s32.totalorder %s727, 31
      %s729 = scalar_select %p728, %s727, 31
      %s730 = smul.addr %s729, 4
      %s731 = scalar_lea.vmem %s4, %s730
      %p732 = scmp.lt.s32.totalorder %s18, 1
      %s733 = scalar_select %p732, %s18, 1
      %s734 = scalar_lea.vmem %s5, %s733
      %s735 = smul.u32 16, %s18
      %p736 = scmp.lt.s32.totalorder %s735, 31
      %s737 = scalar_select %p736, %s735, 31
      %s738 = smul.addr %s737, 8
      %s739 = scalar_lea.vmem %s6, %s738
      // Predicated region
      $region37: #{gatae_forward.6} parent=35 // pred_check
        %p740 = pneg %p125
      $region38: #{gatae_forward.6} parent=35 // pred_check_branch
        %742 = sbr.rel (%p740) target = $region40
      $region39: #{gatae_forward.6} parent=35 // pred_region
        %s743 = smul.u32 16, %s18
      $region40: #{gatae_forward.6} parent=35 // pred_fallthru
        _
      // Predicated region
      $region41: #{gatae_forward.6} parent=35 // pred_check
        %p744 = pneg %p151
      $region42: #{gatae_forward.6} parent=35 // pred_check_branch
        %746 = sbr.rel (%p744) target = $region44
      $region43: #{gatae_forward.6} parent=35 // pred_region
        _
      $region44: #{gatae_forward.6} parent=35 // pred_fallthru
        _
      // Predicated region
      $region45: #{gatae_forward.6} parent=35 // pred_check
        %p747 = pneg %p177
      $region46: #{gatae_forward.6} parent=35 // pred_check_branch
        %749 = sbr.rel (%p747) target = $region48
      $region47: #{gatae_forward.6} parent=35 // pred_region
        %s750 = smul.u32 16, %s18
      $region48: #{gatae_forward.6} parent=35 // pred_fallthru
        _
    $region36: #{gatae_forward.6} parent=5 // pred_fallthru
      _
    %p751 = scmp.le.s32.totalorder 2, %s13
    // Predicated region
    $region49: #{gatae_forward.6} parent=5 // pred_check
      %p752 = pneg %p751
    $region50: #{gatae_forward.6} parent=5 // pred_check_branch
      %754 = sbr.rel (%p752) target = $region52
    $region51: #{gatae_forward.6} parent=5 // pred_region
      %s755 = ssub.s32 %s13, 2
      // Predicated region
      $region53: #{gatae_forward.6} parent=51 // pred_check
        %p756 = pneg %p131
      $region54: #{gatae_forward.6} parent=51 // pred_check_branch
        %758 = sbr.rel (%p756) target = $region56
      $region55: #{gatae_forward.6} parent=51 // pred_region
        %s759 = smul.u32 16, %s19
        %p760 = scmp.lt.s32.totalorder %s759, 31
        %s761 = scalar_select %p760, %s759, 31
        %s762 = smul.addr %s761, 4
        %s763 = scalar_lea.vmem %s4, %s762
      $region56: #{gatae_forward.6} parent=51 // pred_fallthru
        _
      // Predicated region
      $region57: #{gatae_forward.6} parent=51 // pred_check
        %p764 = pneg %p157
      $region58: #{gatae_forward.6} parent=51 // pred_check_branch
        %766 = sbr.rel (%p764) target = $region60
      $region59: #{gatae_forward.6} parent=51 // pred_region
        %p767 = scmp.lt.s32.totalorder %s19, 1
        %s768 = scalar_select %p767, %s19, 1
        %s769 = scalar_lea.vmem %s5, %s768
      $region60: #{gatae_forward.6} parent=51 // pred_fallthru
        _
      // Predicated region
      $region61: #{gatae_forward.6} parent=51 // pred_check
        %p770 = pneg %p183
      $region62: #{gatae_forward.6} parent=51 // pred_check_branch
        %772 = sbr.rel (%p770) target = $region64
      $region63: #{gatae_forward.6} parent=51 // pred_region
        %s773 = smul.u32 16, %s19
        %p774 = scmp.lt.s32.totalorder %s773, 31
        %s775 = scalar_select %p774, %s773, 31
        %s776 = smul.addr %s775, 8
        %s777 = scalar_lea.vmem %s6, %s776
      $region64: #{gatae_forward.6} parent=51 // pred_fallthru
        _
    $region52: #{gatae_forward.6} parent=5 // pred_fallthru
      _
  $region6: #{gatae_forward.6} parent=0 // loop_footer
    %s17 = sadd.s32 1, %s13
  $region7: #{gatae_forward.6} parent=0 // loop_footer_branch
    %12 = sbr.rel target = $region3
  $region8: #{gatae_forward.6} parent=0 // loop_exit
    _

// kernel: gatae_forward.10
$region0: #{gatae_forward.10}
  #allocation0 [shape = 'u32[]', space=smem, size = 0x4, offset = 0x4, fixed_abs, tag = 'smem constant byte address 0x4 - core index']
  #allocation1 [shape = 'u32[144,128]{1,0:T(1,128)}', space=vmem, size = 0x12000, scoped, tag = 'internal scratch']
  %s0 = inlined_call_operand.vmem [shape: bf16[256,128], index: 0, kind: input, shape index: {}]
  %s1 = inlined_call_operand.vmem [shape: bf16[128,128], index: 1, kind: input, shape index: {}]
  %s2 = inlined_call_operand.vmem [shape: f32[1,128], index: 2, kind: input, shape index: {}]
  %s3 = inlined_call_operand.vmem [shape: f32[256,128], index: 3, kind: output, shape index: {0}]
  %s4 = inlined_call_operand.vmem [shape: bf16[256,128], index: 4, kind: output, shape index: {1}]
  %s5 = inlined_call_operand.vmem [shape: f32[256,128], index: 5, kind: output, shape index: {2}]
  %6 = xla_tuple %s3, %s4, %s5
  %s7 = sld [smem:[#allocation0]]
  $region61: #{gatae_forward.10} parent=0
    _
  %s9 = ssub.s32 1, %s7
  %s10 = scalar_select 0, %s9, %s7
  loop: start=0, step=1, limit=4
  $region2: #{gatae_forward.10} parent=0 // loop_pre_header
    _
  $region3: #{gatae_forward.10} parent=0 // loop_header
    %s12 = sphi 0, %s16
    %p13 = scmp.ge.s32.totalorder %s12, 4
    %s22 = sphi 0, %s24
    %s25 = sphi 0, %s22
    %s26 = sphi 0, %s25
    %s42 = sphi 0, %s26
    %s46 = sphi 0, %s46
    %s48 = sphi 0, %s46
    %s49 = sphi 0, %s48
    %s63 = sphi 0, %s49
    %s67 = sphi 0, %s67
    %s69 = sphi 0, %s67
    %s70 = sphi 0, %s69
    %s84 = sphi 0, %s70
    %s90 = sphi 0, %s92
    %s93 = sphi 0, %s90
    %s94 = sphi 0, %s93
    %s110 = sphi 0, %s94
    %s116 = sphi 0, %s118
    %s119 = sphi 0, %s116
    %s120 = sphi 0, %s119
    %s136 = sphi 0, %s120
    %s142 = sphi 0, %s144
    %s145 = sphi 0, %s142
    %s146 = sphi 0, %s145
    %s162 = sphi 0, %s146
  $region4: #{gatae_forward.10} parent=0 // loop_header_branch
    %15 = sbr.rel (%p13) target = $region8
  $region5: #{gatae_forward.10} parent=0 // loop_body
    %s17 = ssub.s32 %s12, 1
    %s18 = ssub.s32 %s12, 2
    %s19 = sadd.s32 %s12, 1
    %s20 = ssub.s32 %s12, %s19
    %p21 = scmp.eq.s32.totalorder %s20, 0
    %s23 = sadd.s32 %s22, 1
    %s24 = scalar_select %p21, %s22, %s23
    %p27 = pneg %p21
    %p28 = scmp.eq.s32.totalorder %s12, 1
    %p29 = por %p27, %p28
    %p30 = scmp.ne.s32.totalorder %s22, %s25
    %p31 = scmp.eq.s32.totalorder %s12, 0
    %p32 = por %p30, %p31
    %p33 = scmp.ne.s32.totalorder %s22, %s25
    %p34 = scmp.eq.s32.totalorder %s17, 1
    %p35 = por %p33, %p34
    %p36 = scmp.ne.s32.totalorder %s25, %s26
    %p37 = scmp.eq.s32.totalorder %s17, 0
    %p38 = por %p36, %p37
    %p39 = scmp.ne.s32.totalorder %s25, %s26
    %p40 = scmp.eq.s32.totalorder %s18, 1
    %p41 = por %p39, %p40
    %p43 = scmp.ne.s32.totalorder %s26, %s42
    %p44 = scmp.eq.s32.totalorder %s18, 0
    %p45 = por %p43, %p44
    %s47 = sadd.s32 %s46, 1
    %p50 = scmp.eq.s32.totalorder %s12, 1
    %p51 = scmp.ne.s32.totalorder %s46, %s48
    %p52 = scmp.eq.s32.totalorder %s12, 0
    %p53 = por %p51, %p52
    %p54 = scmp.ne.s32.totalorder %s46, %s48
    %p55 = scmp.eq.s32.totalorder %s17, 1
    %p56 = por %p54, %p55
    %p57 = scmp.ne.s32.totalorder %s48, %s49
    %p58 = scmp.eq.s32.totalorder %s17, 0
    %p59 = por %p57, %p58
    %p60 = scmp.ne.s32.totalorder %s48, %s49
    %p61 = scmp.eq.s32.totalorder %s18, 1
    %p62 = por %p60, %p61
    %p64 = scmp.ne.s32.totalorder %s49, %s63
    %p65 = scmp.eq.s32.totalorder %s18, 0
    %p66 = por %p64, %p65
    %s68 = sadd.s32 %s67, 1
    %p71 = scmp.eq.s32.totalorder %s12, 1
    %p72 = scmp.ne.s32.totalorder %s67, %s69
    %p73 = scmp.eq.s32.totalorder %s12, 0
    %p74 = por %p72, %p73
    %p75 = scmp.ne.s32.totalorder %s67, %s69
    %p76 = scmp.eq.s32.totalorder %s17, 1
    %p77 = por %p75, %p76
    %p78 = scmp.ne.s32.totalorder %s69, %s70
    %p79 = scmp.eq.s32.totalorder %s17, 0
    %p80 = por %p78, %p79
    %p81 = scmp.ne.s32.totalorder %s69, %s70
    %p82 = scmp.eq.s32.totalorder %s18, 1
    %p83 = por %p81, %p82
    %p85 = scmp.ne.s32.totalorder %s70, %s84
    %p86 = scmp.eq.s32.totalorder %s18, 0
    %p87 = por %p85, %p86
    %s88 = ssub.s32 %s12, %s19
    %p89 = scmp.eq.s32.totalorder %s88, 0
    %s91 = sadd.s32 %s90, 1
    %s92 = scalar_select %p89, %s90, %s91
    %p95 = pneg %p89
    %p96 = scmp.eq.s32.totalorder %s12, 1
    %p97 = por %p95, %p96
    %p98 = scmp.ne.s32.totalorder %s90, %s93
    %p99 = scmp.eq.s32.totalorder %s12, 0
    %p100 = por %p98, %p99
    %p101 = scmp.ne.s32.totalorder %s90, %s93
    %p102 = scmp.eq.s32.totalorder %s17, 1
    %p103 = por %p101, %p102
    %p104 = scmp.ne.s32.totalorder %s93, %s94
    %p105 = scmp.eq.s32.totalorder %s17, 0
    %p106 = por %p104, %p105
    %p107 = scmp.ne.s32.totalorder %s93, %s94
    %p108 = scmp.eq.s32.totalorder %s18, 1
    %p109 = por %p107, %p108
    %p111 = scmp.ne.s32.totalorder %s94, %s110
    %p112 = scmp.eq.s32.totalorder %s18, 0
    %p113 = por %p111, %p112
    %s114 = ssub.s32 %s12, %s19
    %p115 = scmp.eq.s32.totalorder %s114, 0
    %s117 = sadd.s32 %s116, 1
    %s118 = scalar_select %p115, %s116, %s117
    %p121 = pneg %p115
    %p122 = scmp.eq.s32.totalorder %s12, 1
    %p123 = por %p121, %p122
    %p124 = scmp.ne.s32.totalorder %s116, %s119
    %p125 = scmp.eq.s32.totalorder %s12, 0
    %p126 = por %p124, %p125
    %p127 = scmp.ne.s32.totalorder %s116, %s119
    %p128 = scmp.eq.s32.totalorder %s17, 1
    %p129 = por %p127, %p128
    %p130 = scmp.ne.s32.totalorder %s119, %s120
    %p131 = scmp.eq.s32.totalorder %s17, 0
    %p132 = por %p130, %p131
    %p133 = scmp.ne.s32.totalorder %s119, %s120
    %p134 = scmp.eq.s32.totalorder %s18, 1
    %p135 = por %p133, %p134
    %p137 = scmp.ne.s32.totalorder %s120, %s136
    %p138 = scmp.eq.s32.totalorder %s18, 0
    %p139 = por %p137, %p138
    %s140 = ssub.s32 %s12, %s19
    %p141 = scmp.eq.s32.totalorder %s140, 0
    %s143 = sadd.s32 %s142, 1
    %s144 = scalar_select %p141, %s142, %s143
    %p147 = pneg %p141
    %p148 = scmp.eq.s32.totalorder %s12, 1
    %p149 = por %p147, %p148
    %p150 = scmp.ne.s32.totalorder %s142, %s145
    %p151 = scmp.eq.s32.totalorder %s12, 0
    %p152 = por %p150, %p151
    %p153 = scmp.ne.s32.totalorder %s142, %s145
    %p154 = scmp.eq.s32.totalorder %s17, 1
    %p155 = por %p153, %p154
    %p156 = scmp.ne.s32.totalorder %s145, %s146
    %p157 = scmp.eq.s32.totalorder %s17, 0
    %p158 = por %p156, %p157
    %p159 = scmp.ne.s32.totalorder %s145, %s146
    %p160 = scmp.eq.s32.totalorder %s18, 1
    %p161 = por %p159, %p160
    %p163 = scmp.ne.s32.totalorder %s146, %s162
    %p164 = scmp.eq.s32.totalorder %s18, 0
    %p165 = por %p163, %p164
    %p166 = scmp.le.s32.totalorder 1, %s12
    %p167 = scmp.lt.s32.totalorder %s12, 3
    %p168 = pnand %p166, %p167
    %p169 = pneg %p168
    // Predicated region
    $region9: #{gatae_forward.10} parent=5 // pred_check
      _
    $region10: #{gatae_forward.10} parent=5 // pred_check_branch
      %171 = sbr.rel (%p168) target = $region12
    $region11: #{gatae_forward.10} parent=5 // pred_region
      %s172 = ssub.s32 %s12, 1
      // Predicated region
      $region13: #{gatae_forward.10} parent=11 // pred_check
        %p173 = pneg %p59
      $region14: #{gatae_forward.10} parent=11 // pred_check_branch
        %175 = sbr.rel (%p173) target = $region16
      $region15: #{gatae_forward.10} parent=11 // pred_region
        _
      $region16: #{gatae_forward.10} parent=11 // pred_fallthru
        _
      // Predicated region
      $region17: #{gatae_forward.10} parent=11 // pred_check
        %p176 = pneg %p80
      $region18: #{gatae_forward.10} parent=11 // pred_check_branch
        %178 = sbr.rel (%p176) target = $region20
      $region19: #{gatae_forward.10} parent=11 // pred_region
        _
      $region20: #{gatae_forward.10} parent=11 // pred_fallthru
        _
    $region12: #{gatae_forward.10} parent=5 // pred_fallthru
      _
    %p179 = scmp.lt.s32.totalorder %s12, 2
    // Predicated region
    $region21: #{gatae_forward.10} parent=5 // pred_check
      %p180 = pneg %p179
    $region22: #{gatae_forward.10} parent=5 // pred_check_branch
      %182 = sbr.rel (%p180) target = $region24
    $region23: #{gatae_forward.10} parent=5 // pred_region
      // Predicated region
      $region25: #{gatae_forward.10} parent=23 // pred_check
        %p183 = pneg %p32
      $region26: #{gatae_forward.10} parent=23 // pred_check_branch
        %185 = sbr.rel (%p183) target = $region28
      $region27: #{gatae_forward.10} parent=23 // pred_region
        %s186 = smul.u32 16, %s12
        %p187 = scmp.lt.s32.totalorder %s186, 31
        %s188 = scalar_select %p187, %s186, 31
        %s189 = smul.addr %s188, 4
        %s190 = scalar_lea.vmem %s0, %s189
        %s191 = smul.u32 16, %s12
      $region28: #{gatae_forward.10} parent=23 // pred_fallthru
        _
    $region24: #{gatae_forward.10} parent=5 // pred_fallthru
      _
    %p192 = scmp.le.s32.totalorder 1, %s12
    %p193 = scmp.lt.s32.totalorder %s12, 3
    %p194 = pnand %p192, %p193
    %p195 = pneg %p194
    // Predicated region
    $region29: #{gatae_forward.10} parent=5 // pred_check
      _
    $region30: #{gatae_forward.10} parent=5 // pred_check_branch
      %197 = sbr.rel (%p194) target = $region32
    $region31: #{gatae_forward.10} parent=5 // pred_region
      %s198 = ssub.s32 %s12, 1
      %s199 = smul.u32 16, %s17
      %p200 = scmp.lt.s32.totalorder %s199, 31
      %s201 = scalar_select %p200, %s199, 31
      %s202 = smul.addr %s201, 4
      %s203 = scalar_lea.vmem %s0, %s202
      %p204 = pneg %p38
      %p205 = pneg %p35
      %p206 = pneg %p59
      %p207 = pneg %p56
      %p208 = pneg %p80
      %p209 = pneg %p77
      %p210 = pneg %p106
      %p211 = pneg %p103
      %s212 = smul.u32 16, %s17
      %p213 = scmp.lt.s32.totalorder %s212, 31
      %s214 = scalar_select %p213, %s212, 31
      %s215 = smul.addr %s214, 8
      %s216 = scalar_lea.vmem %s3, %s215
      %p217 = pneg %p132
      %p218 = pneg %p129
      %s219 = smul.u32 16, %s17
      %p220 = scmp.lt.s32.totalorder %s219, 31
      %s221 = scalar_select %p220, %s219, 31
      %s222 = smul.addr %s221, 4
      %s223 = scalar_lea.vmem %s4, %s222
      %p224 = pneg %p158
      %p225 = pneg %p155
      %s226 = smul.u32 16, %s17
      %p227 = scmp.lt.s32.totalorder %s226, 31
      %s228 = scalar_select %p227, %s226, 31
      %s229 = smul.addr %s228, 8
      %s230 = scalar_lea.vmem %s5, %s229
      %s231 = smul.u32 16, %s17
      %p232 = scmp.lt.s32.totalorder %s231, 31
      %s233 = scalar_select %p232, %s231, 31
      %s234 = smul.addr %s233, 4
      %s235 = scalar_lea.vmem %s0, %s234
      %s236 = smul.u32 16, %s17
      %s237 = smul.u32 16, %s17
      %p238 = scmp.lt.s32.totalorder %s237, 31
      %s239 = scalar_select %p238, %s237, 31
      %s240 = smul.addr %s239, 8
      %s241 = scalar_lea.vmem %s3, %s240
      %s242 = smul.u32 16, %s17
      %s243 = smul.u32 16, %s17
      %p244 = scmp.lt.s32.totalorder %s243, 31
      %s245 = scalar_select %p244, %s243, 31
      %s246 = smul.addr %s245, 4
      %s247 = scalar_lea.vmem %s4, %s246
      %s248 = smul.u32 16, %s17
      %s249 = smul.u32 16, %s17
      %p250 = scmp.lt.s32.totalorder %s249, 31
      %s251 = scalar_select %p250, %s249, 31
      %s252 = smul.addr %s251, 8
      %s253 = scalar_lea.vmem %s5, %s252
      %s254 = smul.u32 16, %s17
      %v256 = vld [vmem:[%s235] sm:$0xf]
      %v257 = vld [vmem:[%s235 + $0x4] sm:$0xf]
      %v258 = vld [vmem:[%s235 + $0x8] sm:$0xf]
      %v259 = vld [vmem:[%s235 + $0xc] sm:$0xf]
      %v260 = vld [vmem:[%s235 + $0x10] sm:$0xf]
      %v261 = vld [vmem:[%s235 + $0x14] sm:$0xf]
      %v262 = vld [vmem:[%s235 + $0x18] sm:$0xf]
      %v263 = vld [vmem:[%s235 + $0x1c] sm:$0xf]
      %v264 = vld [vmem:[%s235 + $0x20] sm:$0xf]
      %v265 = vld [vmem:[%s235 + $0x24] sm:$0xf]
      %v266 = vld [vmem:[%s235 + $0x28] sm:$0xf]
      %v267 = vld [vmem:[%s235 + $0x2c] sm:$0xf]
      %v268 = vld [vmem:[%s235 + $0x30] sm:$0xf]
      %v269 = vld [vmem:[%s235 + $0x34] sm:$0xf]
      %v270 = vld [vmem:[%s235 + $0x38] sm:$0xf]
      %v271 = vld [vmem:[%s235 + $0x3c] sm:$0xf]
      %v272 = vunpack.c.l.bf16 %v256
      %v273 = vunpack.c.l.bf16 %v257
      %v274 = vunpack.c.l.bf16 %v258
      %v275 = vunpack.c.l.bf16 %v259
      %v276 = vunpack.c.l.bf16 %v260
      %v277 = vunpack.c.l.bf16 %v261
      %v278 = vunpack.c.l.bf16 %v262
      %v279 = vunpack.c.l.bf16 %v263
      %v280 = vunpack.c.l.bf16 %v264
      %v281 = vunpack.c.l.bf16 %v265
      %v282 = vunpack.c.l.bf16 %v266
      %v283 = vunpack.c.l.bf16 %v267
      %v284 = vunpack.c.l.bf16 %v268
      %v285 = vunpack.c.l.bf16 %v269
      %v286 = vunpack.c.l.bf16 %v270
      %v287 = vunpack.c.l.bf16 %v271
      %v288 = vmul.f32 %v272, %v272
      %v289 = vmul.f32 %v273, %v273
      %v290 = vmul.f32 %v274, %v274
      %v291 = vmul.f32 %v275, %v275
      %v292 = vmul.f32 %v276, %v276
      %v293 = vmul.f32 %v277, %v277
      %v294 = vmul.f32 %v278, %v278
      %v295 = vmul.f32 %v279, %v279
      %v296 = vmul.f32 %v280, %v280
      %v297 = vmul.f32 %v281, %v281
      %v298 = vmul.f32 %v282, %v282
      %v299 = vmul.f32 %v283, %v283
      %v300 = vmul.f32 %v284, %v284
      %v301 = vmul.f32 %v285, %v285
      %v302 = vmul.f32 %v286, %v286
      %v303 = vmul.f32 %v287, %v287
      %304 = vadd.xlane.f32.xlu0 %v288
      %v305 = vpop.xlane.xlu0 %304
      %306 = vadd.xlane.f32.xlu0 %v289
      %v307 = vpop.xlane.xlu0 %306
      %308 = vadd.xlane.f32.xlu0 %v290
      %v309 = vpop.xlane.xlu0 %308
      %310 = vadd.xlane.f32.xlu0 %v291
      %v311 = vpop.xlane.xlu0 %310
      %312 = vadd.xlane.f32.xlu0 %v292
      %v313 = vpop.xlane.xlu0 %312
      %314 = vadd.xlane.f32.xlu0 %v293
      %v315 = vpop.xlane.xlu0 %314
      %316 = vadd.xlane.f32.xlu0 %v294
      %v317 = vpop.xlane.xlu0 %316
      %318 = vadd.xlane.f32.xlu0 %v295
      %v319 = vpop.xlane.xlu0 %318
      %320 = vadd.xlane.f32.xlu0 %v296
      %v321 = vpop.xlane.xlu0 %320
      %322 = vadd.xlane.f32.xlu0 %v297
      %v323 = vpop.xlane.xlu0 %322
      %324 = vadd.xlane.f32.xlu0 %v298
      %v325 = vpop.xlane.xlu0 %324
      %326 = vadd.xlane.f32.xlu0 %v299
      %v327 = vpop.xlane.xlu0 %326
      %328 = vadd.xlane.f32.xlu0 %v300
      %v329 = vpop.xlane.xlu0 %328
      %330 = vadd.xlane.f32.xlu0 %v301
      %v331 = vpop.xlane.xlu0 %330
      %332 = vadd.xlane.f32.xlu0 %v302
      %v333 = vpop.xlane.xlu0 %332
      %334 = vadd.xlane.f32.xlu0 %v303
      %v335 = vpop.xlane.xlu0 %334
      %v336 = vmax.f32 %v305, 1e-24
      %v337 = vmax.f32 %v307, 1e-24
      %v338 = vmax.f32 %v309, 1e-24
      %v339 = vmax.f32 %v311, 1e-24
      %v340 = vmax.f32 %v313, 1e-24
      %v341 = vmax.f32 %v315, 1e-24
      %v342 = vmax.f32 %v317, 1e-24
      %v343 = vmax.f32 %v319, 1e-24
      %v344 = vmax.f32 %v321, 1e-24
      %v345 = vmax.f32 %v323, 1e-24
      %v346 = vmax.f32 %v325, 1e-24
      %v347 = vmax.f32 %v327, 1e-24
      %v348 = vmax.f32 %v329, 1e-24
      %v349 = vmax.f32 %v331, 1e-24
      %v350 = vmax.f32 %v333, 1e-24
      %v351 = vmax.f32 %v335, 1e-24
      %v352 = vrsqrt.pop %v336
      %v353 = vrsqrt.pop %v337
      %v354 = vrsqrt.pop %v338
      %v355 = vrsqrt.pop %v339
      %v356 = vrsqrt.pop %v340
      %v357 = vrsqrt.pop %v341
      %v358 = vrsqrt.pop %v342
      %v359 = vrsqrt.pop %v343
      %v360 = vrsqrt.pop %v344
      %v361 = vrsqrt.pop %v345
      %v362 = vrsqrt.pop %v346
      %v363 = vrsqrt.pop %v347
      %v364 = vrsqrt.pop %v348
      %v365 = vrsqrt.pop %v349
      %v366 = vrsqrt.pop %v350
      %v367 = vrsqrt.pop %v351
      %v368 = vmul.f32 %v272, %v352
      %v369 = vmul.f32 %v273, %v353
      %v370 = vmul.f32 %v274, %v354
      %v371 = vmul.f32 %v275, %v355
      %v372 = vmul.f32 %v276, %v356
      %v373 = vmul.f32 %v277, %v357
      %v374 = vmul.f32 %v278, %v358
      %v375 = vmul.f32 %v279, %v359
      %v376 = vmul.f32 %v280, %v360
      %v377 = vmul.f32 %v281, %v361
      %v378 = vmul.f32 %v282, %v362
      %v379 = vmul.f32 %v283, %v363
      %v380 = vmul.f32 %v284, %v364
      %v381 = vmul.f32 %v285, %v365
      %v382 = vmul.f32 %v286, %v366
      %v383 = vmul.f32 %v287, %v367
      %384 = vst [vmem:[%s241] sm:$0xff] %v368
      %385 = vst [vmem:[%s241 + $0x8] sm:$0xff] %v369
      %386 = vst [vmem:[%s241 + $0x10] sm:$0xff] %v370
      %387 = vst [vmem:[%s241 + $0x18] sm:$0xff] %v371
      %388 = vst [vmem:[%s241 + $0x20] sm:$0xff] %v372
      %389 = vst [vmem:[%s241 + $0x28] sm:$0xff] %v373
      %390 = vst [vmem:[%s241 + $0x30] sm:$0xff] %v374
      %391 = vst [vmem:[%s241 + $0x38] sm:$0xff] %v375
      %392 = vst [vmem:[%s241 + $0x40] sm:$0xff] %v376
      %393 = vst [vmem:[%s241 + $0x48] sm:$0xff] %v377
      %394 = vst [vmem:[%s241 + $0x50] sm:$0xff] %v378
      %395 = vst [vmem:[%s241 + $0x58] sm:$0xff] %v379
      %396 = vst [vmem:[%s241 + $0x60] sm:$0xff] %v380
      %397 = vst [vmem:[%s241 + $0x68] sm:$0xff] %v381
      %398 = vst [vmem:[%s241 + $0x70] sm:$0xff] %v382
      %399 = vst [vmem:[%s241 + $0x78] sm:$0xff] %v383
      %v400 = vpack.c.bf16 %v369, %v368
      %v401 = vpack.c.bf16 %v371, %v370
      %v402 = vpack.c.bf16 %v373, %v372
      %v403 = vpack.c.bf16 %v375, %v374
      %v404 = vpack.c.bf16 %v377, %v376
      %v405 = vpack.c.bf16 %v379, %v378
      %v406 = vpack.c.bf16 %v381, %v380
      %v407 = vpack.c.bf16 %v383, %v382
      %v416 = vunpack.c.l.b16 %v400
      %v417 = vunpack.c.h.b16 %v400
      %v418 = vunpack.c.l.b16 %v401
      %v419 = vunpack.c.h.b16 %v401
      %v420 = vunpack.c.l.b16 %v402
      %v421 = vunpack.c.h.b16 %v402
      %v422 = vunpack.c.l.b16 %v403
      %v423 = vunpack.c.h.b16 %v403
      %v424 = vunpack.c.l.b16 %v404
      %v425 = vunpack.c.h.b16 %v404
      %v426 = vunpack.c.l.b16 %v405
      %v427 = vunpack.c.h.b16 %v405
      %v428 = vunpack.c.l.b16 %v406
      %v429 = vunpack.c.h.b16 %v406
      %v430 = vunpack.c.l.b16 %v407
      %v431 = vunpack.c.h.b16 %v407
      %v432 = vpack.c.b16 %v416, %v416
      %v433 = vpack.c.b16 %v417, %v417
      %v434 = vpack.c.b16 %v418, %v418
      %v435 = vpack.c.b16 %v419, %v419
      %v436 = vpack.c.b16 %v420, %v420
      %v437 = vpack.c.b16 %v421, %v421
      %v438 = vpack.c.b16 %v422, %v422
      %v439 = vpack.c.b16 %v423, %v423
      %v440 = vpack.c.b16 %v424, %v424
      %v441 = vpack.c.b16 %v425, %v425
      %v442 = vpack.c.b16 %v426, %v426
      %v443 = vpack.c.b16 %v427, %v427
      %v444 = vpack.c.b16 %v428, %v428
      %v445 = vpack.c.b16 %v429, %v429
      %v446 = vpack.c.b16 %v430, %v430
      %v447 = vpack.c.b16 %v431, %v431
      %464 = vst [vmem:[%s247] sm:$0xf] %v432
      %465 = vst [vmem:[%s247 + $0x4] sm:$0xf] %v433
      %466 = vst [vmem:[%s247 + $0x8] sm:$0xf] %v434
      %467 = vst [vmem:[%s247 + $0xc] sm:$0xf] %v435
      %468 = vst [vmem:[%s247 + $0x10] sm:$0xf] %v436
      %469 = vst [vmem:[%s247 + $0x14] sm:$0xf] %v437
      %470 = vst [vmem:[%s247 + $0x18] sm:$0xf] %v438
      %471 = vst [vmem:[%s247 + $0x1c] sm:$0xf] %v439
      %472 = vst [vmem:[%s247 + $0x20] sm:$0xf] %v440
      %473 = vst [vmem:[%s247 + $0x24] sm:$0xf] %v441
      %474 = vst [vmem:[%s247 + $0x28] sm:$0xf] %v442
      %475 = vst [vmem:[%s247 + $0x2c] sm:$0xf] %v443
      %476 = vst [vmem:[%s247 + $0x30] sm:$0xf] %v444
      %477 = vst [vmem:[%s247 + $0x34] sm:$0xf] %v445
      %478 = vst [vmem:[%s247 + $0x38] sm:$0xf] %v446
      %479 = vst [vmem:[%s247 + $0x3c] sm:$0xf] %v447
      %v480 = vld [vmem:[%s1] sm:$0xf]
      %v481 = vld [vmem:[%s1 + $0x4] sm:$0xf]
      %v482 = vld [vmem:[%s1 + $0x8] sm:$0xf]
      %v483 = vld [vmem:[%s1 + $0xc] sm:$0xf]
      %v484 = vld [vmem:[%s1 + $0x10] sm:$0xf]
      %v485 = vld [vmem:[%s1 + $0x14] sm:$0xf]
      %v486 = vld [vmem:[%s1 + $0x18] sm:$0xf]
      %v487 = vld [vmem:[%s1 + $0x1c] sm:$0xf]
      %v488 = vld [vmem:[%s1 + $0x20] sm:$0xf]
      %v489 = vld [vmem:[%s1 + $0x24] sm:$0xf]
      %v490 = vld [vmem:[%s1 + $0x28] sm:$0xf]
      %v491 = vld [vmem:[%s1 + $0x2c] sm:$0xf]
      %v492 = vld [vmem:[%s1 + $0x30] sm:$0xf]
      %v493 = vld [vmem:[%s1 + $0x34] sm:$0xf]
      %v494 = vld [vmem:[%s1 + $0x38] sm:$0xf]
      %v495 = vld [vmem:[%s1 + $0x3c] sm:$0xf]
      %v496 = vld [vmem:[%s2] sm:$0x1]
      %v498 = vlaneseq
      %v499 = vshrl.u32 %v498, 7
      %v500 = vsub.s32 0, %v499
      %v501 = vrot.slane %v496, %v500
      %v519 = vunpack.c.l.b16 %v480
      %v520 = vunpack.c.l.b16 %v481
      %v521 = vunpack.c.l.b16 %v482
      %v522 = vunpack.c.l.b16 %v483
      %v523 = vunpack.c.l.b16 %v484
      %v524 = vunpack.c.l.b16 %v485
      %v525 = vunpack.c.l.b16 %v486
      %v526 = vunpack.c.l.b16 %v487
      %v527 = vunpack.c.l.b16 %v488
      %v528 = vunpack.c.l.b16 %v489
      %v529 = vunpack.c.l.b16 %v490
      %v530 = vunpack.c.l.b16 %v491
      %v531 = vunpack.c.l.b16 %v492
      %v532 = vunpack.c.l.b16 %v493
      %v533 = vunpack.c.l.b16 %v494
      %v534 = vunpack.c.l.b16 %v495
      %v535 = vpack.c.b16 %v520, %v519
      %v536 = vpack.c.b16 %v522, %v521
      %v537 = vpack.c.b16 %v524, %v523
      %v538 = vpack.c.b16 %v526, %v525
      %v539 = vpack.c.b16 %v528, %v527
      %v540 = vpack.c.b16 %v530, %v529
      %v541 = vpack.c.b16 %v532, %v531
      %v542 = vpack.c.b16 %v534, %v533
      %551 = vmatprep.subr.bf16.mxu0 0
      %552 = vmatpush1.bf16.msra.mxu0 %v535
      %553 = vmatprep.subr.bf16.mxu0 0
      %554 = vmatpush1.bf16.msra.mxu0 %v536
      %555 = vmatprep.subr.bf16.mxu0 0
      %556 = vmatpush1.bf16.msra.mxu0 %v537
      %557 = vmatprep.subr.bf16.mxu0 0
      %558 = vmatpush1.bf16.msra.mxu0 %v538
      %559 = vmatprep.subr.bf16.mxu0 0
      %560 = vmatpush1.bf16.msra.mxu0 %v539
      %561 = vmatprep.subr.bf16.mxu0 0
      %562 = vmatpush1.bf16.msra.mxu0 %v540
      %563 = vmatprep.subr.bf16.mxu0 0
      %564 = vmatpush1.bf16.msra.mxu0 %v541
      %565 = vmatprep.subr.bf16.mxu0 0
      %566 = vmatpush1.bf16.msra.mxu0 %v542
      %567 = vmatprep.subr.bf16.mxu0 0
      %568 = vmatpush1.bf16.msra.mxu0 0
      %569 = vmatprep.subr.bf16.mxu0 0
      %570 = vmatpush1.bf16.msra.mxu0 0
      %571 = vmatprep.subr.bf16.mxu0 0
      %572 = vmatpush1.bf16.msra.mxu0 0
      %573 = vmatprep.subr.bf16.mxu0 0
      %574 = vmatpush1.bf16.msra.mxu0 0
      %575 = vmatprep.subr.bf16.mxu0 0
      %576 = vmatpush1.bf16.msra.mxu0 0
      %577 = vmatprep.subr.bf16.mxu0 0
      %578 = vmatpush1.bf16.msra.mxu0 0
      %579 = vmatprep.subr.bf16.mxu0 0
      %580 = vmatpush1.bf16.msra.mxu0 0
      %581 = vmatprep.subr.bf16.mxu0 0
      %582 = vmatpush1.bf16.msra.mxu0 0
      %583 = vmatprep.mubr.bf16.mxu0 0
      %584 = vmatmul.mubr.bf16.gmra.mrb[0].mxu0 %v400
      %v585 = vpop.f32.mrb[0].mxu0
      %v586 = vadd.f32 %v501, %v585
      %v587 = vpop.f32.mrb[0].mxu0
      %v588 = vpop.f32.mrb[0].mxu0
      %v589 = vadd.f32 %v501, %v588
      %v590 = vpop.f32.mrb[0].mxu0
      %591 = vmatprep.mubr.bf16.mxu0 0
      %592 = vmatmul.mubr.bf16.gmra.mrb[0].mxu0 %v401
      %v593 = vpop.f32.mrb[0].mxu0
      %v594 = vadd.f32 %v501, %v593
      %v595 = vpop.f32.mrb[0].mxu0
      %v596 = vpop.f32.mrb[0].mxu0
      %v597 = vadd.f32 %v501, %v596
      %v598 = vpop.f32.mrb[0].mxu0
      %599 = vmatprep.mubr.bf16.mxu0 0
      %600 = vmatmul.mubr.bf16.gmra.mrb[0].mxu0 %v402
      %v601 = vpop.f32.mrb[0].mxu0
      %v602 = vadd.f32 %v501, %v601
      %v603 = vpop.f32.mrb[0].mxu0
      %v604 = vpop.f32.mrb[0].mxu0
      %v605 = vadd.f32 %v501, %v604
      %v606 = vpop.f32.mrb[0].mxu0
      %607 = vmatprep.mubr.bf16.mxu0 0
      %608 = vmatmul.mubr.bf16.gmra.mrb[0].mxu0 %v403
      %v609 = vpop.f32.mrb[0].mxu0
      %v610 = vadd.f32 %v501, %v609
      %v611 = vpop.f32.mrb[0].mxu0
      %v612 = vpop.f32.mrb[0].mxu0
      %v613 = vadd.f32 %v501, %v612
      %v614 = vpop.f32.mrb[0].mxu0
      %615 = vmatprep.mubr.bf16.mxu0 0
      %616 = vmatmul.mubr.bf16.gmra.mrb[0].mxu0 %v404
      %v617 = vpop.f32.mrb[0].mxu0
      %v618 = vadd.f32 %v501, %v617
      %v619 = vpop.f32.mrb[0].mxu0
      %v620 = vpop.f32.mrb[0].mxu0
      %v621 = vadd.f32 %v501, %v620
      %v622 = vpop.f32.mrb[0].mxu0
      %623 = vmatprep.mubr.bf16.mxu0 0
      %624 = vmatmul.mubr.bf16.gmra.mrb[0].mxu0 %v405
      %v625 = vpop.f32.mrb[0].mxu0
      %v626 = vadd.f32 %v501, %v625
      %v627 = vpop.f32.mrb[0].mxu0
      %v628 = vpop.f32.mrb[0].mxu0
      %v629 = vadd.f32 %v501, %v628
      %v630 = vpop.f32.mrb[0].mxu0
      %631 = vmatprep.mubr.bf16.mxu0 0
      %632 = vmatmul.mubr.bf16.gmra.mrb[0].mxu0 %v406
      %v633 = vpop.f32.mrb[0].mxu0
      %v634 = vadd.f32 %v501, %v633
      %v635 = vpop.f32.mrb[0].mxu0
      %v636 = vpop.f32.mrb[0].mxu0
      %v637 = vadd.f32 %v501, %v636
      %v638 = vpop.f32.mrb[0].mxu0
      %639 = vmatprep.mubr.bf16.mxu0 0
      %640 = vmatmul.mubr.bf16.gmra.mrb[0].mxu0 %v407
      %v641 = vpop.f32.mrb[0].mxu0
      %v642 = vadd.f32 %v501, %v641
      %v643 = vpop.f32.mrb[0].mxu0
      %v644 = vpop.f32.mrb[0].mxu0
      %v645 = vadd.f32 %v501, %v644
      %v646 = vpop.f32.mrb[0].mxu0
      %647 = vdwg.mxu0
      %vm648 = vcmp.gt.f32.partialorder %v586, 0.0
      %vm649 = vcmp.gt.f32.partialorder %v589, 0.0
      %vm650 = vcmp.gt.f32.partialorder %v594, 0.0
      %vm651 = vcmp.gt.f32.partialorder %v597, 0.0
      %vm652 = vcmp.gt.f32.partialorder %v602, 0.0
      %vm653 = vcmp.gt.f32.partialorder %v605, 0.0
      %vm654 = vcmp.gt.f32.partialorder %v610, 0.0
      %vm655 = vcmp.gt.f32.partialorder %v613, 0.0
      %vm656 = vcmp.gt.f32.partialorder %v618, 0.0
      %vm657 = vcmp.gt.f32.partialorder %v621, 0.0
      %vm658 = vcmp.gt.f32.partialorder %v626, 0.0
      %vm659 = vcmp.gt.f32.partialorder %v629, 0.0
      %vm660 = vcmp.gt.f32.partialorder %v634, 0.0
      %vm661 = vcmp.gt.f32.partialorder %v637, 0.0
      %vm662 = vcmp.gt.f32.partialorder %v642, 0.0
      %vm663 = vcmp.gt.f32.partialorder %v645, 0.0
      %v664 = vmul.f32 %v586, 1.442695
      %v665 = vpow.pop %v664
      %v666 = vmul.f32 %v589, 1.442695
      %v667 = vpow.pop %v666
      %v668 = vmul.f32 %v594, 1.442695
      %v669 = vpow.pop %v668
      %v670 = vmul.f32 %v597, 1.442695
      %v671 = vpow.pop %v670
      %v672 = vmul.f32 %v602, 1.442695
      %v673 = vpow.pop %v672
      %v674 = vmul.f32 %v605, 1.442695
      %v675 = vpow.pop %v674
      %v676 = vmul.f32 %v610, 1.442695
      %v677 = vpow.pop %v676
      %v678 = vmul.f32 %v613, 1.442695
      %v679 = vpow.pop %v678
      %v680 = vmul.f32 %v618, 1.442695
      %v681 = vpow.pop %v680
      %v682 = vmul.f32 %v621, 1.442695
      %v683 = vpow.pop %v682
      %v684 = vmul.f32 %v626, 1.442695
      %v685 = vpow.pop %v684
      %v686 = vmul.f32 %v629, 1.442695
      %v687 = vpow.pop %v686
      %v688 = vmul.f32 %v634, 1.442695
      %v689 = vpow.pop %v688
      %v690 = vmul.f32 %v637, 1.442695
      %v691 = vpow.pop %v690
      %v692 = vmul.f32 %v642, 1.442695
      %v693 = vpow.pop %v692
      %v694 = vmul.f32 %v645, 1.442695
      %v695 = vpow.pop %v694
      %v696 = vsub.f32 %v665, 1.0
      %v697 = vsub.f32 %v667, 1.0
      %v698 = vsub.f32 %v669, 1.0
      %v699 = vsub.f32 %v671, 1.0
      %v700 = vsub.f32 %v673, 1.0
      %v701 = vsub.f32 %v675, 1.0
      %v702 = vsub.f32 %v677, 1.0
      %v703 = vsub.f32 %v679, 1.0
      %v704 = vsub.f32 %v681, 1.0
      %v705 = vsub.f32 %v683, 1.0
      %v706 = vsub.f32 %v685, 1.0
      %v707 = vsub.f32 %v687, 1.0
      %v708 = vsub.f32 %v689, 1.0
      %v709 = vsub.f32 %v691, 1.0
      %v710 = vsub.f32 %v693, 1.0
      %v711 = vsub.f32 %v695, 1.0
      %v712 = vsel %vm648, %v586, %v696
      %v713 = vsel %vm649, %v589, %v697
      %v714 = vsel %vm650, %v594, %v698
      %v715 = vsel %vm651, %v597, %v699
      %v716 = vsel %vm652, %v602, %v700
      %v717 = vsel %vm653, %v605, %v701
      %v718 = vsel %vm654, %v610, %v702
      %v719 = vsel %vm655, %v613, %v703
      %v720 = vsel %vm656, %v618, %v704
      %v721 = vsel %vm657, %v621, %v705
      %v722 = vsel %vm658, %v626, %v706
      %v723 = vsel %vm659, %v629, %v707
      %v724 = vsel %vm660, %v634, %v708
      %v725 = vsel %vm661, %v637, %v709
      %v726 = vsel %vm662, %v642, %v710
      %v727 = vsel %vm663, %v645, %v711
      %728 = vst [vmem:[%s253] sm:$0xff] %v712
      %729 = vst [vmem:[%s253 + $0x8] sm:$0xff] %v713
      %730 = vst [vmem:[%s253 + $0x10] sm:$0xff] %v714
      %731 = vst [vmem:[%s253 + $0x18] sm:$0xff] %v715
      %732 = vst [vmem:[%s253 + $0x20] sm:$0xff] %v716
      %733 = vst [vmem:[%s253 + $0x28] sm:$0xff] %v717
      %734 = vst [vmem:[%s253 + $0x30] sm:$0xff] %v718
      %735 = vst [vmem:[%s253 + $0x38] sm:$0xff] %v719
      %736 = vst [vmem:[%s253 + $0x40] sm:$0xff] %v720
      %737 = vst [vmem:[%s253 + $0x48] sm:$0xff] %v721
      %738 = vst [vmem:[%s253 + $0x50] sm:$0xff] %v722
      %739 = vst [vmem:[%s253 + $0x58] sm:$0xff] %v723
      %740 = vst [vmem:[%s253 + $0x60] sm:$0xff] %v724
      %741 = vst [vmem:[%s253 + $0x68] sm:$0xff] %v725
      %742 = vst [vmem:[%s253 + $0x70] sm:$0xff] %v726
      %743 = vst [vmem:[%s253 + $0x78] sm:$0xff] %v727
      %s744 = smul.u32 16, %s17
      %p745 = scmp.lt.s32.totalorder %s744, 31
      %s746 = scalar_select %p745, %s744, 31
      %s747 = smul.addr %s746, 8
      %s748 = scalar_lea.vmem %s3, %s747
      %s749 = smul.u32 16, %s17
      %p750 = scmp.lt.s32.totalorder %s749, 31
      %s751 = scalar_select %p750, %s749, 31
      %s752 = smul.addr %s751, 4
      %s753 = scalar_lea.vmem %s4, %s752
      %s754 = smul.u32 16, %s17
      %p755 = scmp.lt.s32.totalorder %s754, 31
      %s756 = scalar_select %p755, %s754, 31
      %s757 = smul.addr %s756, 8
      %s758 = scalar_lea.vmem %s5, %s757
      // Predicated region
      $region33: #{gatae_forward.10} parent=31 // pred_check
        %p759 = pneg %p103
      $region34: #{gatae_forward.10} parent=31 // pred_check_branch
        %761 = sbr.rel (%p759) target = $region36
      $region35: #{gatae_forward.10} parent=31 // pred_region
        %s762 = smul.u32 16, %s17
      $region36: #{gatae_forward.10} parent=31 // pred_fallthru
        _
      // Predicated region
      $region37: #{gatae_forward.10} parent=31 // pred_check
        %p763 = pneg %p129
      $region38: #{gatae_forward.10} parent=31 // pred_check_branch
        %765 = sbr.rel (%p763) target = $region40
      $region39: #{gatae_forward.10} parent=31 // pred_region
        %s766 = smul.u32 16, %s17
      $region40: #{gatae_forward.10} parent=31 // pred_fallthru
        _
      // Predicated region
      $region41: #{gatae_forward.10} parent=31 // pred_check
        %p767 = pneg %p155
      $region42: #{gatae_forward.10} parent=31 // pred_check_branch
        %769 = sbr.rel (%p767) target = $region44
      $region43: #{gatae_forward.10} parent=31 // pred_region
        %s770 = smul.u32 16, %s17
      $region44: #{gatae_forward.10} parent=31 // pred_fallthru
        _
    $region32: #{gatae_forward.10} parent=5 // pred_fallthru
      _
    %p771 = scmp.le.s32.totalorder 2, %s12
    // Predicated region
    $region45: #{gatae_forward.10} parent=5 // pred_check
      %p772 = pneg %p771
    $region46: #{gatae_forward.10} parent=5 // pred_check_branch
      %774 = sbr.rel (%p772) target = $region48
    $region47: #{gatae_forward.10} parent=5 // pred_region
      %s775 = ssub.s32 %s12, 2
      // Predicated region
      $region49: #{gatae_forward.10} parent=47 // pred_check
        %p776 = pneg %p109
      $region50: #{gatae_forward.10} parent=47 // pred_check_branch
        %778 = sbr.rel (%p776) target = $region52
      $region51: #{gatae_forward.10} parent=47 // pred_region
        %s779 = smul.u32 16, %s18
        %p780 = scmp.lt.s32.totalorder %s779, 31
        %s781 = scalar_select %p780, %s779, 31
        %s782 = smul.addr %s781, 8
        %s783 = scalar_lea.vmem %s3, %s782
      $region52: #{gatae_forward.10} parent=47 // pred_fallthru
        _
      // Predicated region
      $region53: #{gatae_forward.10} parent=47 // pred_check
        %p784 = pneg %p135
      $region54: #{gatae_forward.10} parent=47 // pred_check_branch
        %786 = sbr.rel (%p784) target = $region56
      $region55: #{gatae_forward.10} parent=47 // pred_region
        %s787 = smul.u32 16, %s18
        %p788 = scmp.lt.s32.totalorder %s787, 31
        %s789 = scalar_select %p788, %s787, 31
        %s790 = smul.addr %s789, 4
        %s791 = scalar_lea.vmem %s4, %s790
      $region56: #{gatae_forward.10} parent=47 // pred_fallthru
        _
      // Predicated region
      $region57: #{gatae_forward.10} parent=47 // pred_check
        %p792 = pneg %p161
      $region58: #{gatae_forward.10} parent=47 // pred_check_branch
        %794 = sbr.rel (%p792) target = $region60
      $region59: #{gatae_forward.10} parent=47 // pred_region
        %s795 = smul.u32 16, %s18
        %p796 = scmp.lt.s32.totalorder %s795, 31
        %s797 = scalar_select %p796, %s795, 31
        %s798 = smul.addr %s797, 8
        %s799 = scalar_lea.vmem %s5, %s798
      $region60: #{gatae_forward.10} parent=47 // pred_fallthru
        _
    $region48: #{gatae_forward.10} parent=5 // pred_fallthru
      _
  $region6: #{gatae_forward.10} parent=0 // loop_footer
    %s16 = sadd.s32 1, %s12
  $region7: #{gatae_forward.10} parent=0 // loop_footer_branch
    %11 = sbr.rel target = $region3
  $region8: #{gatae_forward.10} parent=0 // loop_exit
    _

// kernel: gatae_forward.11
$region0: #{gatae_forward.11}
  #allocation0 [shape = 'u32[]', space=smem, size = 0x4, offset = 0x4, fixed_abs, tag = 'smem constant byte address 0x4 - core index']
  #allocation1 [shape = 'u32[144,128]{1,0:T(1,128)}', space=vmem, size = 0x12000, scoped, tag = 'internal scratch']
  %s0 = inlined_call_operand.vmem [shape: bf16[256,128], index: 0, kind: input, shape index: {}, may-alias: {0,1}]
  %s1 = inlined_call_operand.vmem [shape: bf16[256,128], index: 1, kind: input, shape index: {}, may-alias: {0,1}]
  %s2 = inlined_call_operand.hbm [shape: f32[256,256], index: 2, kind: output, shape index: {}]
  %s3 = sld [smem:[#allocation0]]
  $region41: #{gatae_forward.11} parent=0
    _
  %s5 = ssub.s32 1, %s3
  %s6 = scalar_select 0, %s5, %s3
  $region1: #{gatae_forward.11} parent=0
    #allocation2 [shape = 'u8[262144]{0}', space=vmem, size = 0x40000, scoped, tag = 'output window, operand 0']
    #allocation3 [shape = 's32[2]{0}', space=sflag, size = 0x8, scoped, tag = 'scoped memory for gatae_forward.11']
    %7 = vsyncpa [#allocation3], 0
    %s8 = scalar_lea.sflag [#allocation3], 1
    %9 = vsyncpa %s8, 0
    loop: start=0, step=1, limit=4
    $region2: #{gatae_forward.11} parent=1 // loop_pre_header
      _
    $region3: #{gatae_forward.11} parent=1 // loop_header
      %s11 = sphi 0, %s15
      %p12 = scmp.ge.s32.totalorder %s11, 4
      %s18 = sphi 0, %s30
      %s19 = sphi 0, %s26
      %s20 = sphi 0, %s18
      %s21 = sphi 0, %s19
      %s22 = sphi 0, %s20
      %s23 = sphi 0, %s21
      %s33 = sphi 0, %s35
      %s36 = sphi 0, %s33
      %s37 = sphi 0, %s36
      %s53 = sphi 0, %s37
      %s59 = sphi 0, %s61
      %s62 = sphi 0, %s59
      %s63 = sphi 0, %s62
      %s79 = sphi 0, %s63
      %s87 = sphi 0, %s89
      %s90 = sphi 0, %s87
      %s91 = sphi 0, %s90
      %s107 = sphi 0, %s91
    $region4: #{gatae_forward.11} parent=1 // loop_header_branch
      %14 = sbr.rel (%p12) target = $region8
    $region5: #{gatae_forward.11} parent=1 // loop_body
      %s16 = ssub.s32 %s11, 1
      %s17 = ssub.s32 %s11, 2
      %s24 = sadd.s32 1, %s19
      %p25 = scmp.ge.s32.totalorder %s24, 1
      %s26 = scalar_select %p25, 0, %s24
      %s27 = sadd.s32 1, %s18
      %s28 = scalar_select %p25, %s27, %s18
      %p29 = scmp.ge.s32.totalorder %s28, 2
      %s30 = scalar_select %p29, 0, %s28
      %s31 = ssub.s32 %s18, %s30
      %p32 = scmp.eq.s32.totalorder %s31, 0
      %s34 = sadd.s32 %s33, 1
      %s35 = scalar_select %p32, %s33, %s34
      %p38 = pneg %p32
      %p39 = scmp.eq.s32.totalorder %s11, 1
      %p40 = por %p38, %p39
      %p41 = scmp.ne.s32.totalorder %s33, %s36
      %p42 = scmp.eq.s32.totalorder %s11, 0
      %p43 = por %p41, %p42
      %p44 = scmp.ne.s32.totalorder %s33, %s36
      %p45 = scmp.eq.s32.totalorder %s16, 1
      %p46 = por %p44, %p45
      %p47 = scmp.ne.s32.totalorder %s36, %s37
      %p48 = scmp.eq.s32.totalorder %s16, 0
      %p49 = por %p47, %p48
      %p50 = scmp.ne.s32.totalorder %s36, %s37
      %p51 = scmp.eq.s32.totalorder %s17, 1
      %p52 = por %p50, %p51
      %p54 = scmp.ne.s32.totalorder %s37, %s53
      %p55 = scmp.eq.s32.totalorder %s17, 0
      %p56 = por %p54, %p55
      %s57 = ssub.s32 %s19, %s26
      %p58 = scmp.eq.s32.totalorder %s57, 0
      %s60 = sadd.s32 %s59, 1
      %s61 = scalar_select %p58, %s59, %s60
      %p64 = pneg %p58
      %p65 = scmp.eq.s32.totalorder %s11, 1
      %p66 = por %p64, %p65
      %p67 = scmp.ne.s32.totalorder %s59, %s62
      %p68 = scmp.eq.s32.totalorder %s11, 0
      %p69 = por %p67, %p68
      %p70 = scmp.ne.s32.totalorder %s59, %s62
      %p71 = scmp.eq.s32.totalorder %s16, 1
      %p72 = por %p70, %p71
      %p73 = scmp.ne.s32.totalorder %s62, %s63
      %p74 = scmp.eq.s32.totalorder %s16, 0
      %p75 = por %p73, %p74
      %p76 = scmp.ne.s32.totalorder %s62, %s63
      %p77 = scmp.eq.s32.totalorder %s17, 1
      %p78 = por %p76, %p77
      %p80 = scmp.ne.s32.totalorder %s63, %s79
      %p81 = scmp.eq.s32.totalorder %s17, 0
      %p82 = por %p80, %p81
      %s83 = ssub.s32 %s18, %s30
      %s84 = ssub.s32 %s19, %s26
      %s85 = sor.u32 %s83, %s84
      %p86 = scmp.eq.s32.totalorder %s85, 0
      %s88 = sadd.s32 %s87, 1
      %s89 = scalar_select %p86, %s87, %s88
      %p92 = pneg %p86
      %p93 = scmp.eq.s32.totalorder %s11, 1
      %p94 = por %p92, %p93
      %p95 = scmp.ne.s32.totalorder %s87, %s90
      %p96 = scmp.eq.s32.totalorder %s11, 0
      %p97 = por %p95, %p96
      %p98 = scmp.ne.s32.totalorder %s87, %s90
      %p99 = scmp.eq.s32.totalorder %s16, 1
      %p100 = por %p98, %p99
      %p101 = scmp.ne.s32.totalorder %s90, %s91
      %p102 = scmp.eq.s32.totalorder %s16, 0
      %p103 = por %p101, %p102
      %p104 = scmp.ne.s32.totalorder %s90, %s91
      %p105 = scmp.eq.s32.totalorder %s17, 1
      %p106 = por %p104, %p105
      %p108 = scmp.ne.s32.totalorder %s91, %s107
      %p109 = scmp.eq.s32.totalorder %s17, 0
      %p110 = por %p108, %p109
      %p111 = scmp.le.s32.totalorder 1, %s11
      %p112 = scmp.lt.s32.totalorder %s11, 3
      %p113 = pnand %p111, %p112
      %p114 = pneg %p113
      // Predicated region
      $region9: #{gatae_forward.11} parent=5 // pred_check
        _
      $region10: #{gatae_forward.11} parent=5 // pred_check_branch
        %116 = sbr.rel (%p113) target = $region12
      $region11: #{gatae_forward.11} parent=5 // pred_region
        %s117 = ssub.s32 %s11, 1
        // Predicated region
        $region13: #{gatae_forward.11} parent=11 // pred_check
          %p118 = pneg %p75
        $region14: #{gatae_forward.11} parent=11 // pred_check_branch
          %120 = sbr.rel (%p118) target = $region16
        $region15: #{gatae_forward.11} parent=11 // pred_region
          %s121 = smul.u32 32, %s21
          %p122 = scmp.lt.s32.totalorder %s121, 31
          %s123 = scalar_select %p122, %s121, 31
          %s124 = smul.addr %s123, 4
          %s125 = scalar_lea.vmem %s1, %s124
          %s126 = smul.u32 32, %s21
        $region16: #{gatae_forward.11} parent=11 // pred_fallthru
          _
      $region12: #{gatae_forward.11} parent=5 // pred_fallthru
        _
      %p127 = scmp.lt.s32.totalorder %s11, 2
      // Predicated region
      $region17: #{gatae_forward.11} parent=5 // pred_check
        %p128 = pneg %p127
      $region18: #{gatae_forward.11} parent=5 // pred_check_branch
        %130 = sbr.rel (%p128) target = $region20
      $region19: #{gatae_forward.11} parent=5 // pred_region
        // Predicated region
        $region21: #{gatae_forward.11} parent=19 // pred_check
          %p131 = pneg %p43
        $region22: #{gatae_forward.11} parent=19 // pred_check_branch
          %133 = sbr.rel (%p131) target = $region24
        $region23: #{gatae_forward.11} parent=19 // pred_region
          %s134 = smul.u32 16, %s18
          %p135 = scmp.lt.s32.totalorder %s134, 31
          %s136 = scalar_select %p135, %s134, 31
          %s137 = smul.addr %s136, 4
          %s138 = scalar_lea.vmem %s0, %s137
          %s139 = smul.u32 16, %s18
        $region24: #{gatae_forward.11} parent=19 // pred_fallthru
          _
      $region20: #{gatae_forward.11} parent=5 // pred_fallthru
        _
      %p140 = scmp.le.s32.totalorder 1, %s11
      %p141 = scmp.lt.s32.totalorder %s11, 3
      %p142 = pnand %p140, %p141
      %p143 = pneg %p142
      // Predicated region
      $region25: #{gatae_forward.11} parent=5 // pred_check
        _
      $region26: #{gatae_forward.11} parent=5 // pred_check_branch
        %145 = sbr.rel (%p142) target = $region28
      $region27: #{gatae_forward.11} parent=5 // pred_region
        %s146 = ssub.s32 %s11, 1
        %s147 = smul.u32 16, %s20
        %p148 = scmp.lt.s32.totalorder %s147, 31
        %s149 = scalar_select %p148, %s147, 31
        %s150 = smul.addr %s149, 4
        %s151 = scalar_lea.vmem %s0, %s150
        %p152 = pneg %p49
        %p153 = pneg %p46
        %s154 = smul.u32 32, %s21
        %p155 = scmp.lt.s32.totalorder %s154, 31
        %s156 = scalar_select %p155, %s154, 31
        %s157 = smul.addr %s156, 4
        %s158 = scalar_lea.vmem %s1, %s157
        %p159 = pneg %p75
        %p160 = pneg %p72
        %p161 = pneg %p103
        %p162 = pneg %p100
        %s163 = sand.u32 %s90, 1
        %s164 = scalar_lea.sflag [#allocation3], %s163
        %s165 = sand.u32 %s90, 1
        %s166 = smul.addr %s165, 256
        %s167 = scalar_lea.vmem [#allocation2], %s166
        %s168 = smul.u32 16, %s20
        %p169 = scmp.lt.s32.totalorder %s168, 31
        %s170 = scalar_select %p169, %s168, 31
        %s171 = smul.addr %s170, 4
        %s172 = scalar_lea.vmem %s0, %s171
        %s173 = smul.u32 16, %s20
        %s174 = smul.u32 32, %s21
        %p175 = scmp.lt.s32.totalorder %s174, 31
        %s176 = scalar_select %p175, %s174, 31
        %s177 = smul.addr %s176, 4
        %s178 = scalar_lea.vmem %s1, %s177
        %s179 = smul.u32 32, %s21
        %s180 = smul.u32 16, %s20
        %s181 = smul.u32 2, %s21
        %v183 = vld [vmem:[%s172] sm:$0xf]
        %v184 = vld [vmem:[%s172 + $0x4] sm:$0xf]
        %v185 = vld [vmem:[%s172 + $0x8] sm:$0xf]
        %v186 = vld [vmem:[%s172 + $0xc] sm:$0xf]
        %v187 = vld [vmem:[%s172 + $0x10] sm:$0xf]
        %v188 = vld [vmem:[%s172 + $0x14] sm:$0xf]
        %v189 = vld [vmem:[%s172 + $0x18] sm:$0xf]
        %v190 = vld [vmem:[%s172 + $0x1c] sm:$0xf]
        %v191 = vld [vmem:[%s172 + $0x20] sm:$0xf]
        %v192 = vld [vmem:[%s172 + $0x24] sm:$0xf]
        %v193 = vld [vmem:[%s172 + $0x28] sm:$0xf]
        %v194 = vld [vmem:[%s172 + $0x2c] sm:$0xf]
        %v195 = vld [vmem:[%s172 + $0x30] sm:$0xf]
        %v196 = vld [vmem:[%s172 + $0x34] sm:$0xf]
        %v197 = vld [vmem:[%s172 + $0x38] sm:$0xf]
        %v198 = vld [vmem:[%s172 + $0x3c] sm:$0xf]
        %v199 = vld [vmem:[%s178] sm:$0xf]
        %v200 = vld [vmem:[%s178 + $0x4] sm:$0xf]
        %v201 = vld [vmem:[%s178 + $0x8] sm:$0xf]
        %v202 = vld [vmem:[%s178 + $0xc] sm:$0xf]
        %v203 = vld [vmem:[%s178 + $0x10] sm:$0xf]
        %v204 = vld [vmem:[%s178 + $0x14] sm:$0xf]
        %v205 = vld [vmem:[%s178 + $0x18] sm:$0xf]
        %v206 = vld [vmem:[%s178 + $0x1c] sm:$0xf]
        %v207 = vld [vmem:[%s178 + $0x20] sm:$0xf]
        %v208 = vld [vmem:[%s178 + $0x24] sm:$0xf]
        %v209 = vld [vmem:[%s178 + $0x28] sm:$0xf]
        %v210 = vld [vmem:[%s178 + $0x2c] sm:$0xf]
        %v211 = vld [vmem:[%s178 + $0x30] sm:$0xf]
        %v212 = vld [vmem:[%s178 + $0x34] sm:$0xf]
        %v213 = vld [vmem:[%s178 + $0x38] sm:$0xf]
        %v214 = vld [vmem:[%s178 + $0x3c] sm:$0xf]
        %v215 = vld [vmem:[%s178 + $0x40] sm:$0xf]
        %v216 = vld [vmem:[%s178 + $0x44] sm:$0xf]
        %v217 = vld [vmem:[%s178 + $0x48] sm:$0xf]
        %v218 = vld [vmem:[%s178 + $0x4c] sm:$0xf]
        %v219 = vld [vmem:[%s178 + $0x50] sm:$0xf]
        %v220 = vld [vmem:[%s178 + $0x54] sm:$0xf]
        %v221 = vld [vmem:[%s178 + $0x58] sm:$0xf]
        %v222 = vld [vmem:[%s178 + $0x5c] sm:$0xf]
        %v223 = vld [vmem:[%s178 + $0x60] sm:$0xf]
        %v224 = vld [vmem:[%s178 + $0x64] sm:$0xf]
        %v225 = vld [vmem:[%s178 + $0x68] sm:$0xf]
        %v226 = vld [vmem:[%s178 + $0x6c] sm:$0xf]
        %v227 = vld [vmem:[%s178 + $0x70] sm:$0xf]
        %v228 = vld [vmem:[%s178 + $0x74] sm:$0xf]
        %v229 = vld [vmem:[%s178 + $0x78] sm:$0xf]
        %v230 = vld [vmem:[%s178 + $0x7c] sm:$0xf]
        %v247 = vunpack.c.l.b16 %v183
        %v248 = vunpack.c.l.b16 %v184
        %v249 = vunpack.c.l.b16 %v185
        %v250 = vunpack.c.l.b16 %v186
        %v251 = vunpack.c.l.b16 %v187
        %v252 = vunpack.c.l.b16 %v188
        %v253 = vunpack.c.l.b16 %v189
        %v254 = vunpack.c.l.b16 %v190
        %v255 = vunpack.c.l.b16 %v191
        %v256 = vunpack.c.l.b16 %v192
        %v257 = vunpack.c.l.b16 %v193
        %v258 = vunpack.c.l.b16 %v194
        %v259 = vunpack.c.l.b16 %v195
        %v260 = vunpack.c.l.b16 %v196
        %v261 = vunpack.c.l.b16 %v197
        %v262 = vunpack.c.l.b16 %v198
        %v263 = vpack.c.b16 %v248, %v247
        %v264 = vpack.c.b16 %v250, %v249
        %v265 = vpack.c.b16 %v252, %v251
        %v266 = vpack.c.b16 %v254, %v253
        %v267 = vpack.c.b16 %v256, %v255
        %v268 = vpack.c.b16 %v258, %v257
        %v269 = vpack.c.b16 %v260, %v259
        %v270 = vpack.c.b16 %v262, %v261
        %v311 = vunpack.c.l.b16 %v199
        %v312 = vunpack.c.l.b16 %v200
        %v313 = vunpack.c.l.b16 %v201
        %v314 = vunpack.c.l.b16 %v202
        %v315 = vunpack.c.l.b16 %v203
        %v316 = vunpack.c.l.b16 %v204
        %v317 = vunpack.c.l.b16 %v205
        %v318 = vunpack.c.l.b16 %v206
        %v319 = vunpack.c.l.b16 %v207
        %v320 = vunpack.c.l.b16 %v208
        %v321 = vunpack.c.l.b16 %v209
        %v322 = vunpack.c.l.b16 %v210
        %v323 = vunpack.c.l.b16 %v211
        %v324 = vunpack.c.l.b16 %v212
        %v325 = vunpack.c.l.b16 %v213
        %v326 = vunpack.c.l.b16 %v214
        %v327 = vunpack.c.l.b16 %v215
        %v328 = vunpack.c.l.b16 %v216
        %v329 = vunpack.c.l.b16 %v217
        %v330 = vunpack.c.l.b16 %v218
        %v331 = vunpack.c.l.b16 %v219
        %v332 = vunpack.c.l.b16 %v220
        %v333 = vunpack.c.l.b16 %v221
        %v334 = vunpack.c.l.b16 %v222
        %v335 = vunpack.c.l.b16 %v223
        %v336 = vunpack.c.l.b16 %v224
        %v337 = vunpack.c.l.b16 %v225
        %v338 = vunpack.c.l.b16 %v226
        %v339 = vunpack.c.l.b16 %v227
        %v340 = vunpack.c.l.b16 %v228
        %v341 = vunpack.c.l.b16 %v229
        %v342 = vunpack.c.l.b16 %v230
        %v343 = vpack.c.b16 %v312, %v311
        %v344 = vpack.c.b16 %v314, %v313
        %v345 = vpack.c.b16 %v316, %v315
        %v346 = vpack.c.b16 %v318, %v317
        %v347 = vpack.c.b16 %v320, %v319
        %v348 = vpack.c.b16 %v322, %v321
        %v349 = vpack.c.b16 %v324, %v323
        %v350 = vpack.c.b16 %v326, %v325
        %v351 = vpack.c.b16 %v328, %v327
        %v352 = vpack.c.b16 %v330, %v329
        %v353 = vpack.c.b16 %v332, %v331
        %v354 = vpack.c.b16 %v334, %v333
        %v355 = vpack.c.b16 %v336, %v335
        %v356 = vpack.c.b16 %v338, %v337
        %v357 = vpack.c.b16 %v340, %v339
        %v358 = vpack.c.b16 %v342, %v341
        %375 = vmatprep.subr.bf16.mxu0 0
        %376 = vmatpush1.bf16.xpose.msra.mxu0 %v343
        %377 = vmatprep.subr.bf16.mxu0 0
        %378 = vmatpush1.bf16.xpose.msra.mxu0 %v344
        %379 = vmatprep.subr.bf16.mxu0 0
        %380 = vmatpush1.bf16.xpose.msra.mxu0 %v345
        %381 = vmatprep.subr.bf16.mxu0 0
        %382 = vmatpush1.bf16.xpose.msra.mxu0 %v346
        %383 = vmatprep.subr.bf16.mxu0 0
        %384 = vmatpush1.bf16.xpose.msra.mxu0 %v347
        %385 = vmatprep.subr.bf16.mxu0 0
        %386 = vmatpush1.bf16.xpose.msra.mxu0 %v348
        %387 = vmatprep.subr.bf16.mxu0 0
        %388 = vmatpush1.bf16.xpose.msra.mxu0 %v349
        %389 = vmatprep.subr.bf16.mxu0 0
        %390 = vmatpush1.bf16.xpose.msra.mxu0 %v350
        %391 = vmatprep.subr.bf16.mxu0 0
        %392 = vmatpush1.bf16.xpose.msra.mxu0 %v351
        %393 = vmatprep.subr.bf16.mxu0 0
        %394 = vmatpush1.bf16.xpose.msra.mxu0 %v352
        %395 = vmatprep.subr.bf16.mxu0 0
        %396 = vmatpush1.bf16.xpose.msra.mxu0 %v353
        %397 = vmatprep.subr.bf16.mxu0 0
        %398 = vmatpush1.bf16.xpose.msra.mxu0 %v354
        %399 = vmatprep.subr.bf16.mxu0 0
        %400 = vmatpush1.bf16.xpose.msra.mxu0 %v355
        %401 = vmatprep.subr.bf16.mxu0 0
        %402 = vmatpush1.bf16.xpose.msra.mxu0 %v356
        %403 = vmatprep.subr.bf16.mxu0 0
        %404 = vmatpush1.bf16.xpose.msra.mxu0 %v357
        %405 = vmatprep.subr.bf16.mxu0 0
        %406 = vmatpush1.bf16.xpose.msra.mxu0 %v358
        %407 = vmatprep.mubr.bf16.mxu0 0
        %408 = vmatmul.mubr.bf16.gmra.mrb[0].mxu0 %v263
        %v409 = vpop.f32.mrb[0].mxu0
        %v410 = vadd.f32 0.0, %v409
        %v411 = vpop.f32.mrb[0].mxu0
        %v412 = vadd.f32 0.0, %v411
        %v413 = vpop.f32.mrb[0].mxu0
        %v414 = vadd.f32 0.0, %v413
        %v415 = vpop.f32.mrb[0].mxu0
        %v416 = vadd.f32 0.0, %v415
        %417 = vmatprep.mubr.bf16.mxu0 0
        %418 = vmatmul.mubr.bf16.gmra.mrb[0].mxu0 %v264
        %v419 = vpop.f32.mrb[0].mxu0
        %v420 = vadd.f32 0.0, %v419
        %v421 = vpop.f32.mrb[0].mxu0
        %v422 = vadd.f32 0.0, %v421
        %v423 = vpop.f32.mrb[0].mxu0
        %v424 = vadd.f32 0.0, %v423
        %v425 = vpop.f32.mrb[0].mxu0
        %v426 = vadd.f32 0.0, %v425
        %427 = vmatprep.mubr.bf16.mxu0 0
        %428 = vmatmul.mubr.bf16.gmra.mrb[0].mxu0 %v265
        %v429 = vpop.f32.mrb[0].mxu0
        %v430 = vadd.f32 0.0, %v429
        %v431 = vpop.f32.mrb[0].mxu0
        %v432 = vadd.f32 0.0, %v431
        %v433 = vpop.f32.mrb[0].mxu0
        %v434 = vadd.f32 0.0, %v433
        %v435 = vpop.f32.mrb[0].mxu0
        %v436 = vadd.f32 0.0, %v435
        %437 = vmatprep.mubr.bf16.mxu0 0
        %438 = vmatmul.mubr.bf16.gmra.mrb[0].mxu0 %v266
        %v439 = vpop.f32.mrb[0].mxu0
        %v440 = vadd.f32 0.0, %v439
        %v441 = vpop.f32.mrb[0].mxu0
        %v442 = vadd.f32 0.0, %v441
        %v443 = vpop.f32.mrb[0].mxu0
        %v444 = vadd.f32 0.0, %v443
        %v445 = vpop.f32.mrb[0].mxu0
        %v446 = vadd.f32 0.0, %v445
        %447 = vmatprep.mubr.bf16.mxu0 0
        %448 = vmatmul.mubr.bf16.gmra.mrb[0].mxu0 %v267
        %v449 = vpop.f32.mrb[0].mxu0
        %v450 = vadd.f32 0.0, %v449
        %v451 = vpop.f32.mrb[0].mxu0
        %v452 = vadd.f32 0.0, %v451
        %v453 = vpop.f32.mrb[0].mxu0
        %v454 = vadd.f32 0.0, %v453
        %v455 = vpop.f32.mrb[0].mxu0
        %v456 = vadd.f32 0.0, %v455
        %457 = vmatprep.mubr.bf16.mxu0 0
        %458 = vmatmul.mubr.bf16.gmra.mrb[0].mxu0 %v268
        %v459 = vpop.f32.mrb[0].mxu0
        %v460 = vadd.f32 0.0, %v459
        %v461 = vpop.f32.mrb[0].mxu0
        %v462 = vadd.f32 0.0, %v461
        %v463 = vpop.f32.mrb[0].mxu0
        %v464 = vadd.f32 0.0, %v463
        %v465 = vpop.f32.mrb[0].mxu0
        %v466 = vadd.f32 0.0, %v465
        %467 = vmatprep.mubr.bf16.mxu0 0
        %468 = vmatmul.mubr.bf16.gmra.mrb[0].mxu0 %v269
        %v469 = vpop.f32.mrb[0].mxu0
        %v470 = vadd.f32 0.0, %v469
        %v471 = vpop.f32.mrb[0].mxu0
        %v472 = vadd.f32 0.0, %v471
        %v473 = vpop.f32.mrb[0].mxu0
        %v474 = vadd.f32 0.0, %v473
        %v475 = vpop.f32.mrb[0].mxu0
        %v476 = vadd.f32 0.0, %v475
        %477 = vmatprep.mubr.bf16.mxu0 0
        %478 = vmatmul.mubr.bf16.gmra.mrb[0].mxu0 %v270
        %v479 = vpop.f32.mrb[0].mxu0
        %v480 = vadd.f32 0.0, %v479
        %v481 = vpop.f32.mrb[0].mxu0
        %v482 = vadd.f32 0.0, %v481
        %v483 = vpop.f32.mrb[0].mxu0
        %v484 = vadd.f32 0.0, %v483
        %v485 = vpop.f32.mrb[0].mxu0
        %v486 = vadd.f32 0.0, %v485
        %487 = vdwg.mxu0
        %v488 = vmul.f32 %v410, 0.5
        %v489 = vmul.f32 %v412, 0.5
        %v490 = vmul.f32 %v414, 0.5
        %v491 = vmul.f32 %v416, 0.5
        %v492 = vmul.f32 %v420, 0.5
        %v493 = vmul.f32 %v422, 0.5
        %v494 = vmul.f32 %v424, 0.5
        %v495 = vmul.f32 %v426, 0.5
        %v496 = vmul.f32 %v430, 0.5
        %v497 = vmul.f32 %v432, 0.5
        %v498 = vmul.f32 %v434, 0.5
        %v499 = vmul.f32 %v436, 0.5
        %v500 = vmul.f32 %v440, 0.5
        %v501 = vmul.f32 %v442, 0.5
        %v502 = vmul.f32 %v444, 0.5
        %v503 = vmul.f32 %v446, 0.5
        %v504 = vmul.f32 %v450, 0.5
        %v505 = vmul.f32 %v452, 0.5
        %v506 = vmul.f32 %v454, 0.5
        %v507 = vmul.f32 %v456, 0.5
        %v508 = vmul.f32 %v460, 0.5
        %v509 = vmul.f32 %v462, 0.5
        %v510 = vmul.f32 %v464, 0.5
        %v511 = vmul.f32 %v466, 0.5
        %v512 = vmul.f32 %v470, 0.5
        %v513 = vmul.f32 %v472, 0.5
        %v514 = vmul.f32 %v474, 0.5
        %v515 = vmul.f32 %v476, 0.5
        %v516 = vmul.f32 %v480, 0.5
        %v517 = vmul.f32 %v482, 0.5
        %v518 = vmul.f32 %v484, 0.5
        %v519 = vmul.f32 %v486, 0.5
        %v520 = vtanh.pop %v488
        %v521 = vtanh.pop %v489
        %v522 = vtanh.pop %v490
        %v523 = vtanh.pop %v491
        %v524 = vtanh.pop %v492
        %v525 = vtanh.pop %v493
        %v526 = vtanh.pop %v494
        %v527 = vtanh.pop %v495
        %v528 = vtanh.pop %v496
        %v529 = vtanh.pop %v497
        %v530 = vtanh.pop %v498
        %v531 = vtanh.pop %v499
        %v532 = vtanh.pop %v500
        %v533 = vtanh.pop %v501
        %v534 = vtanh.pop %v502
        %v535 = vtanh.pop %v503
        %v536 = vtanh.pop %v504
        %v537 = vtanh.pop %v505
        %v538 = vtanh.pop %v506
        %v539 = vtanh.pop %v507
        %v540 = vtanh.pop %v508
        %v541 = vtanh.pop %v509
        %v542 = vtanh.pop %v510
        %v543 = vtanh.pop %v511
        %v544 = vtanh.pop %v512
        %v545 = vtanh.pop %v513
        %v546 = vtanh.pop %v514
        %v547 = vtanh.pop %v515
        %v548 = vtanh.pop %v516
        %v549 = vtanh.pop %v517
        %v550 = vtanh.pop %v518
        %v551 = vtanh.pop %v519
        %v552 = vmul.f32 %v520, 0.5
        %v553 = vmul.f32 %v521, 0.5
        %v554 = vmul.f32 %v522, 0.5
        %v555 = vmul.f32 %v523, 0.5
        %v556 = vmul.f32 %v524, 0.5
        %v557 = vmul.f32 %v525, 0.5
        %v558 = vmul.f32 %v526, 0.5
        %v559 = vmul.f32 %v527, 0.5
        %v560 = vmul.f32 %v528, 0.5
        %v561 = vmul.f32 %v529, 0.5
        %v562 = vmul.f32 %v530, 0.5
        %v563 = vmul.f32 %v531, 0.5
        %v564 = vmul.f32 %v532, 0.5
        %v565 = vmul.f32 %v533, 0.5
        %v566 = vmul.f32 %v534, 0.5
        %v567 = vmul.f32 %v535, 0.5
        %v568 = vmul.f32 %v536, 0.5
        %v569 = vmul.f32 %v537, 0.5
        %v570 = vmul.f32 %v538, 0.5
        %v571 = vmul.f32 %v539, 0.5
        %v572 = vmul.f32 %v540, 0.5
        %v573 = vmul.f32 %v541, 0.5
        %v574 = vmul.f32 %v542, 0.5
        %v575 = vmul.f32 %v543, 0.5
        %v576 = vmul.f32 %v544, 0.5
        %v577 = vmul.f32 %v545, 0.5
        %v578 = vmul.f32 %v546, 0.5
        %v579 = vmul.f32 %v547, 0.5
        %v580 = vmul.f32 %v548, 0.5
        %v581 = vmul.f32 %v549, 0.5
        %v582 = vmul.f32 %v550, 0.5
        %v583 = vmul.f32 %v551, 0.5
        %v584 = vadd.f32 %v552, 0.5
        %v585 = vadd.f32 %v553, 0.5
        %v586 = vadd.f32 %v554, 0.5
        %v587 = vadd.f32 %v555, 0.5
        %v588 = vadd.f32 %v556, 0.5
        %v589 = vadd.f32 %v557, 0.5
        %v590 = vadd.f32 %v558, 0.5
        %v591 = vadd.f32 %v559, 0.5
        %v592 = vadd.f32 %v560, 0.5
        %v593 = vadd.f32 %v561, 0.5
        %v594 = vadd.f32 %v562, 0.5
        %v595 = vadd.f32 %v563, 0.5
        %v596 = vadd.f32 %v564, 0.5
        %v597 = vadd.f32 %v565, 0.5
        %v598 = vadd.f32 %v566, 0.5
        %v599 = vadd.f32 %v567, 0.5
        %v600 = vadd.f32 %v568, 0.5
        %v601 = vadd.f32 %v569, 0.5
        %v602 = vadd.f32 %v570, 0.5
        %v603 = vadd.f32 %v571, 0.5
        %v604 = vadd.f32 %v572, 0.5
        %v605 = vadd.f32 %v573, 0.5
        %v606 = vadd.f32 %v574, 0.5
        %v607 = vadd.f32 %v575, 0.5
        %v608 = vadd.f32 %v576, 0.5
        %v609 = vadd.f32 %v577, 0.5
        %v610 = vadd.f32 %v578, 0.5
        %v611 = vadd.f32 %v579, 0.5
        %v612 = vadd.f32 %v580, 0.5
        %v613 = vadd.f32 %v581, 0.5
        %v614 = vadd.f32 %v582, 0.5
        %v615 = vadd.f32 %v583, 0.5
        %616 = vst [vmem:[%s167] sm:$0xff] %v584
        %617 = vst [vmem:[%s167 + $0x8] sm:$0xff] %v585
        %618 = vst [vmem:[%s167 + $0x10] sm:$0xff] %v586
        %619 = vst [vmem:[%s167 + $0x18] sm:$0xff] %v587
        %620 = vst [vmem:[%s167 + $0x20] sm:$0xff] %v588
        %621 = vst [vmem:[%s167 + $0x28] sm:$0xff] %v589
        %622 = vst [vmem:[%s167 + $0x30] sm:$0xff] %v590
        %623 = vst [vmem:[%s167 + $0x38] sm:$0xff] %v591
        %624 = vst [vmem:[%s167 + $0x40] sm:$0xff] %v592
        %625 = vst [vmem:[%s167 + $0x48] sm:$0xff] %v593
        %626 = vst [vmem:[%s167 + $0x50] sm:$0xff] %v594
        %627 = vst [vmem:[%s167 + $0x58] sm:$0xff] %v595
        %628 = vst [vmem:[%s167 + $0x60] sm:$0xff] %v596
        %629 = vst [vmem:[%s167 + $0x68] sm:$0xff] %v597
        %630 = vst [vmem:[%s167 + $0x70] sm:$0xff] %v598
        %631 = vst [vmem:[%s167 + $0x78] sm:$0xff] %v599
        %632 = vst [vmem:[%s167 + $0x80] sm:$0xff] %v600
        %633 = vst [vmem:[%s167 + $0x88] sm:$0xff] %v601
        %634 = vst [vmem:[%s167 + $0x90] sm:$0xff] %v602
        %635 = vst [vmem:[%s167 + $0x98] sm:$0xff] %v603
        %636 = vst [vmem:[%s167 + $0xa0] sm:$0xff] %v604
        %637 = vst [vmem:[%s167 + $0xa8] sm:$0xff] %v605
        %638 = vst [vmem:[%s167 + $0xb0] sm:$0xff] %v606
        %639 = vst [vmem:[%s167 + $0xb8] sm:$0xff] %v607
        %640 = vst [vmem:[%s167 + $0xc0] sm:$0xff] %v608
        %641 = vst [vmem:[%s167 + $0xc8] sm:$0xff] %v609
        %642 = vst [vmem:[%s167 + $0xd0] sm:$0xff] %v610
        %643 = vst [vmem:[%s167 + $0xd8] sm:$0xff] %v611
        %644 = vst [vmem:[%s167 + $0xe0] sm:$0xff] %v612
        %645 = vst [vmem:[%s167 + $0xe8] sm:$0xff] %v613
        %646 = vst [vmem:[%s167 + $0xf0] sm:$0xff] %v614
        %647 = vst [vmem:[%s167 + $0xf8] sm:$0xff] %v615
        %s648 = sand.u32 %s90, 1
        %s649 = scalar_lea.sflag [#allocation3], %s648
        %s650 = sand.u32 %s90, 1
        %s651 = smul.addr %s650, 256
        %s652 = scalar_lea.vmem [#allocation2], %s651
        // Predicated region
        $region29: #{gatae_forward.11} parent=27 // pred_check
          %p653 = pneg %p100
        $region30: #{gatae_forward.11} parent=27 // pred_check_branch
          %655 = sbr.rel (%p653) target = $region32
        $region31: #{gatae_forward.11} parent=27 // pred_region
          %s656 = smul.u32 16, %s20
          %s657 = smul.u32 2, %s21
          %s659 = ssub.s32 4096, 4096
          %660 = vsyncadd %s649, %s659
          %s661 = smul.addr %s656, 2
          %s662 = sadd.s32 %s657, %s661
          %s663 = smul.addr %s662, 128
          %s664 = scalar_lea.hbm %s2, %s663
          %s665 = sshll.u32 %s652, 4
          %s666 = int_to_ptr.vmem [resolvable:$true] %s665
          %671 = dma.vmem_to_hbm [thread:$0]  %s666, 4096, %s664, %s649, 256, 256, 16
        $region32: #{gatae_forward.11} parent=27 // pred_fallthru
          _
      $region28: #{gatae_forward.11} parent=5 // pred_fallthru
        _
      %p672 = scmp.le.s32.totalorder 2, %s11
      // Predicated region
      $region33: #{gatae_forward.11} parent=5 // pred_check
        %p673 = pneg %p672
      $region34: #{gatae_forward.11} parent=5 // pred_check_branch
        %675 = sbr.rel (%p673) target = $region36
      $region35: #{gatae_forward.11} parent=5 // pred_region
        %s676 = ssub.s32 %s11, 2
        // Predicated region
        $region37: #{gatae_forward.11} parent=35 // pred_check
          %p677 = pneg %p106
        $region38: #{gatae_forward.11} parent=35 // pred_check_branch
          %679 = sbr.rel (%p677) target = $region40
        $region39: #{gatae_forward.11} parent=35 // pred_region
          %s680 = sand.u32 %s91, 1
          %s681 = scalar_lea.sflag [#allocation3], %s680
          %s682 = sand.u32 %s91, 1
          %s683 = smul.addr %s682, 256
          %s684 = scalar_lea.vmem [#allocation2], %s683
          %685 = dma.done %s681, 4096
        $region40: #{gatae_forward.11} parent=35 // pred_fallthru
          _
      $region36: #{gatae_forward.11} parent=5 // pred_fallthru
        _
    $region6: #{gatae_forward.11} parent=1 // loop_footer
      %s15 = sadd.s32 1, %s11
    $region7: #{gatae_forward.11} parent=1 // loop_footer_branch
      %10 = sbr.rel target = $region3
    $region8: #{gatae_forward.11} parent=1 // loop_exit
      _
    %686 = vsyncpa [#allocation3], 1
    %s687 = scalar_lea.sflag [#allocation3], 1
    %688 = vsyncpa %s687, 1

// kernel: gatae_forward.7
$region0: #{gatae_forward.7}
  #allocation0 [shape = 'u32[]', space=smem, size = 0x4, offset = 0x4, fixed_abs, tag = 'smem constant byte address 0x4 - core index']
  #allocation1 [shape = 'u32[144,128]{1,0:T(1,128)}', space=vmem, size = 0x12000, scoped, tag = 'internal scratch']
  #allocation2 [shape = 'f32[128,1]{1,0:T(8,128)}', space=vmem, size = 0x10000, scoped, tag = 'scratch operand']
  #allocation3 [shape = 'f32[128,1]{1,0:T(8,128)}', space=vmem, size = 0x10000, scoped, tag = 'scratch operand']
  #allocation4 [shape = 'f32[128,128]{1,0:T(8,128)}', space=vmem, size = 0x10000, scoped, tag = 'scratch operand']
  #allocation5 [shape = 's32[1]{0}', space=sflag, size = 0x4, scoped, tag = 'scoped memory for gatae_forward.7']
  #allocation6 [shape = 'u8[512]{0}', space=smem, size = 0x200, scoped, tag = 'prefetched SMEM operand 0']
  %s0 = inlined_call_operand.vmem [shape: s32[2], index: 0, kind: input, shape index: {}]
  %s1 = inlined_call_operand.vmem [shape: s8[256,256], index: 1, kind: input, shape index: {}]
  %s2 = inlined_call_operand.vmem [shape: f32[256,1], index: 2, kind: input, shape index: {}]
  %s3 = inlined_call_operand.vmem [shape: f32[1,256], index: 3, kind: input, shape index: {}]
  %s4 = inlined_call_operand.vmem [shape: bf16[256,128], index: 4, kind: input, shape index: {}]
  %s5 = inlined_call_operand.vmem [shape: f32[1,128], index: 5, kind: input, shape index: {}]
  %s6 = inlined_call_operand.vmem [shape: bf16[256,128], index: 6, kind: output, shape index: {}]
  %s7 = sld [smem:[#allocation0]]
  $region65: #{gatae_forward.7} parent=0
    _
  %s9 = ssub.s32 1, %s7
  %s10 = scalar_select 0, %s9, %s7
  %s11 = sshll.u32 %s0, 4
  %s12 = int_to_ptr.vmem [resolvable:$true] %s11
  %14 = dma.vmem_to_smem %s12, 16, [#allocation6], [#allocation5]
  %15 = dma.done [#allocation5], 16
  %16 = sfence
  loop: start=0, step=1, limit=4
  $region2: #{gatae_forward.7} parent=0 // loop_pre_header
    _
  $region3: #{gatae_forward.7} parent=0 // loop_header
    %s18 = sphi 0, %s22
    %p19 = scmp.ge.s32.totalorder %s18, 4
    %s25 = sphi 0, %s37
    %s26 = sphi 0, %s33
    %s27 = sphi 0, %s25
    %s28 = sphi 0, %s26
    %s29 = sphi 0, %s27
    %s30 = sphi 0, %s28
    %s42 = sphi 0, %s44
    %s45 = sphi 0, %s42
    %s46 = sphi 0, %s45
    %s62 = sphi 0, %s46
    %s68 = sphi 0, %s70
    %s71 = sphi 0, %s68
    %s72 = sphi 0, %s71
    %s88 = sphi 0, %s72
    %s94 = sphi 0, %s96
    %s97 = sphi 0, %s94
    %s98 = sphi 0, %s97
    %s114 = sphi 0, %s98
    %s120 = sphi 0, %s122
    %s123 = sphi 0, %s120
    %s124 = sphi 0, %s123
    %s140 = sphi 0, %s124
    %s144 = sphi 0, %s144
    %s146 = sphi 0, %s144
    %s147 = sphi 0, %s146
    %s161 = sphi 0, %s147
    %s167 = sphi 0, %s169
    %s170 = sphi 0, %s167
    %s171 = sphi 0, %s170
    %s187 = sphi 0, %s171
  $region4: #{gatae_forward.7} parent=0 // loop_header_branch
    %21 = sbr.rel (%p19) target = $region8
  $region5: #{gatae_forward.7} parent=0 // loop_body
    %s23 = ssub.s32 %s18, 1
    %s24 = ssub.s32 %s18, 2
    %s31 = sadd.s32 1, %s26
    %p32 = scmp.ge.s32.totalorder %s31, 1
    %s33 = scalar_select %p32, 0, %s31
    %s34 = sadd.s32 1, %s25
    %s35 = scalar_select %p32, %s34, %s25
    %p36 = scmp.ge.s32.totalorder %s35, 2
    %s37 = scalar_select %p36, 0, %s35
    %s38 = ssub.s32 %s25, %s37
    %s39 = ssub.s32 %s26, %s33
    %s40 = sor.u32 %s38, %s39
    %p41 = scmp.eq.s32.totalorder %s40, 0
    %s43 = sadd.s32 %s42, 1
    %s44 = scalar_select %p41, %s42, %s43
    %p47 = pneg %p41
    %p48 = scmp.eq.s32.totalorder %s18, 1
    %p49 = por %p47, %p48
    %p50 = scmp.ne.s32.totalorder %s42, %s45
    %p51 = scmp.eq.s32.totalorder %s18, 0
    %p52 = por %p50, %p51
    %p53 = scmp.ne.s32.totalorder %s42, %s45
    %p54 = scmp.eq.s32.totalorder %s23, 1
    %p55 = por %p53, %p54
    %p56 = scmp.ne.s32.totalorder %s45, %s46
    %p57 = scmp.eq.s32.totalorder %s23, 0
    %p58 = por %p56, %p57
    %p59 = scmp.ne.s32.totalorder %s45, %s46
    %p60 = scmp.eq.s32.totalorder %s24, 1
    %p61 = por %p59, %p60
    %p63 = scmp.ne.s32.totalorder %s46, %s62
    %p64 = scmp.eq.s32.totalorder %s24, 0
    %p65 = por %p63, %p64
    %s66 = ssub.s32 %s25, %s37
    %p67 = scmp.eq.s32.totalorder %s66, 0
    %s69 = sadd.s32 %s68, 1
    %s70 = scalar_select %p67, %s68, %s69
    %p73 = pneg %p67
    %p74 = scmp.eq.s32.totalorder %s18, 1
    %p75 = por %p73, %p74
    %p76 = scmp.ne.s32.totalorder %s68, %s71
    %p77 = scmp.eq.s32.totalorder %s18, 0
    %p78 = por %p76, %p77
    %p79 = scmp.ne.s32.totalorder %s68, %s71
    %p80 = scmp.eq.s32.totalorder %s23, 1
    %p81 = por %p79, %p80
    %p82 = scmp.ne.s32.totalorder %s71, %s72
    %p83 = scmp.eq.s32.totalorder %s23, 0
    %p84 = por %p82, %p83
    %p85 = scmp.ne.s32.totalorder %s71, %s72
    %p86 = scmp.eq.s32.totalorder %s24, 1
    %p87 = por %p85, %p86
    %p89 = scmp.ne.s32.totalorder %s72, %s88
    %p90 = scmp.eq.s32.totalorder %s24, 0
    %p91 = por %p89, %p90
    %s92 = ssub.s32 %s26, %s33
    %p93 = scmp.eq.s32.totalorder %s92, 0
    %s95 = sadd.s32 %s94, 1
    %s96 = scalar_select %p93, %s94, %s95
    %p99 = pneg %p93
    %p100 = scmp.eq.s32.totalorder %s18, 1
    %p101 = por %p99, %p100
    %p102 = scmp.ne.s32.totalorder %s94, %s97
    %p103 = scmp.eq.s32.totalorder %s18, 0
    %p104 = por %p102, %p103
    %p105 = scmp.ne.s32.totalorder %s94, %s97
    %p106 = scmp.eq.s32.totalorder %s23, 1
    %p107 = por %p105, %p106
    %p108 = scmp.ne.s32.totalorder %s97, %s98
    %p109 = scmp.eq.s32.totalorder %s23, 0
    %p110 = por %p108, %p109
    %p111 = scmp.ne.s32.totalorder %s97, %s98
    %p112 = scmp.eq.s32.totalorder %s24, 1
    %p113 = por %p111, %p112
    %p115 = scmp.ne.s32.totalorder %s98, %s114
    %p116 = scmp.eq.s32.totalorder %s24, 0
    %p117 = por %p115, %p116
    %s118 = ssub.s32 %s26, %s33
    %p119 = scmp.eq.s32.totalorder %s118, 0
    %s121 = sadd.s32 %s120, 1
    %s122 = scalar_select %p119, %s120, %s121
    %p125 = pneg %p119
    %p126 = scmp.eq.s32.totalorder %s18, 1
    %p127 = por %p125, %p126
    %p128 = scmp.ne.s32.totalorder %s120, %s123
    %p129 = scmp.eq.s32.totalorder %s18, 0
    %p130 = por %p128, %p129
    %p131 = scmp.ne.s32.totalorder %s120, %s123
    %p132 = scmp.eq.s32.totalorder %s23, 1
    %p133 = por %p131, %p132
    %p134 = scmp.ne.s32.totalorder %s123, %s124
    %p135 = scmp.eq.s32.totalorder %s23, 0
    %p136 = por %p134, %p135
    %p137 = scmp.ne.s32.totalorder %s123, %s124
    %p138 = scmp.eq.s32.totalorder %s24, 1
    %p139 = por %p137, %p138
    %p141 = scmp.ne.s32.totalorder %s124, %s140
    %p142 = scmp.eq.s32.totalorder %s24, 0
    %p143 = por %p141, %p142
    %s145 = sadd.s32 %s144, 1
    %p148 = scmp.eq.s32.totalorder %s18, 1
    %p149 = scmp.ne.s32.totalorder %s144, %s146
    %p150 = scmp.eq.s32.totalorder %s18, 0
    %p151 = por %p149, %p150
    %p152 = scmp.ne.s32.totalorder %s144, %s146
    %p153 = scmp.eq.s32.totalorder %s23, 1
    %p154 = por %p152, %p153
    %p155 = scmp.ne.s32.totalorder %s146, %s147
    %p156 = scmp.eq.s32.totalorder %s23, 0
    %p157 = por %p155, %p156
    %p158 = scmp.ne.s32.totalorder %s146, %s147
    %p159 = scmp.eq.s32.totalorder %s24, 1
    %p160 = por %p158, %p159
    %p162 = scmp.ne.s32.totalorder %s147, %s161
    %p163 = scmp.eq.s32.totalorder %s24, 0
    %p164 = por %p162, %p163
    %s165 = ssub.s32 %s25, %s37
    %p166 = scmp.eq.s32.totalorder %s165, 0
    %s168 = sadd.s32 %s167, 1
    %s169 = scalar_select %p166, %s167, %s168
    %p172 = pneg %p166
    %p173 = scmp.eq.s32.totalorder %s18, 1
    %p174 = por %p172, %p173
    %p175 = scmp.ne.s32.totalorder %s167, %s170
    %p176 = scmp.eq.s32.totalorder %s18, 0
    %p177 = por %p175, %p176
    %p178 = scmp.ne.s32.totalorder %s167, %s170
    %p179 = scmp.eq.s32.totalorder %s23, 1
    %p180 = por %p178, %p179
    %p181 = scmp.ne.s32.totalorder %s170, %s171
    %p182 = scmp.eq.s32.totalorder %s23, 0
    %p183 = por %p181, %p182
    %p184 = scmp.ne.s32.totalorder %s170, %s171
    %p185 = scmp.eq.s32.totalorder %s24, 1
    %p186 = por %p184, %p185
    %p188 = scmp.ne.s32.totalorder %s171, %s187
    %p189 = scmp.eq.s32.totalorder %s24, 0
    %p190 = por %p188, %p189
    %p191 = scmp.le.s32.totalorder 1, %s18
    %p192 = scmp.lt.s32.totalorder %s18, 3
    %p193 = pnand %p191, %p192
    %p194 = pneg %p193
    // Predicated region
    $region9: #{gatae_forward.7} parent=5 // pred_check
      _
    $region10: #{gatae_forward.7} parent=5 // pred_check_branch
      %196 = sbr.rel (%p193) target = $region12
    $region11: #{gatae_forward.7} parent=5 // pred_region
      %s197 = ssub.s32 %s18, 1
      // Predicated region
      $region13: #{gatae_forward.7} parent=11 // pred_check
        %p198 = pneg %p110
      $region14: #{gatae_forward.7} parent=11 // pred_check_branch
        %200 = sbr.rel (%p198) target = $region16
      $region15: #{gatae_forward.7} parent=11 // pred_region
        %s201 = smul.u32 2, %s28
        %p202 = scmp.lt.s32.totalorder %s201, 1
        %s203 = scalar_select %p202, %s201, 1
        %s204 = scalar_lea.vmem %s3, %s203
        %s205 = smul.u32 2, %s28
      $region16: #{gatae_forward.7} parent=11 // pred_fallthru
        _
      // Predicated region
      $region17: #{gatae_forward.7} parent=11 // pred_check
        %p206 = pneg %p136
      $region18: #{gatae_forward.7} parent=11 // pred_check_branch
        %208 = sbr.rel (%p206) target = $region20
      $region19: #{gatae_forward.7} parent=11 // pred_region
        %s209 = smul.u32 32, %s28
        %p210 = scmp.lt.s32.totalorder %s209, 31
        %s211 = scalar_select %p210, %s209, 31
        %s212 = smul.addr %s211, 4
        %s213 = scalar_lea.vmem %s4, %s212
        %s214 = smul.u32 32, %s28
      $region20: #{gatae_forward.7} parent=11 // pred_fallthru
        _
      // Predicated region
      $region21: #{gatae_forward.7} parent=11 // pred_check
        %p215 = pneg %p157
      $region22: #{gatae_forward.7} parent=11 // pred_check_branch
        %217 = sbr.rel (%p215) target = $region24
      $region23: #{gatae_forward.7} parent=11 // pred_region
        _
      $region24: #{gatae_forward.7} parent=11 // pred_fallthru
        _
    $region12: #{gatae_forward.7} parent=5 // pred_fallthru
      _
    %p218 = scmp.lt.s32.totalorder %s18, 2
    // Predicated region
    $region25: #{gatae_forward.7} parent=5 // pred_check
      %p219 = pneg %p218
    $region26: #{gatae_forward.7} parent=5 // pred_check_branch
      %221 = sbr.rel (%p219) target = $region28
    $region27: #{gatae_forward.7} parent=5 // pred_region
      // Predicated region
      $region29: #{gatae_forward.7} parent=27 // pred_check
        %p222 = pneg %p52
      $region30: #{gatae_forward.7} parent=27 // pred_check_branch
        %224 = sbr.rel (%p222) target = $region32
      $region31: #{gatae_forward.7} parent=27 // pred_region
        %s225 = smul.u32 4, %s25
        %s226 = smul.u32 2, %s26
        %p227 = scmp.lt.s32.totalorder %s225, 7
        %s228 = scalar_select %p227, %s225, 7
        %p229 = scmp.lt.s32.totalorder %s226, 1
        %s230 = scalar_select %p229, %s226, 1
        %s231 = smul.addr %s228, 2
        %s232 = sadd.s32 %s230, %s231
        %s233 = smul.addr %s232, 8
        %s234 = scalar_lea.vmem %s1, %s233
        %s235 = smul.u32 4, %s25
        %s236 = smul.u32 2, %s26
      $region32: #{gatae_forward.7} parent=27 // pred_fallthru
        _
      // Predicated region
      $region33: #{gatae_forward.7} parent=27 // pred_check
        %p237 = pneg %p78
      $region34: #{gatae_forward.7} parent=27 // pred_check_branch
        %239 = sbr.rel (%p237) target = $region36
      $region35: #{gatae_forward.7} parent=27 // pred_region
        %s240 = smul.u32 16, %s25
        %p241 = scmp.lt.s32.totalorder %s240, 31
        %s242 = scalar_select %p241, %s240, 31
        %s243 = smul.addr %s242, 8
        %s244 = scalar_lea.vmem %s2, %s243
        %s245 = smul.u32 16, %s25
      $region36: #{gatae_forward.7} parent=27 // pred_fallthru
        _
    $region28: #{gatae_forward.7} parent=5 // pred_fallthru
      _
    %p246 = scmp.le.s32.totalorder 1, %s18
    %p247 = scmp.lt.s32.totalorder %s18, 3
    %p248 = pnand %p246, %p247
    %p249 = pneg %p248
    // Predicated region
    $region37: #{gatae_forward.7} parent=5 // pred_check
      _
    $region38: #{gatae_forward.7} parent=5 // pred_check_branch
      %251 = sbr.rel (%p248) target = $region40
    $region39: #{gatae_forward.7} parent=5 // pred_region
      %s252 = ssub.s32 %s18, 1
      %s253 = smul.u32 4, %s27
      %s254 = smul.u32 2, %s28
      %p255 = scmp.lt.s32.totalorder %s253, 7
      %s256 = scalar_select %p255, %s253, 7
      %p257 = scmp.lt.s32.totalorder %s254, 1
      %s258 = scalar_select %p257, %s254, 1
      %s259 = smul.addr %s256, 2
      %s260 = sadd.s32 %s258, %s259
      %s261 = smul.addr %s260, 8
      %s262 = scalar_lea.vmem %s1, %s261
      %p263 = pneg %p58
      %p264 = pneg %p55
      %s265 = smul.u32 16, %s27
      %p266 = scmp.lt.s32.totalorder %s265, 31
      %s267 = scalar_select %p266, %s265, 31
      %s268 = smul.addr %s267, 8
      %s269 = scalar_lea.vmem %s2, %s268
      %p270 = pneg %p84
      %p271 = pneg %p81
      %s272 = smul.u32 2, %s28
      %p273 = scmp.lt.s32.totalorder %s272, 1
      %s274 = scalar_select %p273, %s272, 1
      %s275 = scalar_lea.vmem %s3, %s274
      %p276 = pneg %p110
      %p277 = pneg %p107
      %s278 = smul.u32 32, %s28
      %p279 = scmp.lt.s32.totalorder %s278, 31
      %s280 = scalar_select %p279, %s278, 31
      %s281 = smul.addr %s280, 4
      %s282 = scalar_lea.vmem %s4, %s281
      %p283 = pneg %p136
      %p284 = pneg %p133
      %p285 = pneg %p157
      %p286 = pneg %p154
      %p287 = pneg %p183
      %p288 = pneg %p180
      %s289 = smul.u32 16, %s27
      %p290 = scmp.lt.s32.totalorder %s289, 31
      %s291 = scalar_select %p290, %s289, 31
      %s292 = smul.addr %s291, 4
      %s293 = scalar_lea.vmem %s6, %s292
      %s294 = smul.u32 4, %s27
      %s295 = smul.u32 2, %s28
      %p296 = scmp.lt.s32.totalorder %s294, 7
      %s297 = scalar_select %p296, %s294, 7
      %p298 = scmp.lt.s32.totalorder %s295, 1
      %s299 = scalar_select %p298, %s295, 1
      %s300 = smul.addr %s297, 2
      %s301 = sadd.s32 %s299, %s300
      %s302 = smul.addr %s301, 8
      %s303 = scalar_lea.vmem %s1, %s302
      %s304 = smul.u32 4, %s27
      %s305 = smul.u32 2, %s28
      %s306 = smul.u32 16, %s27
      %p307 = scmp.lt.s32.totalorder %s306, 31
      %s308 = scalar_select %p307, %s306, 31
      %s309 = smul.addr %s308, 8
      %s310 = scalar_lea.vmem %s2, %s309
      %s311 = smul.u32 16, %s27
      %s312 = smul.u32 2, %s28
      %p313 = scmp.lt.s32.totalorder %s312, 1
      %s314 = scalar_select %p313, %s312, 1
      %s315 = scalar_lea.vmem %s3, %s314
      %s316 = smul.u32 2, %s28
      %s317 = smul.u32 32, %s28
      %p318 = scmp.lt.s32.totalorder %s317, 31
      %s319 = scalar_select %p318, %s317, 31
      %s320 = smul.addr %s319, 4
      %s321 = scalar_lea.vmem %s4, %s320
      %s322 = smul.u32 32, %s28
      %s323 = smul.u32 16, %s27
      %p324 = scmp.lt.s32.totalorder %s323, 31
      %s325 = scalar_select %p324, %s323, 31
      %s326 = smul.addr %s325, 4
      %s327 = scalar_lea.vmem %s6, %s326
      %s328 = smul.u32 16, %s27
      %p332 = scmp.eq.s32.totalorder %s28, 0
      // Predicated region
      $region41: #{gatae_forward.7} parent=39 // pred_check
        %p333 = pneg %p332
      $region42: #{gatae_forward.7} parent=39 // pred_check_branch
        %335 = sbr.rel (%p333) target = $region44
      $region43: #{gatae_forward.7} parent=39 // pred_region
        %vm336 = vcmask 7168
        %337 = vst.msk [vmem:[#allocation2] sm:$0xff] %vm336, -1e+20
        %338 = vst.msk [vmem:[#allocation2 + $0x8] sm:$0xff] %vm336, -1e+20
        %339 = vst.msk [vmem:[#allocation2 + $0x10] sm:$0xff] %vm336, -1e+20
        %340 = vst.msk [vmem:[#allocation2 + $0x18] sm:$0xff] %vm336, -1e+20
        %341 = vst.msk [vmem:[#allocation2 + $0x20] sm:$0xff] %vm336, -1e+20
        %342 = vst.msk [vmem:[#allocation2 + $0x28] sm:$0xff] %vm336, -1e+20
        %343 = vst.msk [vmem:[#allocation2 + $0x30] sm:$0xff] %vm336, -1e+20
        %344 = vst.msk [vmem:[#allocation2 + $0x38] sm:$0xff] %vm336, -1e+20
        %345 = vst.msk [vmem:[#allocation2 + $0x40] sm:$0xff] %vm336, -1e+20
        %346 = vst.msk [vmem:[#allocation2 + $0x48] sm:$0xff] %vm336, -1e+20
        %347 = vst.msk [vmem:[#allocation2 + $0x50] sm:$0xff] %vm336, -1e+20
        %348 = vst.msk [vmem:[#allocation2 + $0x58] sm:$0xff] %vm336, -1e+20
        %349 = vst.msk [vmem:[#allocation2 + $0x60] sm:$0xff] %vm336, -1e+20
        %350 = vst.msk [vmem:[#allocation2 + $0x68] sm:$0xff] %vm336, -1e+20
        %351 = vst.msk [vmem:[#allocation2 + $0x70] sm:$0xff] %vm336, -1e+20
        %352 = vst.msk [vmem:[#allocation2 + $0x78] sm:$0xff] %vm336, -1e+20
        %353 = vst.msk [vmem:[#allocation3] sm:$0xff] %vm336, 0.0
        %354 = vst.msk [vmem:[#allocation3 + $0x8] sm:$0xff] %vm336, 0.0
        %355 = vst.msk [vmem:[#allocation3 + $0x10] sm:$0xff] %vm336, 0.0
        %356 = vst.msk [vmem:[#allocation3 + $0x18] sm:$0xff] %vm336, 0.0
        %357 = vst.msk [vmem:[#allocation3 + $0x20] sm:$0xff] %vm336, 0.0
        %358 = vst.msk [vmem:[#allocation3 + $0x28] sm:$0xff] %vm336, 0.0
        %359 = vst.msk [vmem:[#allocation3 + $0x30] sm:$0xff] %vm336, 0.0
        %360 = vst.msk [vmem:[#allocation3 + $0x38] sm:$0xff] %vm336, 0.0
        %361 = vst.msk [vmem:[#allocation3 + $0x40] sm:$0xff] %vm336, 0.0
        %362 = vst.msk [vmem:[#allocation3 + $0x48] sm:$0xff] %vm336, 0.0
        %363 = vst.msk [vmem:[#allocation3 + $0x50] sm:$0xff] %vm336, 0.0
        %364 = vst.msk [vmem:[#allocation3 + $0x58] sm:$0xff] %vm336, 0.0
        %365 = vst.msk [vmem:[#allocation3 + $0x60] sm:$0xff] %vm336, 0.0
        %366 = vst.msk [vmem:[#allocation3 + $0x68] sm:$0xff] %vm336, 0.0
        %367 = vst.msk [vmem:[#allocation3 + $0x70] sm:$0xff] %vm336, 0.0
        %368 = vst.msk [vmem:[#allocation3 + $0x78] sm:$0xff] %vm336, 0.0
        %369 = vst [vmem:[#allocation4] sm:$0xff] 0.0
        %370 = vst [vmem:[#allocation4 + $0x8] sm:$0xff] 0.0
        %371 = vst [vmem:[#allocation4 + $0x10] sm:$0xff] 0.0
        %372 = vst [vmem:[#allocation4 + $0x18] sm:$0xff] 0.0
        %373 = vst [vmem:[#allocation4 + $0x20] sm:$0xff] 0.0
        %374 = vst [vmem:[#allocation4 + $0x28] sm:$0xff] 0.0
        %375 = vst [vmem:[#allocation4 + $0x30] sm:$0xff] 0.0
        %376 = vst [vmem:[#allocation4 + $0x38] sm:$0xff] 0.0
        %377 = vst [vmem:[#allocation4 + $0x40] sm:$0xff] 0.0
        %378 = vst [vmem:[#allocation4 + $0x48] sm:$0xff] 0.0
        %379 = vst [vmem:[#allocation4 + $0x50] sm:$0xff] 0.0
        %380 = vst [vmem:[#allocation4 + $0x58] sm:$0xff] 0.0
        %381 = vst [vmem:[#allocation4 + $0x60] sm:$0xff] 0.0
        %382 = vst [vmem:[#allocation4 + $0x68] sm:$0xff] 0.0
        %383 = vst [vmem:[#allocation4 + $0x70] sm:$0xff] 0.0
        %384 = vst [vmem:[#allocation4 + $0x78] sm:$0xff] 0.0
      $region44: #{gatae_forward.7} parent=39 // pred_fallthru
        _
      %s385 = sadd.s32 %s27, %s28
      %s386 = sld [smem:[#allocation6 + %s385]]
      %p387 = scmp.gt.s32.totalorder %s386, 0
      // Predicated region
      $region45: #{gatae_forward.7} parent=39 // pred_check
        %p388 = pneg %p387
      $region46: #{gatae_forward.7} parent=39 // pred_check_branch
        %390 = sbr.rel (%p388) target = $region48
      $region47: #{gatae_forward.7} parent=39 // pred_region
        %v391 = vld [vmem:[%s310] sm:$0xff]
        %v392 = vld [vmem:[%s310 + $0x8] sm:$0xff]
        %v393 = vld [vmem:[%s310 + $0x10] sm:$0xff]
        %v394 = vld [vmem:[%s310 + $0x18] sm:$0xff]
        %v395 = vld [vmem:[%s310 + $0x20] sm:$0xff]
        %v396 = vld [vmem:[%s310 + $0x28] sm:$0xff]
        %v397 = vld [vmem:[%s310 + $0x30] sm:$0xff]
        %v398 = vld [vmem:[%s310 + $0x38] sm:$0xff]
        %v399 = vld [vmem:[%s310 + $0x40] sm:$0xff]
        %v400 = vld [vmem:[%s310 + $0x48] sm:$0xff]
        %v401 = vld [vmem:[%s310 + $0x50] sm:$0xff]
        %v402 = vld [vmem:[%s310 + $0x58] sm:$0xff]
        %v403 = vld [vmem:[%s310 + $0x60] sm:$0xff]
        %v404 = vld [vmem:[%s310 + $0x68] sm:$0xff]
        %v405 = vld [vmem:[%s310 + $0x70] sm:$0xff]
        %v406 = vld [vmem:[%s310 + $0x78] sm:$0xff]
        %v407 = vld [vmem:[%s315] sm:$0x3]
        %409 = vset.pattern.permute.xlu0 0
        %410 = vperm.xlu0 %409, %v391
        %v411 = vpop.permute.xlu0 %410
        %414 = vset.pattern.permute.xlu0 0
        %415 = vperm.xlu0 %414, %v392
        %v416 = vpop.permute.xlu0 %415
        %419 = vset.pattern.permute.xlu0 0
        %420 = vperm.xlu0 %419, %v393
        %v421 = vpop.permute.xlu0 %420
        %424 = vset.pattern.permute.xlu0 0
        %425 = vperm.xlu0 %424, %v394
        %v426 = vpop.permute.xlu0 %425
        %429 = vset.pattern.permute.xlu0 0
        %430 = vperm.xlu0 %429, %v395
        %v431 = vpop.permute.xlu0 %430
        %434 = vset.pattern.permute.xlu0 0
        %435 = vperm.xlu0 %434, %v396
        %v436 = vpop.permute.xlu0 %435
        %439 = vset.pattern.permute.xlu0 0
        %440 = vperm.xlu0 %439, %v397
        %v441 = vpop.permute.xlu0 %440
        %444 = vset.pattern.permute.xlu0 0
        %445 = vperm.xlu0 %444, %v398
        %v446 = vpop.permute.xlu0 %445
        %449 = vset.pattern.permute.xlu0 0
        %450 = vperm.xlu0 %449, %v399
        %v451 = vpop.permute.xlu0 %450
        %454 = vset.pattern.permute.xlu0 0
        %455 = vperm.xlu0 %454, %v400
        %v456 = vpop.permute.xlu0 %455
        %459 = vset.pattern.permute.xlu0 0
        %460 = vperm.xlu0 %459, %v401
        %v461 = vpop.permute.xlu0 %460
        %464 = vset.pattern.permute.xlu0 0
        %465 = vperm.xlu0 %464, %v402
        %v466 = vpop.permute.xlu0 %465
        %469 = vset.pattern.permute.xlu0 0
        %470 = vperm.xlu0 %469, %v403
        %v471 = vpop.permute.xlu0 %470
        %474 = vset.pattern.permute.xlu0 0
        %475 = vperm.xlu0 %474, %v404
        %v476 = vpop.permute.xlu0 %475
        %479 = vset.pattern.permute.xlu0 0
        %480 = vperm.xlu0 %479, %v405
        %v481 = vpop.permute.xlu0 %480
        %484 = vset.pattern.permute.xlu0 0
        %485 = vperm.xlu0 %484, %v406
        %v486 = vpop.permute.xlu0 %485
        %v489 = vlaneseq
        %v490 = vshrl.u32 %v489, 7
        %v491 = vsub.s32 0, %v490
        %v492 = vrot.slane %v407, %v491
        %v493 = vlaneseq
        %v494 = vshrl.u32 %v493, 7
        %v495 = vsub.s32 1, %v494
        %v496 = vrot.slane %v407, %v495
        %v499 = vadd.f32 %v411, %v492
        %v500 = vadd.f32 %v411, %v496
        %v501 = vadd.f32 %v416, %v492
        %v502 = vadd.f32 %v416, %v496
        %v503 = vadd.f32 %v421, %v492
        %v504 = vadd.f32 %v421, %v496
        %v505 = vadd.f32 %v426, %v492
        %v506 = vadd.f32 %v426, %v496
        %v507 = vadd.f32 %v431, %v492
        %v508 = vadd.f32 %v431, %v496
        %v509 = vadd.f32 %v436, %v492
        %v510 = vadd.f32 %v436, %v496
        %v511 = vadd.f32 %v441, %v492
        %v512 = vadd.f32 %v441, %v496
        %v513 = vadd.f32 %v446, %v492
        %v514 = vadd.f32 %v446, %v496
        %v515 = vadd.f32 %v451, %v492
        %v516 = vadd.f32 %v451, %v496
        %v517 = vadd.f32 %v456, %v492
        %v518 = vadd.f32 %v456, %v496
        %v519 = vadd.f32 %v461, %v492
        %v520 = vadd.f32 %v461, %v496
        %v521 = vadd.f32 %v466, %v492
        %v522 = vadd.f32 %v466, %v496
        %v523 = vadd.f32 %v471, %v492
        %v524 = vadd.f32 %v471, %v496
        %v525 = vadd.f32 %v476, %v492
        %v526 = vadd.f32 %v476, %v496
        %v527 = vadd.f32 %v481, %v492
        %v528 = vadd.f32 %v481, %v496
        %v529 = vadd.f32 %v486, %v492
        %v530 = vadd.f32 %v486, %v496
        %vm531 = vcmp.gt.f32.partialorder %v499, 0.0
        %vm532 = vcmp.gt.f32.partialorder %v500, 0.0
        %vm533 = vcmp.gt.f32.partialorder %v501, 0.0
        %vm534 = vcmp.gt.f32.partialorder %v502, 0.0
        %vm535 = vcmp.gt.f32.partialorder %v503, 0.0
        %vm536 = vcmp.gt.f32.partialorder %v504, 0.0
        %vm537 = vcmp.gt.f32.partialorder %v505, 0.0
        %vm538 = vcmp.gt.f32.partialorder %v506, 0.0
        %vm539 = vcmp.gt.f32.partialorder %v507, 0.0
        %vm540 = vcmp.gt.f32.partialorder %v508, 0.0
        %vm541 = vcmp.gt.f32.partialorder %v509, 0.0
        %vm542 = vcmp.gt.f32.partialorder %v510, 0.0
        %vm543 = vcmp.gt.f32.partialorder %v511, 0.0
        %vm544 = vcmp.gt.f32.partialorder %v512, 0.0
        %vm545 = vcmp.gt.f32.partialorder %v513, 0.0
        %vm546 = vcmp.gt.f32.partialorder %v514, 0.0
        %vm547 = vcmp.gt.f32.partialorder %v515, 0.0
        %vm548 = vcmp.gt.f32.partialorder %v516, 0.0
        %vm549 = vcmp.gt.f32.partialorder %v517, 0.0
        %vm550 = vcmp.gt.f32.partialorder %v518, 0.0
        %vm551 = vcmp.gt.f32.partialorder %v519, 0.0
        %vm552 = vcmp.gt.f32.partialorder %v520, 0.0
        %vm553 = vcmp.gt.f32.partialorder %v521, 0.0
        %vm554 = vcmp.gt.f32.partialorder %v522, 0.0
        %vm555 = vcmp.gt.f32.partialorder %v523, 0.0
        %vm556 = vcmp.gt.f32.partialorder %v524, 0.0
        %vm557 = vcmp.gt.f32.partialorder %v525, 0.0
        %vm558 = vcmp.gt.f32.partialorder %v526, 0.0
        %vm559 = vcmp.gt.f32.partialorder %v527, 0.0
        %vm560 = vcmp.gt.f32.partialorder %v528, 0.0
        %vm561 = vcmp.gt.f32.partialorder %v529, 0.0
        %vm562 = vcmp.gt.f32.partialorder %v530, 0.0
        %v563 = vmul.f32 %v499, 0.2
        %v564 = vmul.f32 %v500, 0.2
        %v565 = vmul.f32 %v501, 0.2
        %v566 = vmul.f32 %v502, 0.2
        %v567 = vmul.f32 %v503, 0.2
        %v568 = vmul.f32 %v504, 0.2
        %v569 = vmul.f32 %v505, 0.2
        %v570 = vmul.f32 %v506, 0.2
        %v571 = vmul.f32 %v507, 0.2
        %v572 = vmul.f32 %v508, 0.2
        %v573 = vmul.f32 %v509, 0.2
        %v574 = vmul.f32 %v510, 0.2
        %v575 = vmul.f32 %v511, 0.2
        %v576 = vmul.f32 %v512, 0.2
        %v577 = vmul.f32 %v513, 0.2
        %v578 = vmul.f32 %v514, 0.2
        %v579 = vmul.f32 %v515, 0.2
        %v580 = vmul.f32 %v516, 0.2
        %v581 = vmul.f32 %v517, 0.2
        %v582 = vmul.f32 %v518, 0.2
        %v583 = vmul.f32 %v519, 0.2
        %v584 = vmul.f32 %v520, 0.2
        %v585 = vmul.f32 %v521, 0.2
        %v586 = vmul.f32 %v522, 0.2
        %v587 = vmul.f32 %v523, 0.2
        %v588 = vmul.f32 %v524, 0.2
        %v589 = vmul.f32 %v525, 0.2
        %v590 = vmul.f32 %v526, 0.2
        %v591 = vmul.f32 %v527, 0.2
        %v592 = vmul.f32 %v528, 0.2
        %v593 = vmul.f32 %v529, 0.2
        %v594 = vmul.f32 %v530, 0.2
        %v595 = vsel %vm531, %v499, %v563
        %v596 = vsel %vm532, %v500, %v564
        %v597 = vsel %vm533, %v501, %v565
        %v598 = vsel %vm534, %v502, %v566
        %v599 = vsel %vm535, %v503, %v567
        %v600 = vsel %vm536, %v504, %v568
        %v601 = vsel %vm537, %v505, %v569
        %v602 = vsel %vm538, %v506, %v570
        %v603 = vsel %vm539, %v507, %v571
        %v604 = vsel %vm540, %v508, %v572
        %v605 = vsel %vm541, %v509, %v573
        %v606 = vsel %vm542, %v510, %v574
        %v607 = vsel %vm543, %v511, %v575
        %v608 = vsel %vm544, %v512, %v576
        %v609 = vsel %vm545, %v513, %v577
        %v610 = vsel %vm546, %v514, %v578
        %v611 = vsel %vm547, %v515, %v579
        %v612 = vsel %vm548, %v516, %v580
        %v613 = vsel %vm549, %v517, %v581
        %v614 = vsel %vm550, %v518, %v582
        %v615 = vsel %vm551, %v519, %v583
        %v616 = vsel %vm552, %v520, %v584
        %v617 = vsel %vm553, %v521, %v585
        %v618 = vsel %vm554, %v522, %v586
        %v619 = vsel %vm555, %v523, %v587
        %v620 = vsel %vm556, %v524, %v588
        %v621 = vsel %vm557, %v525, %v589
        %v622 = vsel %vm558, %v526, %v590
        %v623 = vsel %vm559, %v527, %v591
        %v624 = vsel %vm560, %v528, %v592
        %v625 = vsel %vm561, %v529, %v593
        %v626 = vsel %vm562, %v530, %v594
        %v627 = vld [vmem:[%s303] sm:$0xff]
        %v628 = vld [vmem:[%s303 + $0x8] sm:$0xff]
        %v629 = vld [vmem:[%s303 + $0x10] sm:$0xff]
        %v630 = vld [vmem:[%s303 + $0x18] sm:$0xff]
        %v631 = vld [vmem:[%s303 + $0x20] sm:$0xff]
        %v632 = vld [vmem:[%s303 + $0x28] sm:$0xff]
        %v633 = vld [vmem:[%s303 + $0x30] sm:$0xff]
        %v634 = vld [vmem:[%s303 + $0x38] sm:$0xff]
        %vm635 = vnez %v627
        %vm636 = vnez %v628
        %vm637 = vnez %v629
        %vm638 = vnez %v630
        %vm639 = vnez %v631
        %vm640 = vnez %v632
        %vm641 = vnez %v633
        %vm642 = vnez %v634
        %v643 = vsel %vm635, 16843009, 0
        %v644 = vsel %vm636, 16843009, 0
        %v645 = vsel %vm637, 16843009, 0
        %v646 = vsel %vm638, 16843009, 0
        %v647 = vsel %vm639, 16843009, 0
        %v648 = vsel %vm640, 16843009, 0
        %v649 = vsel %vm641, 16843009, 0
        %v650 = vsel %vm642, 16843009, 0
        %v651 = vunpack.c.0.s8 %v643
        %v652 = vunpack.c.0.s8 %v644
        %v653 = vunpack.c.1.s8 %v643
        %v654 = vunpack.c.1.s8 %v644
        %v655 = vunpack.c.2.s8 %v643
        %v656 = vunpack.c.2.s8 %v644
        %v657 = vunpack.c.3.s8 %v643
        %v658 = vunpack.c.3.s8 %v644
        %v659 = vunpack.c.0.s8 %v645
        %v660 = vunpack.c.0.s8 %v646
        %v661 = vunpack.c.1.s8 %v645
        %v662 = vunpack.c.1.s8 %v646
        %v663 = vunpack.c.2.s8 %v645
        %v664 = vunpack.c.2.s8 %v646
        %v665 = vunpack.c.3.s8 %v645
        %v666 = vunpack.c.3.s8 %v646
        %v667 = vunpack.c.0.s8 %v647
        %v668 = vunpack.c.0.s8 %v648
        %v669 = vunpack.c.1.s8 %v647
        %v670 = vunpack.c.1.s8 %v648
        %v671 = vunpack.c.2.s8 %v647
        %v672 = vunpack.c.2.s8 %v648
        %v673 = vunpack.c.3.s8 %v647
        %v674 = vunpack.c.3.s8 %v648
        %v675 = vunpack.c.0.s8 %v649
        %v676 = vunpack.c.0.s8 %v650
        %v677 = vunpack.c.1.s8 %v649
        %v678 = vunpack.c.1.s8 %v650
        %v679 = vunpack.c.2.s8 %v649
        %v680 = vunpack.c.2.s8 %v650
        %v681 = vunpack.c.3.s8 %v649
        %v682 = vunpack.c.3.s8 %v650
        %v683 = vpack.c.b16 %v652, %v651
        %v684 = vpack.c.b8 %v683, %v683
        %v685 = vpack.c.b16 %v654, %v653
        %v686 = vpack.c.b8 %v685, %v685
        %v687 = vpack.c.b16 %v656, %v655
        %v688 = vpack.c.b8 %v687, %v687
        %v689 = vpack.c.b16 %v658, %v657
        %v690 = vpack.c.b8 %v689, %v689
        %v691 = vpack.c.b16 %v660, %v659
        %v692 = vpack.c.b8 %v691, %v691
        %v693 = vpack.c.b16 %v662, %v661
        %v694 = vpack.c.b8 %v693, %v693
        %v695 = vpack.c.b16 %v664, %v663
        %v696 = vpack.c.b8 %v695, %v695
        %v697 = vpack.c.b16 %v666, %v665
        %v698 = vpack.c.b8 %v697, %v697
        %v699 = vpack.c.b16 %v668, %v667
        %v700 = vpack.c.b8 %v699, %v699
        %v701 = vpack.c.b16 %v670, %v669
        %v702 = vpack.c.b8 %v701, %v701
        %v703 = vpack.c.b16 %v672, %v671
        %v704 = vpack.c.b8 %v703, %v703
        %v705 = vpack.c.b16 %v674, %v673
        %v706 = vpack.c.b8 %v705, %v705
        %v707 = vpack.c.b16 %v676, %v675
        %v708 = vpack.c.b8 %v707, %v707
        %v709 = vpack.c.b16 %v678, %v677
        %v710 = vpack.c.b8 %v709, %v709
        %v711 = vpack.c.b16 %v680, %v679
        %v712 = vpack.c.b8 %v711, %v711
        %v713 = vpack.c.b16 %v682, %v681
        %v714 = vpack.c.b8 %v713, %v713
        %vm715 = vnez %v684
        %vm716 = vnez %v686
        %vm717 = vnez %v688
        %vm718 = vnez %v690
        %vm719 = vnez %v692
        %vm720 = vnez %v694
        %vm721 = vnez %v696
        %vm722 = vnez %v698
        %vm723 = vnez %v700
        %vm724 = vnez %v702
        %vm725 = vnez %v704
        %vm726 = vnez %v706
        %vm727 = vnez %v708
        %vm728 = vnez %v710
        %vm729 = vnez %v712
        %vm730 = vnez %v714
        %v731 = vsel %vm715, 16843009, 0
        %v732 = vsel %vm716, 16843009, 0
        %v733 = vsel %vm717, 16843009, 0
        %v734 = vsel %vm718, 16843009, 0
        %v735 = vsel %vm719, 16843009, 0
        %v736 = vsel %vm720, 16843009, 0
        %v737 = vsel %vm721, 16843009, 0
        %v738 = vsel %vm722, 16843009, 0
        %v739 = vsel %vm723, 16843009, 0
        %v740 = vsel %vm724, 16843009, 0
        %v741 = vsel %vm725, 16843009, 0
        %v742 = vsel %vm726, 16843009, 0
        %v743 = vsel %vm727, 16843009, 0
        %v744 = vsel %vm728, 16843009, 0
        %v745 = vsel %vm729, 16843009, 0
        %v746 = vsel %vm730, 16843009, 0
        %v747 = vunpack.c.0.s8 %v731
        %v748 = vunpack.c.1.s8 %v731
        %v749 = vunpack.c.0.s8 %v732
        %v750 = vunpack.c.1.s8 %v732
        %v751 = vunpack.c.0.s8 %v733
        %v752 = vunpack.c.1.s8 %v733
        %v753 = vunpack.c.0.s8 %v734
        %v754 = vunpack.c.1.s8 %v734
        %v755 = vunpack.c.0.s8 %v735
        %v756 = vunpack.c.1.s8 %v735
        %v757 = vunpack.c.0.s8 %v736
        %v758 = vunpack.c.1.s8 %v736
        %v759 = vunpack.c.0.s8 %v737
        %v760 = vunpack.c.1.s8 %v737
        %v761 = vunpack.c.0.s8 %v738
        %v762 = vunpack.c.1.s8 %v738
        %v763 = vunpack.c.0.s8 %v739
        %v764 = vunpack.c.1.s8 %v739
        %v765 = vunpack.c.0.s8 %v740
        %v766 = vunpack.c.1.s8 %v740
        %v767 = vunpack.c.0.s8 %v741
        %v768 = vunpack.c.1.s8 %v741
        %v769 = vunpack.c.0.s8 %v742
        %v770 = vunpack.c.1.s8 %v742
        %v771 = vunpack.c.0.s8 %v743
        %v772 = vunpack.c.1.s8 %v743
        %v773 = vunpack.c.0.s8 %v744
        %v774 = vunpack.c.1.s8 %v744
        %v775 = vunpack.c.0.s8 %v745
        %v776 = vunpack.c.1.s8 %v745
        %v777 = vunpack.c.0.s8 %v746
        %v778 = vunpack.c.1.s8 %v746
        %vm779 = vcmp.ne.s32.totalorder %v747, 0
        %vm780 = vcmp.ne.s32.totalorder %v748, 0
        %vm781 = vcmp.ne.s32.totalorder %v749, 0
        %vm782 = vcmp.ne.s32.totalorder %v750, 0
        %vm783 = vcmp.ne.s32.totalorder %v751, 0
        %vm784 = vcmp.ne.s32.totalorder %v752, 0
        %vm785 = vcmp.ne.s32.totalorder %v753, 0
        %vm786 = vcmp.ne.s32.totalorder %v754, 0
        %vm787 = vcmp.ne.s32.totalorder %v755, 0
        %vm788 = vcmp.ne.s32.totalorder %v756, 0
        %vm789 = vcmp.ne.s32.totalorder %v757, 0
        %vm790 = vcmp.ne.s32.totalorder %v758, 0
        %vm791 = vcmp.ne.s32.totalorder %v759, 0
        %vm792 = vcmp.ne.s32.totalorder %v760, 0
        %vm793 = vcmp.ne.s32.totalorder %v761, 0
        %vm794 = vcmp.ne.s32.totalorder %v762, 0
        %vm795 = vcmp.ne.s32.totalorder %v763, 0
        %vm796 = vcmp.ne.s32.totalorder %v764, 0
        %vm797 = vcmp.ne.s32.totalorder %v765, 0
        %vm798 = vcmp.ne.s32.totalorder %v766, 0
        %vm799 = vcmp.ne.s32.totalorder %v767, 0
        %vm800 = vcmp.ne.s32.totalorder %v768, 0
        %vm801 = vcmp.ne.s32.totalorder %v769, 0
        %vm802 = vcmp.ne.s32.totalorder %v770, 0
        %vm803 = vcmp.ne.s32.totalorder %v771, 0
        %vm804 = vcmp.ne.s32.totalorder %v772, 0
        %vm805 = vcmp.ne.s32.totalorder %v773, 0
        %vm806 = vcmp.ne.s32.totalorder %v774, 0
        %vm807 = vcmp.ne.s32.totalorder %v775, 0
        %vm808 = vcmp.ne.s32.totalorder %v776, 0
        %vm809 = vcmp.ne.s32.totalorder %v777, 0
        %vm810 = vcmp.ne.s32.totalorder %v778, 0
        %v811 = vsel %vm779, %v595, -1e+30
        %v812 = vsel %vm780, %v596, -1e+30
        %v813 = vsel %vm781, %v597, -1e+30
        %v814 = vsel %vm782, %v598, -1e+30
        %v815 = vsel %vm783, %v599, -1e+30
        %v816 = vsel %vm784, %v600, -1e+30
        %v817 = vsel %vm785, %v601, -1e+30
        %v818 = vsel %vm786, %v602, -1e+30
        %v819 = vsel %vm787, %v603, -1e+30
        %v820 = vsel %vm788, %v604, -1e+30
        %v821 = vsel %vm789, %v605, -1e+30
        %v822 = vsel %vm790, %v606, -1e+30
        %v823 = vsel %vm791, %v607, -1e+30
        %v824 = vsel %vm792, %v608, -1e+30
        %v825 = vsel %vm793, %v609, -1e+30
        %v826 = vsel %vm794, %v610, -1e+30
        %v827 = vsel %vm795, %v611, -1e+30
        %v828 = vsel %vm796, %v612, -1e+30
        %v829 = vsel %vm797, %v613, -1e+30
        %v830 = vsel %vm798, %v614, -1e+30
        %v831 = vsel %vm799, %v615, -1e+30
        %v832 = vsel %vm800, %v616, -1e+30
        %v833 = vsel %vm801, %v617, -1e+30
        %v834 = vsel %vm802, %v618, -1e+30
        %v835 = vsel %vm803, %v619, -1e+30
        %v836 = vsel %vm804, %v620, -1e+30
        %v837 = vsel %vm805, %v621, -1e+30
        %v838 = vsel %vm806, %v622, -1e+30
        %v839 = vsel %vm807, %v623, -1e+30
        %v840 = vsel %vm808, %v624, -1e+30
        %v841 = vsel %vm809, %v625, -1e+30
        %v842 = vsel %vm810, %v626, -1e+30
        %v843 = vld [vmem:[#allocation2] sm:$0xff]
        %v844 = vld [vmem:[#allocation2 + $0x8] sm:$0xff]
        %v845 = vld [vmem:[#allocation2 + $0x10] sm:$0xff]
        %v846 = vld [vmem:[#allocation2 + $0x18] sm:$0xff]
        %v847 = vld [vmem:[#allocation2 + $0x20] sm:$0xff]
        %v848 = vld [vmem:[#allocation2 + $0x28] sm:$0xff]
        %v849 = vld [vmem:[#allocation2 + $0x30] sm:$0xff]
        %v850 = vld [vmem:[#allocation2 + $0x38] sm:$0xff]
        %v851 = vld [vmem:[#allocation2 + $0x40] sm:$0xff]
        %v852 = vld [vmem:[#allocation2 + $0x48] sm:$0xff]
        %v853 = vld [vmem:[#allocation2 + $0x50] sm:$0xff]
        %v854 = vld [vmem:[#allocation2 + $0x58] sm:$0xff]
        %v855 = vld [vmem:[#allocation2 + $0x60] sm:$0xff]
        %v856 = vld [vmem:[#allocation2 + $0x68] sm:$0xff]
        %v857 = vld [vmem:[#allocation2 + $0x70] sm:$0xff]
        %v858 = vld [vmem:[#allocation2 + $0x78] sm:$0xff]
        %v859 = vmax.f32 %v811, %v812
        %860 = vmax.xlane.f32.xlu0 %v859
        %v861 = vpop.xlane.xlu0 %860
        %v862 = vmax.f32 %v813, %v814
        %863 = vmax.xlane.f32.xlu0 %v862
        %v864 = vpop.xlane.xlu0 %863
        %v865 = vmax.f32 %v815, %v816
        %866 = vmax.xlane.f32.xlu0 %v865
        %v867 = vpop.xlane.xlu0 %866
        %v868 = vmax.f32 %v817, %v818
        %869 = vmax.xlane.f32.xlu0 %v868
        %v870 = vpop.xlane.xlu0 %869
        %v871 = vmax.f32 %v819, %v820
        %872 = vmax.xlane.f32.xlu0 %v871
        %v873 = vpop.xlane.xlu0 %872
        %v874 = vmax.f32 %v821, %v822
        %875 = vmax.xlane.f32.xlu0 %v874
        %v876 = vpop.xlane.xlu0 %875
        %v877 = vmax.f32 %v823, %v824
        %878 = vmax.xlane.f32.xlu0 %v877
        %v879 = vpop.xlane.xlu0 %878
        %v880 = vmax.f32 %v825, %v826
        %881 = vmax.xlane.f32.xlu0 %v880
        %v882 = vpop.xlane.xlu0 %881
        %v883 = vmax.f32 %v827, %v828
        %884 = vmax.xlane.f32.xlu0 %v883
        %v885 = vpop.xlane.xlu0 %884
        %v886 = vmax.f32 %v829, %v830
        %887 = vmax.xlane.f32.xlu0 %v886
        %v888 = vpop.xlane.xlu0 %887
        %v889 = vmax.f32 %v831, %v832
        %890 = vmax.xlane.f32.xlu0 %v889
        %v891 = vpop.xlane.xlu0 %890
        %v892 = vmax.f32 %v833, %v834
        %893 = vmax.xlane.f32.xlu0 %v892
        %v894 = vpop.xlane.xlu0 %893
        %v895 = vmax.f32 %v835, %v836
        %896 = vmax.xlane.f32.xlu0 %v895
        %v897 = vpop.xlane.xlu0 %896
        %v898 = vmax.f32 %v837, %v838
        %899 = vmax.xlane.f32.xlu0 %v898
        %v900 = vpop.xlane.xlu0 %899
        %v901 = vmax.f32 %v839, %v840
        %902 = vmax.xlane.f32.xlu0 %v901
        %v903 = vpop.xlane.xlu0 %902
        %v904 = vmax.f32 %v841, %v842
        %905 = vmax.xlane.f32.xlu0 %v904
        %v906 = vpop.xlane.xlu0 %905
        %v907 = vmax.f32 %v843, %v861
        %v908 = vmax.f32 %v844, %v864
        %v909 = vmax.f32 %v845, %v867
        %v910 = vmax.f32 %v846, %v870
        %v911 = vmax.f32 %v847, %v873
        %v912 = vmax.f32 %v848, %v876
        %v913 = vmax.f32 %v849, %v879
        %v914 = vmax.f32 %v850, %v882
        %v915 = vmax.f32 %v851, %v885
        %v916 = vmax.f32 %v852, %v888
        %v917 = vmax.f32 %v853, %v891
        %v918 = vmax.f32 %v854, %v894
        %v919 = vmax.f32 %v855, %v897
        %v920 = vmax.f32 %v856, %v900
        %v921 = vmax.f32 %v857, %v903
        %v922 = vmax.f32 %v858, %v906
        %v923 = vsub.f32 %v843, %v907
        %v924 = vsub.f32 %v844, %v908
        %v925 = vsub.f32 %v845, %v909
        %v926 = vsub.f32 %v846, %v910
        %v927 = vsub.f32 %v847, %v911
        %v928 = vsub.f32 %v848, %v912
        %v929 = vsub.f32 %v849, %v913
        %v930 = vsub.f32 %v850, %v914
        %v931 = vsub.f32 %v851, %v915
        %v932 = vsub.f32 %v852, %v916
        %v933 = vsub.f32 %v853, %v917
        %v934 = vsub.f32 %v854, %v918
        %v935 = vsub.f32 %v855, %v919
        %v936 = vsub.f32 %v856, %v920
        %v937 = vsub.f32 %v857, %v921
        %v938 = vsub.f32 %v858, %v922
        %v939 = vmul.f32 %v923, 1.442695
        %v940 = vpow.pop %v939
        %v941 = vmul.f32 %v924, 1.442695
        %v942 = vpow.pop %v941
        %v943 = vmul.f32 %v925, 1.442695
        %v944 = vpow.pop %v943
        %v945 = vmul.f32 %v926, 1.442695
        %v946 = vpow.pop %v945
        %v947 = vmul.f32 %v927, 1.442695
        %v948 = vpow.pop %v947
        %v949 = vmul.f32 %v928, 1.442695
        %v950 = vpow.pop %v949
        %v951 = vmul.f32 %v929, 1.442695
        %v952 = vpow.pop %v951
        %v953 = vmul.f32 %v930, 1.442695
        %v954 = vpow.pop %v953
        %v955 = vmul.f32 %v931, 1.442695
        %v956 = vpow.pop %v955
        %v957 = vmul.f32 %v932, 1.442695
        %v958 = vpow.pop %v957
        %v959 = vmul.f32 %v933, 1.442695
        %v960 = vpow.pop %v959
        %v961 = vmul.f32 %v934, 1.442695
        %v962 = vpow.pop %v961
        %v963 = vmul.f32 %v935, 1.442695
        %v964 = vpow.pop %v963
        %v965 = vmul.f32 %v936, 1.442695
        %v966 = vpow.pop %v965
        %v967 = vmul.f32 %v937, 1.442695
        %v968 = vpow.pop %v967
        %v969 = vmul.f32 %v938, 1.442695
        %v970 = vpow.pop %v969
        %972 = vset.pattern.permute.xlu0 0
        %973 = vperm.xlu0 %972, %v907
        %v974 = vpop.permute.xlu0 %973
        %977 = vset.pattern.permute.xlu0 0
        %978 = vperm.xlu0 %977, %v908
        %v979 = vpop.permute.xlu0 %978
        %982 = vset.pattern.permute.xlu0 0
        %983 = vperm.xlu0 %982, %v909
        %v984 = vpop.permute.xlu0 %983
        %987 = vset.pattern.permute.xlu0 0
        %988 = vperm.xlu0 %987, %v910
        %v989 = vpop.permute.xlu0 %988
        %992 = vset.pattern.permute.xlu0 0
        %993 = vperm.xlu0 %992, %v911
        %v994 = vpop.permute.xlu0 %993
        %997 = vset.pattern.permute.xlu0 0
        %998 = vperm.xlu0 %997, %v912
        %v999 = vpop.permute.xlu0 %998
        %1002 = vset.pattern.permute.xlu0 0
        %1003 = vperm.xlu0 %1002, %v913
        %v1004 = vpop.permute.xlu0 %1003
        %1007 = vset.pattern.permute.xlu0 0
        %1008 = vperm.xlu0 %1007, %v914
        %v1009 = vpop.permute.xlu0 %1008
        %1012 = vset.pattern.permute.xlu0 0
        %1013 = vperm.xlu0 %1012, %v915
        %v1014 = vpop.permute.xlu0 %1013
        %1017 = vset.pattern.permute.xlu0 0
        %1018 = vperm.xlu0 %1017, %v916
        %v1019 = vpop.permute.xlu0 %1018
        %1022 = vset.pattern.permute.xlu0 0
        %1023 = vperm.xlu0 %1022, %v917
        %v1024 = vpop.permute.xlu0 %1023
        %1027 = vset.pattern.permute.xlu0 0
        %1028 = vperm.xlu0 %1027, %v918
        %v1029 = vpop.permute.xlu0 %1028
        %1032 = vset.pattern.permute.xlu0 0
        %1033 = vperm.xlu0 %1032, %v919
        %v1034 = vpop.permute.xlu0 %1033
        %1037 = vset.pattern.permute.xlu0 0
        %1038 = vperm.xlu0 %1037, %v920
        %v1039 = vpop.permute.xlu0 %1038
        %1042 = vset.pattern.permute.xlu0 0
        %1043 = vperm.xlu0 %1042, %v921
        %v1044 = vpop.permute.xlu0 %1043
        %1047 = vset.pattern.permute.xlu0 0
        %1048 = vperm.xlu0 %1047, %v922
        %v1049 = vpop.permute.xlu0 %1048
        %v1051 = vsub.f32 %v811, %v974
        %v1052 = vsub.f32 %v812, %v974
        %v1053 = vsub.f32 %v813, %v979
        %v1054 = vsub.f32 %v814, %v979
        %v1055 = vsub.f32 %v815, %v984
        %v1056 = vsub.f32 %v816, %v984
        %v1057 = vsub.f32 %v817, %v989
        %v1058 = vsub.f32 %v818, %v989
        %v1059 = vsub.f32 %v819, %v994
        %v1060 = vsub.f32 %v820, %v994
        %v1061 = vsub.f32 %v821, %v999
        %v1062 = vsub.f32 %v822, %v999
        %v1063 = vsub.f32 %v823, %v1004
        %v1064 = vsub.f32 %v824, %v1004
        %v1065 = vsub.f32 %v825, %v1009
        %v1066 = vsub.f32 %v826, %v1009
        %v1067 = vsub.f32 %v827, %v1014
        %v1068 = vsub.f32 %v828, %v1014
        %v1069 = vsub.f32 %v829, %v1019
        %v1070 = vsub.f32 %v830, %v1019
        %v1071 = vsub.f32 %v831, %v1024
        %v1072 = vsub.f32 %v832, %v1024
        %v1073 = vsub.f32 %v833, %v1029
        %v1074 = vsub.f32 %v834, %v1029
        %v1075 = vsub.f32 %v835, %v1034
        %v1076 = vsub.f32 %v836, %v1034
        %v1077 = vsub.f32 %v837, %v1039
        %v1078 = vsub.f32 %v838, %v1039
        %v1079 = vsub.f32 %v839, %v1044
        %v1080 = vsub.f32 %v840, %v1044
        %v1081 = vsub.f32 %v841, %v1049
        %v1082 = vsub.f32 %v842, %v1049
        %v1083 = vmul.f32 %v1051, 1.442695
        %v1084 = vpow.pop %v1083
        %v1085 = vmul.f32 %v1052, 1.442695
        %v1086 = vpow.pop %v1085
        %v1087 = vmul.f32 %v1053, 1.442695
        %v1088 = vpow.pop %v1087
        %v1089 = vmul.f32 %v1054, 1.442695
        %v1090 = vpow.pop %v1089
        %v1091 = vmul.f32 %v1055, 1.442695
        %v1092 = vpow.pop %v1091
        %v1093 = vmul.f32 %v1056, 1.442695
        %v1094 = vpow.pop %v1093
        %v1095 = vmul.f32 %v1057, 1.442695
        %v1096 = vpow.pop %v1095
        %v1097 = vmul.f32 %v1058, 1.442695
        %v1098 = vpow.pop %v1097
        %v1099 = vmul.f32 %v1059, 1.442695
        %v1100 = vpow.pop %v1099
        %v1101 = vmul.f32 %v1060, 1.442695
        %v1102 = vpow.pop %v1101
        %v1103 = vmul.f32 %v1061, 1.442695
        %v1104 = vpow.pop %v1103
        %v1105 = vmul.f32 %v1062, 1.442695
        %v1106 = vpow.pop %v1105
        %v1107 = vmul.f32 %v1063, 1.442695
        %v1108 = vpow.pop %v1107
        %v1109 = vmul.f32 %v1064, 1.442695
        %v1110 = vpow.pop %v1109
        %v1111 = vmul.f32 %v1065, 1.442695
        %v1112 = vpow.pop %v1111
        %v1113 = vmul.f32 %v1066, 1.442695
        %v1114 = vpow.pop %v1113
        %v1115 = vmul.f32 %v1067, 1.442695
        %v1116 = vpow.pop %v1115
        %v1117 = vmul.f32 %v1068, 1.442695
        %v1118 = vpow.pop %v1117
        %v1119 = vmul.f32 %v1069, 1.442695
        %v1120 = vpow.pop %v1119
        %v1121 = vmul.f32 %v1070, 1.442695
        %v1122 = vpow.pop %v1121
        %v1123 = vmul.f32 %v1071, 1.442695
        %v1124 = vpow.pop %v1123
        %v1125 = vmul.f32 %v1072, 1.442695
        %v1126 = vpow.pop %v1125
        %v1127 = vmul.f32 %v1073, 1.442695
        %v1128 = vpow.pop %v1127
        %v1129 = vmul.f32 %v1074, 1.442695
        %v1130 = vpow.pop %v1129
        %v1131 = vmul.f32 %v1075, 1.442695
        %v1132 = vpow.pop %v1131
        %v1133 = vmul.f32 %v1076, 1.442695
        %v1134 = vpow.pop %v1133
        %v1135 = vmul.f32 %v1077, 1.442695
        %v1136 = vpow.pop %v1135
        %v1137 = vmul.f32 %v1078, 1.442695
        %v1138 = vpow.pop %v1137
        %v1139 = vmul.f32 %v1079, 1.442695
        %v1140 = vpow.pop %v1139
        %v1141 = vmul.f32 %v1080, 1.442695
        %v1142 = vpow.pop %v1141
        %v1143 = vmul.f32 %v1081, 1.442695
        %v1144 = vpow.pop %v1143
        %v1145 = vmul.f32 %v1082, 1.442695
        %v1146 = vpow.pop %v1145
        %v1147 = vld [vmem:[#allocation3] sm:$0xff]
        %v1148 = vld [vmem:[#allocation3 + $0x8] sm:$0xff]
        %v1149 = vld [vmem:[#allocation3 + $0x10] sm:$0xff]
        %v1150 = vld [vmem:[#allocation3 + $0x18] sm:$0xff]
        %v1151 = vld [vmem:[#allocation3 + $0x20] sm:$0xff]
        %v1152 = vld [vmem:[#allocation3 + $0x28] sm:$0xff]
        %v1153 = vld [vmem:[#allocation3 + $0x30] sm:$0xff]
        %v1154 = vld [vmem:[#allocation3 + $0x38] sm:$0xff]
        %v1155 = vld [vmem:[#allocation3 + $0x40] sm:$0xff]
        %v1156 = vld [vmem:[#allocation3 + $0x48] sm:$0xff]
        %v1157 = vld [vmem:[#allocation3 + $0x50] sm:$0xff]
        %v1158 = vld [vmem:[#allocation3 + $0x58] sm:$0xff]
        %v1159 = vld [vmem:[#allocation3 + $0x60] sm:$0xff]
        %v1160 = vld [vmem:[#allocation3 + $0x68] sm:$0xff]
        %v1161 = vld [vmem:[#allocation3 + $0x70] sm:$0xff]
        %v1162 = vld [vmem:[#allocation3 + $0x78] sm:$0xff]
        %v1163 = vmul.f32 %v940, %v1147
        %v1164 = vmul.f32 %v942, %v1148
        %v1165 = vmul.f32 %v944, %v1149
        %v1166 = vmul.f32 %v946, %v1150
        %v1167 = vmul.f32 %v948, %v1151
        %v1168 = vmul.f32 %v950, %v1152
        %v1169 = vmul.f32 %v952, %v1153
        %v1170 = vmul.f32 %v954, %v1154
        %v1171 = vmul.f32 %v956, %v1155
        %v1172 = vmul.f32 %v958, %v1156
        %v1173 = vmul.f32 %v960, %v1157
        %v1174 = vmul.f32 %v962, %v1158
        %v1175 = vmul.f32 %v964, %v1159
        %v1176 = vmul.f32 %v966, %v1160
        %v1177 = vmul.f32 %v968, %v1161
        %v1178 = vmul.f32 %v970, %v1162
        %v1179 = vadd.f32 %v1084, %v1086
        %1180 = vadd.xlane.f32.xlu0 %v1179
        %v1181 = vpop.xlane.xlu0 %1180
        %v1182 = vadd.f32 %v1088, %v1090
        %1183 = vadd.xlane.f32.xlu0 %v1182
        %v1184 = vpop.xlane.xlu0 %1183
        %v1185 = vadd.f32 %v1092, %v1094
        %1186 = vadd.xlane.f32.xlu0 %v1185
        %v1187 = vpop.xlane.xlu0 %1186
        %v1188 = vadd.f32 %v1096, %v1098
        %1189 = vadd.xlane.f32.xlu0 %v1188
        %v1190 = vpop.xlane.xlu0 %1189
        %v1191 = vadd.f32 %v1100, %v1102
        %1192 = vadd.xlane.f32.xlu0 %v1191
        %v1193 = vpop.xlane.xlu0 %1192
        %v1194 = vadd.f32 %v1104, %v1106
        %1195 = vadd.xlane.f32.xlu0 %v1194
        %v1196 = vpop.xlane.xlu0 %1195
        %v1197 = vadd.f32 %v1108, %v1110
        %1198 = vadd.xlane.f32.xlu0 %v1197
        %v1199 = vpop.xlane.xlu0 %1198
        %v1200 = vadd.f32 %v1112, %v1114
        %1201 = vadd.xlane.f32.xlu0 %v1200
        %v1202 = vpop.xlane.xlu0 %1201
        %v1203 = vadd.f32 %v1116, %v1118
        %1204 = vadd.xlane.f32.xlu0 %v1203
        %v1205 = vpop.xlane.xlu0 %1204
        %v1206 = vadd.f32 %v1120, %v1122
        %1207 = vadd.xlane.f32.xlu0 %v1206
        %v1208 = vpop.xlane.xlu0 %1207
        %v1209 = vadd.f32 %v1124, %v1126
        %1210 = vadd.xlane.f32.xlu0 %v1209
        %v1211 = vpop.xlane.xlu0 %1210
        %v1212 = vadd.f32 %v1128, %v1130
        %1213 = vadd.xlane.f32.xlu0 %v1212
        %v1214 = vpop.xlane.xlu0 %1213
        %v1215 = vadd.f32 %v1132, %v1134
        %1216 = vadd.xlane.f32.xlu0 %v1215
        %v1217 = vpop.xlane.xlu0 %1216
        %v1218 = vadd.f32 %v1136, %v1138
        %1219 = vadd.xlane.f32.xlu0 %v1218
        %v1220 = vpop.xlane.xlu0 %1219
        %v1221 = vadd.f32 %v1140, %v1142
        %1222 = vadd.xlane.f32.xlu0 %v1221
        %v1223 = vpop.xlane.xlu0 %1222
        %v1224 = vadd.f32 %v1144, %v1146
        %1225 = vadd.xlane.f32.xlu0 %v1224
        %v1226 = vpop.xlane.xlu0 %1225
        %v1227 = vadd.f32 %v1163, %v1181
        %v1228 = vadd.f32 %v1164, %v1184
        %v1229 = vadd.f32 %v1165, %v1187
        %v1230 = vadd.f32 %v1166, %v1190
        %v1231 = vadd.f32 %v1167, %v1193
        %v1232 = vadd.f32 %v1168, %v1196
        %v1233 = vadd.f32 %v1169, %v1199
        %v1234 = vadd.f32 %v1170, %v1202
        %v1235 = vadd.f32 %v1171, %v1205
        %v1236 = vadd.f32 %v1172, %v1208
        %v1237 = vadd.f32 %v1173, %v1211
        %v1238 = vadd.f32 %v1174, %v1214
        %v1239 = vadd.f32 %v1175, %v1217
        %v1240 = vadd.f32 %v1176, %v1220
        %v1241 = vadd.f32 %v1177, %v1223
        %v1242 = vadd.f32 %v1178, %v1226
        %vm1243 = vcmask 7168
        %1244 = vst.msk [vmem:[#allocation3] sm:$0xff] %vm1243, %v1227
        %1245 = vst.msk [vmem:[#allocation3 + $0x8] sm:$0xff] %vm1243, %v1228
        %1246 = vst.msk [vmem:[#allocation3 + $0x10] sm:$0xff] %vm1243, %v1229
        %1247 = vst.msk [vmem:[#allocation3 + $0x18] sm:$0xff] %vm1243, %v1230
        %1248 = vst.msk [vmem:[#allocation3 + $0x20] sm:$0xff] %vm1243, %v1231
        %1249 = vst.msk [vmem:[#allocation3 + $0x28] sm:$0xff] %vm1243, %v1232
        %1250 = vst.msk [vmem:[#allocation3 + $0x30] sm:$0xff] %vm1243, %v1233
        %1251 = vst.msk [vmem:[#allocation3 + $0x38] sm:$0xff] %vm1243, %v1234
        %1252 = vst.msk [vmem:[#allocation3 + $0x40] sm:$0xff] %vm1243, %v1235
        %1253 = vst.msk [vmem:[#allocation3 + $0x48] sm:$0xff] %vm1243, %v1236
        %1254 = vst.msk [vmem:[#allocation3 + $0x50] sm:$0xff] %vm1243, %v1237
        %1255 = vst.msk [vmem:[#allocation3 + $0x58] sm:$0xff] %vm1243, %v1238
        %1256 = vst.msk [vmem:[#allocation3 + $0x60] sm:$0xff] %vm1243, %v1239
        %1257 = vst.msk [vmem:[#allocation3 + $0x68] sm:$0xff] %vm1243, %v1240
        %1258 = vst.msk [vmem:[#allocation3 + $0x70] sm:$0xff] %vm1243, %v1241
        %1259 = vst.msk [vmem:[#allocation3 + $0x78] sm:$0xff] %vm1243, %v1242
        %v1260 = vld [vmem:[#allocation4] sm:$0xff]
        %v1261 = vld [vmem:[#allocation4 + $0x8] sm:$0xff]
        %v1262 = vld [vmem:[#allocation4 + $0x10] sm:$0xff]
        %v1263 = vld [vmem:[#allocation4 + $0x18] sm:$0xff]
        %v1264 = vld [vmem:[#allocation4 + $0x20] sm:$0xff]
        %v1265 = vld [vmem:[#allocation4 + $0x28] sm:$0xff]
        %v1266 = vld [vmem:[#allocation4 + $0x30] sm:$0xff]
        %v1267 = vld [vmem:[#allocation4 + $0x38] sm:$0xff]
        %v1268 = vld [vmem:[#allocation4 + $0x40] sm:$0xff]
        %v1269 = vld [vmem:[#allocation4 + $0x48] sm:$0xff]
        %v1270 = vld [vmem:[#allocation4 + $0x50] sm:$0xff]
        %v1271 = vld [vmem:[#allocation4 + $0x58] sm:$0xff]
        %v1272 = vld [vmem:[#allocation4 + $0x60] sm:$0xff]
        %v1273 = vld [vmem:[#allocation4 + $0x68] sm:$0xff]
        %v1274 = vld [vmem:[#allocation4 + $0x70] sm:$0xff]
        %v1275 = vld [vmem:[#allocation4 + $0x78] sm:$0xff]
        %1277 = vset.pattern.permute.xlu0 0
        %1278 = vperm.xlu0 %1277, %v940
        %v1279 = vpop.permute.xlu0 %1278
        %1282 = vset.pattern.permute.xlu0 0
        %1283 = vperm.xlu0 %1282, %v942
        %v1284 = vpop.permute.xlu0 %1283
        %1287 = vset.pattern.permute.xlu0 0
        %1288 = vperm.xlu0 %1287, %v944
        %v1289 = vpop.permute.xlu0 %1288
        %1292 = vset.pattern.permute.xlu0 0
        %1293 = vperm.xlu0 %1292, %v946
        %v1294 = vpop.permute.xlu0 %1293
        %1297 = vset.pattern.permute.xlu0 0
        %1298 = vperm.xlu0 %1297, %v948
        %v1299 = vpop.permute.xlu0 %1298
        %1302 = vset.pattern.permute.xlu0 0
        %1303 = vperm.xlu0 %1302, %v950
        %v1304 = vpop.permute.xlu0 %1303
        %1307 = vset.pattern.permute.xlu0 0
        %1308 = vperm.xlu0 %1307, %v952
        %v1309 = vpop.permute.xlu0 %1308
        %1312 = vset.pattern.permute.xlu0 0
        %1313 = vperm.xlu0 %1312, %v954
        %v1314 = vpop.permute.xlu0 %1313
        %1317 = vset.pattern.permute.xlu0 0
        %1318 = vperm.xlu0 %1317, %v956
        %v1319 = vpop.permute.xlu0 %1318
        %1322 = vset.pattern.permute.xlu0 0
        %1323 = vperm.xlu0 %1322, %v958
        %v1324 = vpop.permute.xlu0 %1323
        %1327 = vset.pattern.permute.xlu0 0
        %1328 = vperm.xlu0 %1327, %v960
        %v1329 = vpop.permute.xlu0 %1328
        %1332 = vset.pattern.permute.xlu0 0
        %1333 = vperm.xlu0 %1332, %v962
        %v1334 = vpop.permute.xlu0 %1333
        %1337 = vset.pattern.permute.xlu0 0
        %1338 = vperm.xlu0 %1337, %v964
        %v1339 = vpop.permute.xlu0 %1338
        %1342 = vset.pattern.permute.xlu0 0
        %1343 = vperm.xlu0 %1342, %v966
        %v1344 = vpop.permute.xlu0 %1343
        %1347 = vset.pattern.permute.xlu0 0
        %1348 = vperm.xlu0 %1347, %v968
        %v1349 = vpop.permute.xlu0 %1348
        %1352 = vset.pattern.permute.xlu0 0
        %1353 = vperm.xlu0 %1352, %v970
        %v1354 = vpop.permute.xlu0 %1353
        %v1356 = vmul.f32 %v1279, %v1260
        %v1357 = vmul.f32 %v1284, %v1261
        %v1358 = vmul.f32 %v1289, %v1262
        %v1359 = vmul.f32 %v1294, %v1263
        %v1360 = vmul.f32 %v1299, %v1264
        %v1361 = vmul.f32 %v1304, %v1265
        %v1362 = vmul.f32 %v1309, %v1266
        %v1363 = vmul.f32 %v1314, %v1267
        %v1364 = vmul.f32 %v1319, %v1268
        %v1365 = vmul.f32 %v1324, %v1269
        %v1366 = vmul.f32 %v1329, %v1270
        %v1367 = vmul.f32 %v1334, %v1271
        %v1368 = vmul.f32 %v1339, %v1272
        %v1369 = vmul.f32 %v1344, %v1273
        %v1370 = vmul.f32 %v1349, %v1274
        %v1371 = vmul.f32 %v1354, %v1275
        %v1372 = vpack.c.bf16 %v1088, %v1084
        %v1373 = vpack.c.bf16 %v1090, %v1086
        %v1374 = vpack.c.bf16 %v1096, %v1092
        %v1375 = vpack.c.bf16 %v1098, %v1094
        %v1376 = vpack.c.bf16 %v1104, %v1100
        %v1377 = vpack.c.bf16 %v1106, %v1102
        %v1378 = vpack.c.bf16 %v1112, %v1108
        %v1379 = vpack.c.bf16 %v1114, %v1110
        %v1380 = vpack.c.bf16 %v1120, %v1116
        %v1381 = vpack.c.bf16 %v1122, %v1118
        %v1382 = vpack.c.bf16 %v1128, %v1124
        %v1383 = vpack.c.bf16 %v1130, %v1126
        %v1384 = vpack.c.bf16 %v1136, %v1132
        %v1385 = vpack.c.bf16 %v1138, %v1134
        %v1386 = vpack.c.bf16 %v1144, %v1140
        %v1387 = vpack.c.bf16 %v1146, %v1142
        %v1388 = vld [vmem:[%s321] sm:$0xf]
        %v1389 = vld [vmem:[%s321 + $0x4] sm:$0xf]
        %v1390 = vld [vmem:[%s321 + $0x8] sm:$0xf]
        %v1391 = vld [vmem:[%s321 + $0xc] sm:$0xf]
        %v1392 = vld [vmem:[%s321 + $0x10] sm:$0xf]
        %v1393 = vld [vmem:[%s321 + $0x14] sm:$0xf]
        %v1394 = vld [vmem:[%s321 + $0x18] sm:$0xf]
        %v1395 = vld [vmem:[%s321 + $0x1c] sm:$0xf]
        %v1396 = vld [vmem:[%s321 + $0x20] sm:$0xf]
        %v1397 = vld [vmem:[%s321 + $0x24] sm:$0xf]
        %v1398 = vld [vmem:[%s321 + $0x28] sm:$0xf]
        %v1399 = vld [vmem:[%s321 + $0x2c] sm:$0xf]
        %v1400 = vld [vmem:[%s321 + $0x30] sm:$0xf]
        %v1401 = vld [vmem:[%s321 + $0x34] sm:$0xf]
        %v1402 = vld [vmem:[%s321 + $0x38] sm:$0xf]
        %v1403 = vld [vmem:[%s321 + $0x3c] sm:$0xf]
        %v1404 = vld [vmem:[%s321 + $0x40] sm:$0xf]
        %v1405 = vld [vmem:[%s321 + $0x44] sm:$0xf]
        %v1406 = vld [vmem:[%s321 + $0x48] sm:$0xf]
        %v1407 = vld [vmem:[%s321 + $0x4c] sm:$0xf]
        %v1408 = vld [vmem:[%s321 + $0x50] sm:$0xf]
        %v1409 = vld [vmem:[%s321 + $0x54] sm:$0xf]
        %v1410 = vld [vmem:[%s321 + $0x58] sm:$0xf]
        %v1411 = vld [vmem:[%s321 + $0x5c] sm:$0xf]
        %v1412 = vld [vmem:[%s321 + $0x60] sm:$0xf]
        %v1413 = vld [vmem:[%s321 + $0x64] sm:$0xf]
        %v1414 = vld [vmem:[%s321 + $0x68] sm:$0xf]
        %v1415 = vld [vmem:[%s321 + $0x6c] sm:$0xf]
        %v1416 = vld [vmem:[%s321 + $0x70] sm:$0xf]
        %v1417 = vld [vmem:[%s321 + $0x74] sm:$0xf]
        %v1418 = vld [vmem:[%s321 + $0x78] sm:$0xf]
        %v1419 = vld [vmem:[%s321 + $0x7c] sm:$0xf]
        %v1452 = vunpack.c.l.b16 %v1388
        %v1453 = vunpack.c.l.b16 %v1389
        %v1454 = vunpack.c.l.b16 %v1390
        %v1455 = vunpack.c.l.b16 %v1391
        %v1456 = vunpack.c.l.b16 %v1392
        %v1457 = vunpack.c.l.b16 %v1393
        %v1458 = vunpack.c.l.b16 %v1394
        %v1459 = vunpack.c.l.b16 %v1395
        %v1460 = vunpack.c.l.b16 %v1396
        %v1461 = vunpack.c.l.b16 %v1397
        %v1462 = vunpack.c.l.b16 %v1398
        %v1463 = vunpack.c.l.b16 %v1399
        %v1464 = vunpack.c.l.b16 %v1400
        %v1465 = vunpack.c.l.b16 %v1401
        %v1466 = vunpack.c.l.b16 %v1402
        %v1467 = vunpack.c.l.b16 %v1403
        %v1468 = vunpack.c.l.b16 %v1404
        %v1469 = vunpack.c.l.b16 %v1405
        %v1470 = vunpack.c.l.b16 %v1406
        %v1471 = vunpack.c.l.b16 %v1407
        %v1472 = vunpack.c.l.b16 %v1408
        %v1473 = vunpack.c.l.b16 %v1409
        %v1474 = vunpack.c.l.b16 %v1410
        %v1475 = vunpack.c.l.b16 %v1411
        %v1476 = vunpack.c.l.b16 %v1412
        %v1477 = vunpack.c.l.b16 %v1413
        %v1478 = vunpack.c.l.b16 %v1414
        %v1479 = vunpack.c.l.b16 %v1415
        %v1480 = vunpack.c.l.b16 %v1416
        %v1481 = vunpack.c.l.b16 %v1417
        %v1482 = vunpack.c.l.b16 %v1418
        %v1483 = vunpack.c.l.b16 %v1419
        %v1484 = vpack.c.b16 %v1453, %v1452
        %v1485 = vpack.c.b16 %v1455, %v1454
        %v1486 = vpack.c.b16 %v1457, %v1456
        %v1487 = vpack.c.b16 %v1459, %v1458
        %v1488 = vpack.c.b16 %v1461, %v1460
        %v1489 = vpack.c.b16 %v1463, %v1462
        %v1490 = vpack.c.b16 %v1465, %v1464
        %v1491 = vpack.c.b16 %v1467, %v1466
        %v1492 = vpack.c.b16 %v1469, %v1468
        %v1493 = vpack.c.b16 %v1471, %v1470
        %v1494 = vpack.c.b16 %v1473, %v1472
        %v1495 = vpack.c.b16 %v1475, %v1474
        %v1496 = vpack.c.b16 %v1477, %v1476
        %v1497 = vpack.c.b16 %v1479, %v1478
        %v1498 = vpack.c.b16 %v1481, %v1480
        %v1499 = vpack.c.b16 %v1483, %v1482
        %1516 = vmatprep.subr.bf16.mxu0 0
        %1517 = vmatpush1.bf16.msra.mxu0 %v1484
        %1518 = vmatprep.subr.bf16.mxu0 0
        %1519 = vmatpush1.bf16.msra.mxu0 %v1485
        %1520 = vmatprep.subr.bf16.mxu0 0
        %1521 = vmatpush1.bf16.msra.mxu0 %v1486
        %1522 = vmatprep.subr.bf16.mxu0 0
        %1523 = vmatpush1.bf16.msra.mxu0 %v1487
        %1524 = vmatprep.subr.bf16.mxu0 0
        %1525 = vmatpush1.bf16.msra.mxu0 %v1488
        %1526 = vmatprep.subr.bf16.mxu0 0
        %1527 = vmatpush1.bf16.msra.mxu0 %v1489
        %1528 = vmatprep.subr.bf16.mxu0 0
        %1529 = vmatpush1.bf16.msra.mxu0 %v1490
        %1530 = vmatprep.subr.bf16.mxu0 0
        %1531 = vmatpush1.bf16.msra.mxu0 %v1491
        %1532 = vmatprep.subr.bf16.mxu0 0
        %1533 = vmatpush1.bf16.msra.mxu0 %v1492
        %1534 = vmatprep.subr.bf16.mxu0 0
        %1535 = vmatpush1.bf16.msra.mxu0 %v1493
        %1536 = vmatprep.subr.bf16.mxu0 0
        %1537 = vmatpush1.bf16.msra.mxu0 %v1494
        %1538 = vmatprep.subr.bf16.mxu0 0
        %1539 = vmatpush1.bf16.msra.mxu0 %v1495
        %1540 = vmatprep.subr.bf16.mxu0 0
        %1541 = vmatpush1.bf16.msra.mxu0 %v1496
        %1542 = vmatprep.subr.bf16.mxu0 0
        %1543 = vmatpush1.bf16.msra.mxu0 %v1497
        %1544 = vmatprep.subr.bf16.mxu0 0
        %1545 = vmatpush1.bf16.msra.mxu0 %v1498
        %1546 = vmatprep.subr.bf16.mxu0 0
        %1547 = vmatpush1.bf16.msra.mxu0 %v1499
        %1548 = vmatprep.mubr.bf16.mxu0 %v1373
        %1549 = vmatmul.mubr.bf16.gmra.mrb[0].mxu0 %v1372
        %v1550 = vpop.f32.mrb[0].mxu0
        %v1551 = vadd.f32 0.0, %v1550
        %v1552 = vpop.f32.mrb[0].mxu0
        %v1553 = vpop.f32.mrb[0].mxu0
        %v1554 = vadd.f32 0.0, %v1553
        %v1555 = vpop.f32.mrb[0].mxu0
        %1556 = vmatprep.mubr.bf16.mxu0 %v1375
        %1557 = vmatmul.mubr.bf16.gmra.mrb[0].mxu0 %v1374
        %v1558 = vpop.f32.mrb[0].mxu0
        %v1559 = vadd.f32 0.0, %v1558
        %v1560 = vpop.f32.mrb[0].mxu0
        %v1561 = vpop.f32.mrb[0].mxu0
        %v1562 = vadd.f32 0.0, %v1561
        %v1563 = vpop.f32.mrb[0].mxu0
        %1564 = vmatprep.mubr.bf16.mxu0 %v1377
        %1565 = vmatmul.mubr.bf16.gmra.mrb[0].mxu0 %v1376
        %v1566 = vpop.f32.mrb[0].mxu0
        %v1567 = vadd.f32 0.0, %v1566
        %v1568 = vpop.f32.mrb[0].mxu0
        %v1569 = vpop.f32.mrb[0].mxu0
        %v1570 = vadd.f32 0.0, %v1569
        %v1571 = vpop.f32.mrb[0].mxu0
        %1572 = vmatprep.mubr.bf16.mxu0 %v1379
        %1573 = vmatmul.mubr.bf16.gmra.mrb[0].mxu0 %v1378
        %v1574 = vpop.f32.mrb[0].mxu0
        %v1575 = vadd.f32 0.0, %v1574
        %v1576 = vpop.f32.mrb[0].mxu0
        %v1577 = vpop.f32.mrb[0].mxu0
        %v1578 = vadd.f32 0.0, %v1577
        %v1579 = vpop.f32.mrb[0].mxu0
        %1580 = vmatprep.mubr.bf16.mxu0 %v1381
        %1581 = vmatmul.mubr.bf16.gmra.mrb[0].mxu0 %v1380
        %v1582 = vpop.f32.mrb[0].mxu0
        %v1583 = vadd.f32 0.0, %v1582
        %v1584 = vpop.f32.mrb[0].mxu0
        %v1585 = vpop.f32.mrb[0].mxu0
        %v1586 = vadd.f32 0.0, %v1585
        %v1587 = vpop.f32.mrb[0].mxu0
        %1588 = vmatprep.mubr.bf16.mxu0 %v1383
        %1589 = vmatmul.mubr.bf16.gmra.mrb[0].mxu0 %v1382
        %v1590 = vpop.f32.mrb[0].mxu0
        %v1591 = vadd.f32 0.0, %v1590
        %v1592 = vpop.f32.mrb[0].mxu0
        %v1593 = vpop.f32.mrb[0].mxu0
        %v1594 = vadd.f32 0.0, %v1593
        %v1595 = vpop.f32.mrb[0].mxu0
        %1596 = vmatprep.mubr.bf16.mxu0 %v1385
        %1597 = vmatmul.mubr.bf16.gmra.mrb[0].mxu0 %v1384
        %v1598 = vpop.f32.mrb[0].mxu0
        %v1599 = vadd.f32 0.0, %v1598
        %v1600 = vpop.f32.mrb[0].mxu0
        %v1601 = vpop.f32.mrb[0].mxu0
        %v1602 = vadd.f32 0.0, %v1601
        %v1603 = vpop.f32.mrb[0].mxu0
        %1604 = vmatprep.mubr.bf16.mxu0 %v1387
        %1605 = vmatmul.mubr.bf16.gmra.mrb[0].mxu0 %v1386
        %v1606 = vpop.f32.mrb[0].mxu0
        %v1607 = vadd.f32 0.0, %v1606
        %v1608 = vpop.f32.mrb[0].mxu0
        %v1609 = vpop.f32.mrb[0].mxu0
        %v1610 = vadd.f32 0.0, %v1609
        %v1611 = vpop.f32.mrb[0].mxu0
        %1612 = vdwg.mxu0
        %v1613 = vadd.f32 %v1356, %v1551
        %v1614 = vadd.f32 %v1357, %v1554
        %v1615 = vadd.f32 %v1358, %v1559
        %v1616 = vadd.f32 %v1359, %v1562
        %v1617 = vadd.f32 %v1360, %v1567
        %v1618 = vadd.f32 %v1361, %v1570
        %v1619 = vadd.f32 %v1362, %v1575
        %v1620 = vadd.f32 %v1363, %v1578
        %v1621 = vadd.f32 %v1364, %v1583
        %v1622 = vadd.f32 %v1365, %v1586
        %v1623 = vadd.f32 %v1366, %v1591
        %v1624 = vadd.f32 %v1367, %v1594
        %v1625 = vadd.f32 %v1368, %v1599
        %v1626 = vadd.f32 %v1369, %v1602
        %v1627 = vadd.f32 %v1370, %v1607
        %v1628 = vadd.f32 %v1371, %v1610
        %1629 = vst [vmem:[#allocation4] sm:$0xff] %v1613
        %1630 = vst [vmem:[#allocation4 + $0x8] sm:$0xff] %v1614
        %1631 = vst [vmem:[#allocation4 + $0x10] sm:$0xff] %v1615
        %1632 = vst [vmem:[#allocation4 + $0x18] sm:$0xff] %v1616
        %1633 = vst [vmem:[#allocation4 + $0x20] sm:$0xff] %v1617
        %1634 = vst [vmem:[#allocation4 + $0x28] sm:$0xff] %v1618
        %1635 = vst [vmem:[#allocation4 + $0x30] sm:$0xff] %v1619
        %1636 = vst [vmem:[#allocation4 + $0x38] sm:$0xff] %v1620
        %1637 = vst [vmem:[#allocation4 + $0x40] sm:$0xff] %v1621
        %1638 = vst [vmem:[#allocation4 + $0x48] sm:$0xff] %v1622
        %1639 = vst [vmem:[#allocation4 + $0x50] sm:$0xff] %v1623
        %1640 = vst [vmem:[#allocation4 + $0x58] sm:$0xff] %v1624
        %1641 = vst [vmem:[#allocation4 + $0x60] sm:$0xff] %v1625
        %1642 = vst [vmem:[#allocation4 + $0x68] sm:$0xff] %v1626
        %1643 = vst [vmem:[#allocation4 + $0x70] sm:$0xff] %v1627
        %1644 = vst [vmem:[#allocation4 + $0x78] sm:$0xff] %v1628
        %1645 = vst.msk [vmem:[#allocation2] sm:$0xff] %vm1243, %v907
        %1646 = vst.msk [vmem:[#allocation2 + $0x8] sm:$0xff] %vm1243, %v908
        %1647 = vst.msk [vmem:[#allocation2 + $0x10] sm:$0xff] %vm1243, %v909
        %1648 = vst.msk [vmem:[#allocation2 + $0x18] sm:$0xff] %vm1243, %v910
        %1649 = vst.msk [vmem:[#allocation2 + $0x20] sm:$0xff] %vm1243, %v911
        %1650 = vst.msk [vmem:[#allocation2 + $0x28] sm:$0xff] %vm1243, %v912
        %1651 = vst.msk [vmem:[#allocation2 + $0x30] sm:$0xff] %vm1243, %v913
        %1652 = vst.msk [vmem:[#allocation2 + $0x38] sm:$0xff] %vm1243, %v914
        %1653 = vst.msk [vmem:[#allocation2 + $0x40] sm:$0xff] %vm1243, %v915
        %1654 = vst.msk [vmem:[#allocation2 + $0x48] sm:$0xff] %vm1243, %v916
        %1655 = vst.msk [vmem:[#allocation2 + $0x50] sm:$0xff] %vm1243, %v917
        %1656 = vst.msk [vmem:[#allocation2 + $0x58] sm:$0xff] %vm1243, %v918
        %1657 = vst.msk [vmem:[#allocation2 + $0x60] sm:$0xff] %vm1243, %v919
        %1658 = vst.msk [vmem:[#allocation2 + $0x68] sm:$0xff] %vm1243, %v920
        %1659 = vst.msk [vmem:[#allocation2 + $0x70] sm:$0xff] %vm1243, %v921
        %1660 = vst.msk [vmem:[#allocation2 + $0x78] sm:$0xff] %vm1243, %v922
      $region48: #{gatae_forward.7} parent=39 // pred_fallthru
        _
      // Predicated region
      $region49: #{gatae_forward.7} parent=39 // pred_check
        %p1661 = pneg %p332
      $region50: #{gatae_forward.7} parent=39 // pred_check_branch
        %1663 = sbr.rel (%p1661) target = $region52
      $region51: #{gatae_forward.7} parent=39 // pred_region
        %v1664 = vld [vmem:[#allocation3] sm:$0xff]
        %v1665 = vld [vmem:[#allocation3 + $0x8] sm:$0xff]
        %v1666 = vld [vmem:[#allocation3 + $0x10] sm:$0xff]
        %v1667 = vld [vmem:[#allocation3 + $0x18] sm:$0xff]
        %v1668 = vld [vmem:[#allocation3 + $0x20] sm:$0xff]
        %v1669 = vld [vmem:[#allocation3 + $0x28] sm:$0xff]
        %v1670 = vld [vmem:[#allocation3 + $0x30] sm:$0xff]
        %v1671 = vld [vmem:[#allocation3 + $0x38] sm:$0xff]
        %v1672 = vld [vmem:[#allocation3 + $0x40] sm:$0xff]
        %v1673 = vld [vmem:[#allocation3 + $0x48] sm:$0xff]
        %v1674 = vld [vmem:[#allocation3 + $0x50] sm:$0xff]
        %v1675 = vld [vmem:[#allocation3 + $0x58] sm:$0xff]
        %v1676 = vld [vmem:[#allocation3 + $0x60] sm:$0xff]
        %v1677 = vld [vmem:[#allocation3 + $0x68] sm:$0xff]
        %v1678 = vld [vmem:[#allocation3 + $0x70] sm:$0xff]
        %v1679 = vld [vmem:[#allocation3 + $0x78] sm:$0xff]
        %v1680 = vmax.f32 %v1664, 1e-30
        %v1681 = vmax.f32 %v1665, 1e-30
        %v1682 = vmax.f32 %v1666, 1e-30
        %v1683 = vmax.f32 %v1667, 1e-30
        %v1684 = vmax.f32 %v1668, 1e-30
        %v1685 = vmax.f32 %v1669, 1e-30
        %v1686 = vmax.f32 %v1670, 1e-30
        %v1687 = vmax.f32 %v1671, 1e-30
        %v1688 = vmax.f32 %v1672, 1e-30
        %v1689 = vmax.f32 %v1673, 1e-30
        %v1690 = vmax.f32 %v1674, 1e-30
        %v1691 = vmax.f32 %v1675, 1e-30
        %v1692 = vmax.f32 %v1676, 1e-30
        %v1693 = vmax.f32 %v1677, 1e-30
        %v1694 = vmax.f32 %v1678, 1e-30
        %v1695 = vmax.f32 %v1679, 1e-30
        %v1696 = vrcp.pop %v1680
        %v1697 = vrcp.pop %v1681
        %v1698 = vrcp.pop %v1682
        %v1699 = vrcp.pop %v1683
        %v1700 = vrcp.pop %v1684
        %v1701 = vrcp.pop %v1685
        %v1702 = vrcp.pop %v1686
        %v1703 = vrcp.pop %v1687
        %v1704 = vrcp.pop %v1688
        %v1705 = vrcp.pop %v1689
        %v1706 = vrcp.pop %v1690
        %v1707 = vrcp.pop %v1691
        %v1708 = vrcp.pop %v1692
        %v1709 = vrcp.pop %v1693
        %v1710 = vrcp.pop %v1694
        %v1711 = vrcp.pop %v1695
        %v1712 = vld [vmem:[#allocation4] sm:$0xff]
        %v1713 = vld [vmem:[#allocation4 + $0x8] sm:$0xff]
        %v1714 = vld [vmem:[#allocation4 + $0x10] sm:$0xff]
        %v1715 = vld [vmem:[#allocation4 + $0x18] sm:$0xff]
        %v1716 = vld [vmem:[#allocation4 + $0x20] sm:$0xff]
        %v1717 = vld [vmem:[#allocation4 + $0x28] sm:$0xff]
        %v1718 = vld [vmem:[#allocation4 + $0x30] sm:$0xff]
        %v1719 = vld [vmem:[#allocation4 + $0x38] sm:$0xff]
        %v1720 = vld [vmem:[#allocation4 + $0x40] sm:$0xff]
        %v1721 = vld [vmem:[#allocation4 + $0x48] sm:$0xff]
        %v1722 = vld [vmem:[#allocation4 + $0x50] sm:$0xff]
        %v1723 = vld [vmem:[#allocation4 + $0x58] sm:$0xff]
        %v1724 = vld [vmem:[#allocation4 + $0x60] sm:$0xff]
        %v1725 = vld [vmem:[#allocation4 + $0x68] sm:$0xff]
        %v1726 = vld [vmem:[#allocation4 + $0x70] sm:$0xff]
        %v1727 = vld [vmem:[#allocation4 + $0x78] sm:$0xff]
        %1729 = vset.pattern.permute.xlu0 0
        %1730 = vperm.xlu0 %1729, %v1696
        %v1731 = vpop.permute.xlu0 %1730
        %1734 = vset.pattern.permute.xlu0 0
        %1735 = vperm.xlu0 %1734, %v1697
        %v1736 = vpop.permute.xlu0 %1735
        %1739 = vset.pattern.permute.xlu0 0
        %1740 = vperm.xlu0 %1739, %v1698
        %v1741 = vpop.permute.xlu0 %1740
        %1744 = vset.pattern.permute.xlu0 0
        %1745 = vperm.xlu0 %1744, %v1699
        %v1746 = vpop.permute.xlu0 %1745
        %1749 = vset.pattern.permute.xlu0 0
        %1750 = vperm.xlu0 %1749, %v1700
        %v1751 = vpop.permute.xlu0 %1750
        %1754 = vset.pattern.permute.xlu0 0
        %1755 = vperm.xlu0 %1754, %v1701
        %v1756 = vpop.permute.xlu0 %1755
        %1759 = vset.pattern.permute.xlu0 0
        %1760 = vperm.xlu0 %1759, %v1702
        %v1761 = vpop.permute.xlu0 %1760
        %1764 = vset.pattern.permute.xlu0 0
        %1765 = vperm.xlu0 %1764, %v1703
        %v1766 = vpop.permute.xlu0 %1765
        %1769 = vset.pattern.permute.xlu0 0
        %1770 = vperm.xlu0 %1769, %v1704
        %v1771 = vpop.permute.xlu0 %1770
        %1774 = vset.pattern.permute.xlu0 0
        %1775 = vperm.xlu0 %1774, %v1705
        %v1776 = vpop.permute.xlu0 %1775
        %1779 = vset.pattern.permute.xlu0 0
        %1780 = vperm.xlu0 %1779, %v1706
        %v1781 = vpop.permute.xlu0 %1780
        %1784 = vset.pattern.permute.xlu0 0
        %1785 = vperm.xlu0 %1784, %v1707
        %v1786 = vpop.permute.xlu0 %1785
        %1789 = vset.pattern.permute.xlu0 0
        %1790 = vperm.xlu0 %1789, %v1708
        %v1791 = vpop.permute.xlu0 %1790
        %1794 = vset.pattern.permute.xlu0 0
        %1795 = vperm.xlu0 %1794, %v1709
        %v1796 = vpop.permute.xlu0 %1795
        %1799 = vset.pattern.permute.xlu0 0
        %1800 = vperm.xlu0 %1799, %v1710
        %v1801 = vpop.permute.xlu0 %1800
        %1804 = vset.pattern.permute.xlu0 0
        %1805 = vperm.xlu0 %1804, %v1711
        %v1806 = vpop.permute.xlu0 %1805
        %v1808 = vmul.f32 %v1712, %v1731
        %v1809 = vmul.f32 %v1713, %v1736
        %v1810 = vmul.f32 %v1714, %v1741
        %v1811 = vmul.f32 %v1715, %v1746
        %v1812 = vmul.f32 %v1716, %v1751
        %v1813 = vmul.f32 %v1717, %v1756
        %v1814 = vmul.f32 %v1718, %v1761
        %v1815 = vmul.f32 %v1719, %v1766
        %v1816 = vmul.f32 %v1720, %v1771
        %v1817 = vmul.f32 %v1721, %v1776
        %v1818 = vmul.f32 %v1722, %v1781
        %v1819 = vmul.f32 %v1723, %v1786
        %v1820 = vmul.f32 %v1724, %v1791
        %v1821 = vmul.f32 %v1725, %v1796
        %v1822 = vmul.f32 %v1726, %v1801
        %v1823 = vmul.f32 %v1727, %v1806
        %v1824 = vld [vmem:[%s5] sm:$0x1]
        %v1826 = vlaneseq
        %v1827 = vshrl.u32 %v1826, 7
        %v1828 = vsub.s32 0, %v1827
        %v1829 = vrot.slane %v1824, %v1828
        %v1831 = vadd.f32 %v1808, %v1829
        %v1832 = vadd.f32 %v1809, %v1829
        %v1833 = vadd.f32 %v1810, %v1829
        %v1834 = vadd.f32 %v1811, %v1829
        %v1835 = vadd.f32 %v1812, %v1829
        %v1836 = vadd.f32 %v1813, %v1829
        %v1837 = vadd.f32 %v1814, %v1829
        %v1838 = vadd.f32 %v1815, %v1829
        %v1839 = vadd.f32 %v1816, %v1829
        %v1840 = vadd.f32 %v1817, %v1829
        %v1841 = vadd.f32 %v1818, %v1829
        %v1842 = vadd.f32 %v1819, %v1829
        %v1843 = vadd.f32 %v1820, %v1829
        %v1844 = vadd.f32 %v1821, %v1829
        %v1845 = vadd.f32 %v1822, %v1829
        %v1846 = vadd.f32 %v1823, %v1829
        %v1847 = vpack.c.bf16 %v1832, %v1831
        %v1848 = vpack.c.bf16 %v1834, %v1833
        %v1849 = vpack.c.bf16 %v1836, %v1835
        %v1850 = vpack.c.bf16 %v1838, %v1837
        %v1851 = vpack.c.bf16 %v1840, %v1839
        %v1852 = vpack.c.bf16 %v1842, %v1841
        %v1853 = vpack.c.bf16 %v1844, %v1843
        %v1854 = vpack.c.bf16 %v1846, %v1845
        %v1863 = vunpack.c.l.b16 %v1847
        %v1864 = vunpack.c.h.b16 %v1847
        %v1865 = vunpack.c.l.b16 %v1848
        %v1866 = vunpack.c.h.b16 %v1848
        %v1867 = vunpack.c.l.b16 %v1849
        %v1868 = vunpack.c.h.b16 %v1849
        %v1869 = vunpack.c.l.b16 %v1850
        %v1870 = vunpack.c.h.b16 %v1850
        %v1871 = vunpack.c.l.b16 %v1851
        %v1872 = vunpack.c.h.b16 %v1851
        %v1873 = vunpack.c.l.b16 %v1852
        %v1874 = vunpack.c.h.b16 %v1852
        %v1875 = vunpack.c.l.b16 %v1853
        %v1876 = vunpack.c.h.b16 %v1853
        %v1877 = vunpack.c.l.b16 %v1854
        %v1878 = vunpack.c.h.b16 %v1854
        %v1879 = vpack.c.b16 %v1863, %v1863
        %v1880 = vpack.c.b16 %v1864, %v1864
        %v1881 = vpack.c.b16 %v1865, %v1865
        %v1882 = vpack.c.b16 %v1866, %v1866
        %v1883 = vpack.c.b16 %v1867, %v1867
        %v1884 = vpack.c.b16 %v1868, %v1868
        %v1885 = vpack.c.b16 %v1869, %v1869
        %v1886 = vpack.c.b16 %v1870, %v1870
        %v1887 = vpack.c.b16 %v1871, %v1871
        %v1888 = vpack.c.b16 %v1872, %v1872
        %v1889 = vpack.c.b16 %v1873, %v1873
        %v1890 = vpack.c.b16 %v1874, %v1874
        %v1891 = vpack.c.b16 %v1875, %v1875
        %v1892 = vpack.c.b16 %v1876, %v1876
        %v1893 = vpack.c.b16 %v1877, %v1877
        %v1894 = vpack.c.b16 %v1878, %v1878
        %1911 = vst [vmem:[%s327] sm:$0xf] %v1879
        %1912 = vst [vmem:[%s327 + $0x4] sm:$0xf] %v1880
        %1913 = vst [vmem:[%s327 + $0x8] sm:$0xf] %v1881
        %1914 = vst [vmem:[%s327 + $0xc] sm:$0xf] %v1882
        %1915 = vst [vmem:[%s327 + $0x10] sm:$0xf] %v1883
        %1916 = vst [vmem:[%s327 + $0x14] sm:$0xf] %v1884
        %1917 = vst [vmem:[%s327 + $0x18] sm:$0xf] %v1885
        %1918 = vst [vmem:[%s327 + $0x1c] sm:$0xf] %v1886
        %1919 = vst [vmem:[%s327 + $0x20] sm:$0xf] %v1887
        %1920 = vst [vmem:[%s327 + $0x24] sm:$0xf] %v1888
        %1921 = vst [vmem:[%s327 + $0x28] sm:$0xf] %v1889
        %1922 = vst [vmem:[%s327 + $0x2c] sm:$0xf] %v1890
        %1923 = vst [vmem:[%s327 + $0x30] sm:$0xf] %v1891
        %1924 = vst [vmem:[%s327 + $0x34] sm:$0xf] %v1892
        %1925 = vst [vmem:[%s327 + $0x38] sm:$0xf] %v1893
        %1926 = vst [vmem:[%s327 + $0x3c] sm:$0xf] %v1894
      $region52: #{gatae_forward.7} parent=39 // pred_fallthru
        _
      %s1927 = smul.u32 16, %s27
      %p1928 = scmp.lt.s32.totalorder %s1927, 31
      %s1929 = scalar_select %p1928, %s1927, 31
      %s1930 = smul.addr %s1929, 4
      %s1931 = scalar_lea.vmem %s6, %s1930
      // Predicated region
      $region53: #{gatae_forward.7} parent=39 // pred_check
        %p1932 = pneg %p180
      $region54: #{gatae_forward.7} parent=39 // pred_check_branch
        %1934 = sbr.rel (%p1932) target = $region56
      $region55: #{gatae_forward.7} parent=39 // pred_region
        %s1935 = smul.u32 16, %s27
      $region56: #{gatae_forward.7} parent=39 // pred_fallthru
        _
    $region40: #{gatae_forward.7} parent=5 // pred_fallthru
      _
    %p1936 = scmp.le.s32.totalorder 2, %s18
    // Predicated region
    $region57: #{gatae_forward.7} parent=5 // pred_check
      %p1937 = pneg %p1936
    $region58: #{gatae_forward.7} parent=5 // pred_check_branch
      %1939 = sbr.rel (%p1937) target = $region60
    $region59: #{gatae_forward.7} parent=5 // pred_region
      %s1940 = ssub.s32 %s18, 2
      // Predicated region
      $region61: #{gatae_forward.7} parent=59 // pred_check
        %p1941 = pneg %p186
      $region62: #{gatae_forward.7} parent=59 // pred_check_branch
        %1943 = sbr.rel (%p1941) target = $region64
      $region63: #{gatae_forward.7} parent=59 // pred_region
        %s1944 = smul.u32 16, %s29
        %p1945 = scmp.lt.s32.totalorder %s1944, 31
        %s1946 = scalar_select %p1945, %s1944, 31
        %s1947 = smul.addr %s1946, 4
        %s1948 = scalar_lea.vmem %s6, %s1947
      $region64: #{gatae_forward.7} parent=59 // pred_fallthru
        _
    $region60: #{gatae_forward.7} parent=5 // pred_fallthru
      _
  $region6: #{gatae_forward.7} parent=0 // loop_footer
    %s22 = sadd.s32 1, %s18
  $region7: #{gatae_forward.7} parent=0 // loop_footer_branch
    %17 = sbr.rel target = $region3
  $region8: #{gatae_forward.7} parent=0 // loop_exit
    _

</llo_original>
